<compile_context>
chip_gen: v6e
topology: v6e:2x2x1
jax: 0.10.0
libtpu: 0.0.40
codegen_flags: <defaults>
</compile_context>

<pallas_src>
import functools
import math

import jax
import jax.numpy as jnp
from jax.experimental import pallas as pl
from jax.experimental.pallas import tpu as pltpu

NEG_SLOPE = 0.01   # nn.LeakyReLU default
LN_EPS = 1e-5      # PyG LayerNorm default eps
LANE = 128


def _round_up(v, m):
    return ((v + m - 1) // m) * m


def _pad_to(x, shape):
    return jnp.pad(x, [(0, t - s) for s, t in zip(x.shape, shape)])


def _leaky_relu(x):
    return jnp.where(x >= 0, x, NEG_SLOPE * x)


def _padded_dims(dim_in, c):
    return _round_up(dim_in, LANE), _round_up(c, LANE), _round_up(2 * c, LANE)


# ----------------------------------------------------------------------------- kernel
def gnn_embedder_kernel(num_layers, use_layer_norm, n_valid, c_valid,
                        x_ref, a_ref, ew_ref, eb_ref,
                        wx_ref, bx_ref, wrm_ref, wi_ref, bi_ref,
                        out_ref):
    f32 = jnp.float32
    NP, CP = out_ref.shape
    WX = wx_ref.shape[1]            # CP + C2P + 3*CP
    C2P = wrm_ref.shape[1]
    C3P = wi_ref.shape[1]           # 3*CP

    # Validity mask so zero-padded rows/lanes never bias the graph-LN statistics.
    row_ok = jax.lax.broadcasted_iota(jnp.int32, (NP, CP), 0) < n_valid
    col_ok = jax.lax.broadcasted_iota(jnp.int32, (NP, CP), 1) < c_valid
    ln_mask = jnp.logical_and(row_ok, col_ok).astype(f32)
    inv_count = 1.0 / float(n_valid * c_valid)

    def graph_ln(x):
        # PyG LayerNorm(mode='graph', batch=None, affine=False):
        #   x = x - x.mean(); out = x / (x.std(unbiased=False) + eps)
        xm = x * ln_mask
        s = jnp.sum(xm, axis=(0, 1), keepdims=True)            # (1,1)
        ss = jnp.sum(xm * xm, axis=(0, 1), keepdims=True)      # (1,1) one pass
        mu = s * inv_count
        var = jnp.maximum(ss * inv_count - mu * mu, 0.0)
        inv = pl.reciprocal(jnp.sqrt(var) + LN_EPS, approx=True)
        return (x - mu) * inv

    # Hoisted weight/bias loads + bias broadcasts (JAX does not CSE broadcast_in_dim).
    a = a_ref[...]                                               # [NP, NP] (bf16 or f32)
    wx = wx_ref[...]                                             # [CP, WX]
    wrm = wrm_ref[...]                                           # [CP, C2P]
    wi = wi_ref[...]                                             # [C2P, 3CP]
    bx = jnp.broadcast_to(bx_ref[...], (NP, WX))
    bi = jnp.broadcast_to(bi_ref[...], (NP, C3P))

    # embed: Linear(dim_in, C)
    x = jnp.dot(x_ref[...], ew_ref[...], preferred_element_type=f32) + eb_ref[...]
    if use_layer_norm:
        x = graph_ln(x)

    def layer(_, x):
        # One wide MXU pass for everything that consumes x:
        #   [ msg_snd | msg_rec (x half) | GRU hidden path r|z|n ]
        xw = jnp.dot(x, wx, preferred_element_type=f32) + bx
        m = _leaky_relu(xw[:, :CP])                              # msg_snd(x)
        rec_x = xw[:, CP:CP + C2P]                               # x half of msg_rec (+bias)
        gh = xw[:, CP + C2P:]                                    # W_h x + b_h   [NP, 3CP]

        # scatter_mean(msg_snd(x)[row] * edge_attr, col) == A @ m   (bf16 in, f32 acc)
        msg = jnp.dot(a, m.astype(a.dtype), preferred_element_type=f32)

        # msg_rec: LeakyReLU(Linear(2C,2C)(cat([msg, x])))
        rec = _leaky_relu(jnp.dot(msg, wrm, preferred_element_type=f32) + rec_x)

        # GRUCell(2C, C), PyTorch gate order (r, z, n); input path fused into one dot.
        gi = jnp.dot(rec, wi, preferred_element_type=f32) + bi
        r = jax.nn.sigmoid(gi[:, :CP] + gh[:, :CP])
        z = jax.nn.sigmoid(gi[:, CP:2 * CP] + gh[:, CP:2 * CP])
        n_gate = jnp.tanh(gi[:, 2 * CP:] + r * gh[:, 2 * CP:])
        x = (1.0 - z) * n_gate + z * x
        if use_layer_norm:
            x = graph_ln(x)
        return x

    x = jax.lax.fori_loop(0, num_layers, layer, x, unroll=True)
    out_ref[...] = x


# ----------------------------------------------------------------------------- host glue
def build_adjacency(edge_index, edge_attr, num_nodes, n_pad, dtype):
    """Row-normalized dense [n_pad, n_pad] A with A @ m == scatter_mean(m[row]*edge_attr, col)."""
    row, col = edge_index[0], edge_index[1]
    a = jnp.zeros((n_pad, n_pad), jnp.float32).at[col, row].add(edge_attr)
    cnt = jnp.zeros((n_pad,), jnp.float32).at[col].add(1.0)
    a = a / jnp.maximum(cnt, 1.0)[:, None]
    del num_nodes
    return a.astype(dtype)


def pack_params(params, dim_in, c):
    """Fuse + zero-pad the 21 logical parameters into 7 lane-aligned arrays."""
    DP, CP, C2P = _padded_dims(dim_in, c)
    ew = _pad_to(params["embed_w"], (DP, CP))
    eb = _pad_to(params["embed_b"], (1, CP))
    # x-path fused weight: [ msg_snd (CP) | msg_rec_x (C2P) | W_hr (CP) | W_hz (CP) | W_hn (CP) ]
    wx = jnp.concatenate([
        _pad_to(params["msg_snd_w"], (CP, CP)),
        _pad_to(params["msg_rec_w_x"], (CP, C2P)),
        _pad_to(params["w_hr"], (CP, CP)),
        _pad_to(params["w_hz"], (CP, CP)),
        _pad_to(params["w_hn"], (CP, CP)),
    ], axis=1)
    bx = jnp.concatenate([
        _pad_to(params["msg_snd_b"], (1, CP)),
        _pad_to(params["msg_rec_b"], (1, C2P)),
        _pad_to(params["b_hr"], (1, CP)),
        _pad_to(params["b_hz"], (1, CP)),
        _pad_to(params["b_hn"], (1, CP)),
    ], axis=1)
    wrm = _pad_to(params["msg_rec_w_msg"], (CP, C2P))
    wi = jnp.concatenate([
        _pad_to(params["w_ir"], (C2P, CP)),
        _pad_to(params["w_iz"], (C2P, CP)),
        _pad_to(params["w_in"], (C2P, CP)),
    ], axis=1)
    bi = jnp.concatenate([
        _pad_to(params["b_ir"], (1, CP)),
        _pad_to(params["b_iz"], (1, CP)),
        _pad_to(params["b_in"], (1, CP)),
    ], axis=1)
    return dict(ew=ew, eb=eb, wx=wx, bx=bx, wrm=wrm, wi=wi, bi=bi)


def gnn_embedder_forward(x, edge_index, edge_attr, batch, params, *,
                         num_layers, use_layer_norm, agg_dtype=jnp.bfloat16):
    del batch  # scatter uses dim_size, graph-LN uses batch=None
    n, dim_in = x.shape
    c = params["embed_w"].shape[1]
    DP, CP, _ = _padded_dims(dim_in, c)
    NP = _round_up(n, LANE)

    packed = pack_params(params, dim_in, c)
    x_pad = _pad_to(x.astype(jnp.float32), (NP, DP))
    a = build_adjacency(edge_index, edge_attr, n, NP, agg_dtype)

    args = (x_pad, a, packed["ew"], packed["eb"], packed["wx"], packed["bx"],
            packed["wrm"], packed["wi"], packed["bi"])

    vmem_bytes = sum(int(v.size) * v.dtype.itemsize for v in args) + NP * CP * 4
    vmem_limit = int(min(max(2 * vmem_bytes, 32 * 2 ** 20), 60 * 2 ** 20))

    kernel = functools.partial(gnn_embedder_kernel, num_layers, use_layer_norm, n, c)
    vmem_spec = pl.BlockSpec(memory_space=pltpu.MemorySpace.VMEM)
    out = pl.pallas_call(
        kernel,
        out_shape=jax.ShapeDtypeStruct((NP, CP), jnp.float32),
        in_specs=[vmem_spec] * len(args),
        out_specs=vmem_spec,
        compiler_params=pltpu.CompilerParams(vmem_limit_bytes=vmem_limit),
    )(*args)
    return out[:n, :c]


# ----------------------------------------------------------------------------- params / reference
def init_params(key, dim_in, dim_embedding):
    """Deterministic synthetic params mirroring the PyTorch init shapes/scales."""
    c = dim_embedding
    ks = jax.random.split(key, 10)

    def unif(k, shape, bound):
        return jax.random.uniform(k, shape, jnp.float32, -bound, bound)

    b_in = 1.0 / math.sqrt(dim_in)
    b_c = 1.0 / math.sqrt(c)
    b_2c = 1.0 / math.sqrt(2 * c)

    params = {
        "embed_w": unif(ks[0], (dim_in, c), b_in),
        "embed_b": unif(ks[1], (1, c), b_in),
        "msg_snd_w": unif(ks[2], (c, c), b_c),
        "msg_snd_b": unif(ks[3], (1, c), b_c),
        "msg_rec_b": unif(ks[5], (1, 2 * c), b_2c),
    }
    mrw = unif(ks[4], (2 * c, 2 * c), b_2c)        # Linear(2C, 2C), stored (in, out)
    params["msg_rec_w_msg"] = mrw[:c]
    params["msg_rec_w_x"] = mrw[c:]

    wih = unif(ks[6], (2 * c, 3 * c), b_c)         # GRUCell weights, stored (in, out)
    whh = unif(ks[7], (c, 3 * c), b_c)
    bih = unif(ks[8], (1, 3 * c), b_c)
    bhh = unif(ks[9], (1, 3 * c), b_c)
    params["w_ir"], params["w_iz"], params["w_in"] = wih[:, :c], wih[:, c:2 * c], wih[:, 2 * c:]
    params["w_hr"], params["w_hz"], params["w_hn"] = whh[:, :c], whh[:, c:2 * c], whh[:, 2 * c:]
    params["b_ir"], params["b_iz"], params["b_in"] = bih[:, :c], bih[:, c:2 * c], bih[:, 2 * c:]
    params["b_hr"], params["b_hz"], params["b_hn"] = bhh[:, :c], bhh[:, c:2 * c], bhh[:, 2 * c:]
    return params


def _graph_layer_norm_ref(x):
    mu = jnp.mean(x)
    xc = x - mu
    std = jnp.sqrt(jnp.mean(xc * xc))
    return xc / (std + LN_EPS)


def reference_forward(x, edge_index, edge_attr, params, *, num_layers, use_layer_norm):
    """Pure-JAX f32 reference (edge-wise scatter_mean, unfused matmuls)."""
    n = x.shape[0]
    row, col = edge_index[0], edge_index[1]
    x = x @ params["embed_w"] + params["embed_b"]
    if use_layer_norm:
        x = _graph_layer_norm_ref(x)
    c = params["embed_w"].shape[1]
    for _ in range(num_layers):
        m = _leaky_relu(x @ params["msg_snd_w"] + params["msg_snd_b"])
        msg_e = m[row] * edge_attr[:, None]
        msg_sum = jnp.zeros((n, c), jnp.float32).at[col].add(msg_e)
        cnt = jnp.zeros((n,), jnp.float32).at[col].add(1.0)
        msg = msg_sum / jnp.maximum(cnt, 1.0)[:, None]
        rec = _leaky_relu(msg @ params["msg_rec_w_msg"] + x @ params["msg_rec_w_x"]
                          + params["msg_rec_b"])
        r = jax.nn.sigmoid(rec @ params["w_ir"] + params["b_ir"]
                           + x @ params["w_hr"] + params["b_hr"])
        z = jax.nn.sigmoid(rec @ params["w_iz"] + params["b_iz"]
                           + x @ params["w_hz"] + params["b_hz"])
        nn_ = jnp.tanh(rec @ params["w_in"] + params["b_in"]
                       + r * (x @ params["w_hn"] + params["b_hn"]))
        x = (1.0 - z) * nn_ + z * x
        if use_layer_norm:
            x = _graph_layer_norm_ref(x)
    return x


if __name__ == "__main__":
    N, E, DIM_IN, DIM_EMB = 16, 32, 4, 32
    NUM_LAYERS, USE_LAYER_NORM = 2, True

    key = jax.random.PRNGKey(0)
    k_x, k_row, k_col, k_attr, k_params = jax.random.split(key, 5)
    x = jax.random.normal(k_x, (N, DIM_IN), jnp.float32)
    row = jax.random.randint(k_row, (E,), 0, N, jnp.int32)
    col = jax.random.randint(k_col, (E,), 0, N, jnp.int32)
    edge_index = jnp.stack([row, col], axis=0)                 # [2, E]
    edge_attr = jax.random.uniform(k_attr, (E,), jnp.float32)  # [E]
    batch = jnp.zeros((N,), jnp.int32)                         # single graph

    params = init_params(k_params, DIM_IN, DIM_EMB)
    ref = reference_forward(x, edge_index, edge_attr, params,
                            num_layers=NUM_LAYERS, use_layer_norm=USE_LAYER_NORM)

    # bf16 message aggregation (production path); tolerance covers bf16 A/m rounding
    # plus the approx-reciprocal LayerNorm scale.
    out_bf16 = gnn_embedder_forward(x, edge_index, edge_attr, batch, params,
                                    num_layers=NUM_LAYERS, use_layer_norm=USE_LAYER_NORM,
                                    agg_dtype=jnp.bfloat16)
    out_bf16 = jax.block_until_ready(out_bf16)
    assert out_bf16.shape == (N, DIM_EMB) and out_bf16.dtype == jnp.float32
    d_bf16 = float(jnp.max(jnp.abs(out_bf16 - ref)))
    assert jnp.allclose(out_bf16, ref, atol=5e-2, rtol=5e-2), f"bf16 path max abs diff {d_bf16}"

    # f32 aggregation: tighter numeric check of the fused/padded kernel itself.
    out_f32 = gnn_embedder_forward(x, edge_index, edge_attr, batch, params,
                                   num_layers=NUM_LAYERS, use_layer_norm=USE_LAYER_NORM,
                                   agg_dtype=jnp.float32)
    out_f32 = jax.block_until_ready(out_f32)
    d_f32 = float(jnp.max(jnp.abs(out_f32 - ref)))
    assert jnp.allclose(out_f32, ref, atol=1e-2, rtol=1e-2), f"f32 path max abs diff {d_f32}"

    print("KERNEL_OK")
</pallas_src>

<mosaic_0001>
module attributes {stable_mosaic.version = 11 : i64} {
  func.func @gnn_embedder_kernel(%arg0: memref<128x128xf32, #tpu.memory_space<vmem>>, %arg1: memref<128x128xbf16, #tpu.memory_space<vmem>>, %arg2: memref<128x128xf32, #tpu.memory_space<vmem>>, %arg3: memref<1x128xf32, #tpu.memory_space<vmem>>, %arg4: memref<128x640xf32, #tpu.memory_space<vmem>>, %arg5: memref<1x640xf32, #tpu.memory_space<vmem>>, %arg6: memref<128x128xf32, #tpu.memory_space<vmem>>, %arg7: memref<128x384xf32, #tpu.memory_space<vmem>>, %arg8: memref<1x384xf32, #tpu.memory_space<vmem>>, %arg9: memref<128x128xf32, #tpu.memory_space<vmem>>) attributes {dimension_semantics = [], scalar_prefetch = 0 : i64, scratch_operands = 0 : i64, tpu.core_type = #tpu.core_type<tc>} {
    %0 = tpu.iota {dimensions = array<i32: 0>} : vector<128x128xi32>
    %c16_i32 = arith.constant 16 : i32
    %1 = vector.broadcast %c16_i32 : i32 to vector<128x128xi32>
    %2 = arith.cmpi slt, %0, %1 : vector<128x128xi32>
    %3 = tpu.iota {dimensions = array<i32: 1>} : vector<128x128xi32>
    %c32_i32 = arith.constant 32 : i32
    %4 = vector.broadcast %c32_i32 : i32 to vector<128x128xi32>
    %5 = arith.cmpi slt, %3, %4 : vector<128x128xi32>
    %6 = arith.andi %2, %5 : vector<128x128xi1>
    %7 = arith.extui %6 : vector<128x128xi1> to vector<128x128xi32>
    %8 = arith.sitofp %7 : vector<128x128xi32> to vector<128x128xf32>
    %c0 = arith.constant 0 : index
    %c0_0 = arith.constant 0 : index
    %9 = vector.load %arg1[%c0, %c0_0] : memref<128x128xbf16, #tpu.memory_space<vmem>>, vector<128x128xbf16>
    %c0_1 = arith.constant 0 : index
    %c0_2 = arith.constant 0 : index
    %10 = vector.load %arg4[%c0_1, %c0_2] : memref<128x640xf32, #tpu.memory_space<vmem>>, vector<128x640xf32>
    %c0_3 = arith.constant 0 : index
    %c0_4 = arith.constant 0 : index
    %11 = vector.load %arg6[%c0_3, %c0_4] : memref<128x128xf32, #tpu.memory_space<vmem>>, vector<128x128xf32>
    %c0_5 = arith.constant 0 : index
    %c0_6 = arith.constant 0 : index
    %12 = vector.load %arg7[%c0_5, %c0_6] : memref<128x384xf32, #tpu.memory_space<vmem>>, vector<128x384xf32>
    %c0_7 = arith.constant 0 : index
    %c0_8 = arith.constant 0 : index
    %13 = vector.load %arg5[%c0_7, %c0_8] : memref<1x640xf32, #tpu.memory_space<vmem>>, vector<1x640xf32>
    %14 = vector.shape_cast %13 : vector<1x640xf32> to vector<1x640xf32>
    %15 = vector.broadcast %14 : vector<1x640xf32> to vector<128x640xf32>
    %c0_9 = arith.constant 0 : index
    %c0_10 = arith.constant 0 : index
    %16 = vector.load %arg8[%c0_9, %c0_10] : memref<1x384xf32, #tpu.memory_space<vmem>>, vector<1x384xf32>
    %17 = vector.shape_cast %16 : vector<1x384xf32> to vector<1x384xf32>
    %18 = vector.broadcast %17 : vector<1x384xf32> to vector<128x384xf32>
    %c0_11 = arith.constant 0 : index
    %c0_12 = arith.constant 0 : index
    %19 = vector.load %arg0[%c0_11, %c0_12] : memref<128x128xf32, #tpu.memory_space<vmem>>, vector<128x128xf32>
    %c0_13 = arith.constant 0 : index
    %c0_14 = arith.constant 0 : index
    %20 = vector.load %arg2[%c0_13, %c0_14] : memref<128x128xf32, #tpu.memory_space<vmem>>, vector<128x128xf32>
    %cst = arith.constant dense<0.000000e+00> : vector<128x128xf32>
    %21 = tpu.matmul %19, %20, %cst {dimension_numbers = #tpu.dot_dimension_numbers<[1], [0], [0], [1], [0, 0, 1, 1], [], []>} : vector<128x128xf32>, vector<128x128xf32>, vector<128x128xf32> -> vector<128x128xf32>
    %c0_15 = arith.constant 0 : index
    %c0_16 = arith.constant 0 : index
    %22 = vector.load %arg3[%c0_15, %c0_16] : memref<1x128xf32, #tpu.memory_space<vmem>>, vector<1x128xf32>
    %23 = vector.broadcast %22 : vector<1x128xf32> to vector<128x128xf32>
    %24 = arith.addf %21, %23 : vector<128x128xf32>
    %25 = arith.mulf %24, %8 : vector<128x128xf32>
    %26 = vector.shape_cast %25 : vector<128x128xf32> to vector<1x128x128xf32>
    %cst_17 = arith.constant dense<0.000000e+00> : vector<1xf32>
    %27 = vector.multi_reduction <add>, %26, %cst_17 [1, 2] : vector<1x128x128xf32> to vector<1xf32>
    %28 = vector.shape_cast %27 : vector<1xf32> to vector<1x1x1xf32>
    %29 = vector.extract %28[0, 0, 0] : f32 from vector<1x1x1xf32>
    %30 = vector.broadcast %29 : f32 to vector<1x1xf32>
    %31 = arith.mulf %25, %25 : vector<128x128xf32>
    %32 = vector.shape_cast %31 : vector<128x128xf32> to vector<1x128x128xf32>
    %cst_18 = arith.constant dense<0.000000e+00> : vector<1xf32>
    %33 = vector.multi_reduction <add>, %32, %cst_18 [1, 2] : vector<1x128x128xf32> to vector<1xf32>
    %34 = vector.shape_cast %33 : vector<1xf32> to vector<1x1x1xf32>
    %35 = vector.extract %34[0, 0, 0] : f32 from vector<1x1x1xf32>
    %36 = vector.broadcast %35 : f32 to vector<1x1xf32>
    %cst_19 = arith.constant 0.001953125 : f32
    %37 = vector.broadcast %cst_19 : f32 to vector<1x1xf32>
    %38 = arith.mulf %30, %37 : vector<1x1xf32>
    %cst_20 = arith.constant 0.001953125 : f32
    %39 = vector.broadcast %cst_20 : f32 to vector<1x1xf32>
    %40 = arith.mulf %36, %39 : vector<1x1xf32>
    %41 = arith.mulf %38, %38 : vector<1x1xf32>
    %42 = arith.subf %40, %41 : vector<1x1xf32>
    %cst_21 = arith.constant 0.000000e+00 : f32
    %43 = vector.broadcast %cst_21 : f32 to vector<1x1xf32>
    %44 = arith.maximumf %42, %43 : vector<1x1xf32>
    %45 = math.sqrt %44 : vector<1x1xf32>
    %cst_22 = arith.constant 9.99999974E-6 : f32
    %46 = vector.broadcast %cst_22 : f32 to vector<1x1xf32>
    %47 = arith.addf %45, %46 : vector<1x1xf32>
    %48 = tpu.reciprocal %47 {approx = true} : vector<1x1xf32> -> vector<1x1xf32>
    %49 = vector.broadcast %38 : vector<1x1xf32> to vector<128x128xf32>
    %50 = arith.subf %24, %49 : vector<128x128xf32>
    %51 = vector.broadcast %48 : vector<1x1xf32> to vector<128x128xf32>
    %52 = arith.mulf %50, %51 : vector<128x128xf32>
    %c0_i32 = arith.constant 0 : i32
    %cst_23 = arith.constant dense<0.000000e+00> : vector<128x640xf32>
    %53 = tpu.matmul %52, %10, %cst_23 {dimension_numbers = #tpu.dot_dimension_numbers<[1], [0], [0], [1], [0, 0, 1, 1], [], []>} : vector<128x128xf32>, vector<128x640xf32>, vector<128x640xf32> -> vector<128x640xf32>
    %54 = arith.addf %53, %15 : vector<128x640xf32>
    %55 = vector.extract_strided_slice %54 {offsets = [0, 0], sizes = [128, 128], strides = [1, 1]} : vector<128x640xf32> to vector<128x128xf32>
    %cst_24 = arith.constant 0.000000e+00 : f32
    %56 = vector.broadcast %cst_24 : f32 to vector<128x128xf32>
    %57 = arith.cmpf oge, %55, %56 : vector<128x128xf32>
    %cst_25 = arith.constant 0.00999999977 : f32
    %58 = vector.broadcast %cst_25 : f32 to vector<128x128xf32>
    %59 = arith.mulf %58, %55 : vector<128x128xf32>
    %60 = arith.select %57, %55, %59 : vector<128x128xi1>, vector<128x128xf32>
    %61 = vector.extract_strided_slice %54 {offsets = [0, 128], sizes = [128, 128], strides = [1, 1]} : vector<128x640xf32> to vector<128x128xf32>
    %62 = vector.extract_strided_slice %54 {offsets = [0, 256], sizes = [128, 384], strides = [1, 1]} : vector<128x640xf32> to vector<128x384xf32>
    %63 = arith.truncf %60 : vector<128x128xf32> to vector<128x128xbf16>
    %cst_26 = arith.constant dense<0.000000e+00> : vector<128x128xf32>
    %64 = tpu.matmul %9, %63, %cst_26 {dimension_numbers = #tpu.dot_dimension_numbers<[1], [0], [0], [1], [0, 0, 1, 1], [], []>} : vector<128x128xbf16>, vector<128x128xbf16>, vector<128x128xf32> -> vector<128x128xf32>
    %cst_27 = arith.constant dense<0.000000e+00> : vector<128x128xf32>
    %65 = tpu.matmul %64, %11, %cst_27 {dimension_numbers = #tpu.dot_dimension_numbers<[1], [0], [0], [1], [0, 0, 1, 1], [], []>} : vector<128x128xf32>, vector<128x128xf32>, vector<128x128xf32> -> vector<128x128xf32>
    %66 = arith.addf %65, %61 : vector<128x128xf32>
    %cst_28 = arith.constant 0.000000e+00 : f32
    %67 = vector.broadcast %cst_28 : f32 to vector<128x128xf32>
    %68 = arith.cmpf oge, %66, %67 : vector<128x128xf32>
    %cst_29 = arith.constant 0.00999999977 : f32
    %69 = vector.broadcast %cst_29 : f32 to vector<128x128xf32>
    %70 = arith.mulf %69, %66 : vector<128x128xf32>
    %71 = arith.select %68, %66, %70 : vector<128x128xi1>, vector<128x128xf32>
    %cst_30 = arith.constant dense<0.000000e+00> : vector<128x384xf32>
    %72 = tpu.matmul %71, %12, %cst_30 {dimension_numbers = #tpu.dot_dimension_numbers<[1], [0], [0], [1], [0, 0, 1, 1], [], []>} : vector<128x128xf32>, vector<128x384xf32>, vector<128x384xf32> -> vector<128x384xf32>
    %73 = arith.addf %72, %18 : vector<128x384xf32>
    %74 = vector.extract_strided_slice %73 {offsets = [0, 0], sizes = [128, 128], strides = [1, 1]} : vector<128x384xf32> to vector<128x128xf32>
    %75 = vector.extract_strided_slice %62 {offsets = [0, 0], sizes = [128, 128], strides = [1, 1]} : vector<128x384xf32> to vector<128x128xf32>
    %76 = arith.addf %74, %75 : vector<128x128xf32>
    %77 = arith.negf %76 : vector<128x128xf32>
    %78 = math.exp %77 : vector<128x128xf32>
    %cst_31 = arith.constant 1.000000e+00 : f32
    %79 = vector.broadcast %cst_31 : f32 to vector<128x128xf32>
    %80 = arith.addf %79, %78 : vector<128x128xf32>
    %81 = arith.divf %79, %80 : vector<128x128xf32>
    %82 = vector.extract_strided_slice %73 {offsets = [0, 128], sizes = [128, 128], strides = [1, 1]} : vector<128x384xf32> to vector<128x128xf32>
    %83 = vector.extract_strided_slice %62 {offsets = [0, 128], sizes = [128, 128], strides = [1, 1]} : vector<128x384xf32> to vector<128x128xf32>
    %84 = arith.addf %82, %83 : vector<128x128xf32>
    %85 = arith.negf %84 : vector<128x128xf32>
    %86 = math.exp %85 : vector<128x128xf32>
    %cst_32 = arith.constant 1.000000e+00 : f32
    %87 = vector.broadcast %cst_32 : f32 to vector<128x128xf32>
    %88 = arith.addf %87, %86 : vector<128x128xf32>
    %89 = arith.divf %87, %88 : vector<128x128xf32>
    %90 = vector.extract_strided_slice %73 {offsets = [0, 256], sizes = [128, 128], strides = [1, 1]} : vector<128x384xf32> to vector<128x128xf32>
    %91 = vector.extract_strided_slice %62 {offsets = [0, 256], sizes = [128, 128], strides = [1, 1]} : vector<128x384xf32> to vector<128x128xf32>
    %92 = arith.mulf %81, %91 : vector<128x128xf32>
    %93 = arith.addf %90, %92 : vector<128x128xf32>
    %94 = math.tanh %93 : vector<128x128xf32>
    %cst_33 = arith.constant 1.000000e+00 : f32
    %95 = vector.broadcast %cst_33 : f32 to vector<128x128xf32>
    %96 = arith.subf %95, %89 : vector<128x128xf32>
    %97 = arith.mulf %96, %94 : vector<128x128xf32>
    %98 = arith.mulf %89, %52 : vector<128x128xf32>
    %99 = arith.addf %97, %98 : vector<128x128xf32>
    %100 = arith.mulf %99, %8 : vector<128x128xf32>
    %101 = vector.shape_cast %100 : vector<128x128xf32> to vector<1x128x128xf32>
    %cst_34 = arith.constant dense<0.000000e+00> : vector<1xf32>
    %102 = vector.multi_reduction <add>, %101, %cst_34 [1, 2] : vector<1x128x128xf32> to vector<1xf32>
    %103 = vector.shape_cast %102 : vector<1xf32> to vector<1x1x1xf32>
    %104 = vector.extract %103[0, 0, 0] : f32 from vector<1x1x1xf32>
    %105 = vector.broadcast %104 : f32 to vector<1x1xf32>
    %106 = arith.mulf %100, %100 : vector<128x128xf32>
    %107 = vector.shape_cast %106 : vector<128x128xf32> to vector<1x128x128xf32>
    %cst_35 = arith.constant dense<0.000000e+00> : vector<1xf32>
    %108 = vector.multi_reduction <add>, %107, %cst_35 [1, 2] : vector<1x128x128xf32> to vector<1xf32>
    %109 = vector.shape_cast %108 : vector<1xf32> to vector<1x1x1xf32>
    %110 = vector.extract %109[0, 0, 0] : f32 from vector<1x1x1xf32>
    %111 = vector.broadcast %110 : f32 to vector<1x1xf32>
    %cst_36 = arith.constant 0.001953125 : f32
    %112 = vector.broadcast %cst_36 : f32 to vector<1x1xf32>
    %113 = arith.mulf %105, %112 : vector<1x1xf32>
    %cst_37 = arith.constant 0.001953125 : f32
    %114 = vector.broadcast %cst_37 : f32 to vector<1x1xf32>
    %115 = arith.mulf %111, %114 : vector<1x1xf32>
    %116 = arith.mulf %113, %113 : vector<1x1xf32>
    %117 = arith.subf %115, %116 : vector<1x1xf32>
    %cst_38 = arith.constant 0.000000e+00 : f32
    %118 = vector.broadcast %cst_38 : f32 to vector<1x1xf32>
    %119 = arith.maximumf %117, %118 : vector<1x1xf32>
    %120 = math.sqrt %119 : vector<1x1xf32>
    %cst_39 = arith.constant 9.99999974E-6 : f32
    %121 = vector.broadcast %cst_39 : f32 to vector<1x1xf32>
    %122 = arith.addf %120, %121 : vector<1x1xf32>
    %123 = tpu.reciprocal %122 {approx = true} : vector<1x1xf32> -> vector<1x1xf32>
    %124 = vector.broadcast %113 : vector<1x1xf32> to vector<128x128xf32>
    %125 = arith.subf %99, %124 : vector<128x128xf32>
    %126 = vector.broadcast %123 : vector<1x1xf32> to vector<128x128xf32>
    %127 = arith.mulf %125, %126 : vector<128x128xf32>
    %c1_i32 = arith.constant 1 : i32
    %cst_40 = arith.constant dense<0.000000e+00> : vector<128x640xf32>
    %128 = tpu.matmul %127, %10, %cst_40 {dimension_numbers = #tpu.dot_dimension_numbers<[1], [0], [0], [1], [0, 0, 1, 1], [], []>} : vector<128x128xf32>, vector<128x640xf32>, vector<128x640xf32> -> vector<128x640xf32>
    %129 = arith.addf %128, %15 : vector<128x640xf32>
    %130 = vector.extract_strided_slice %129 {offsets = [0, 0], sizes = [128, 128], strides = [1, 1]} : vector<128x640xf32> to vector<128x128xf32>
    %cst_41 = arith.constant 0.000000e+00 : f32
    %131 = vector.broadcast %cst_41 : f32 to vector<128x128xf32>
    %132 = arith.cmpf oge, %130, %131 : vector<128x128xf32>
    %cst_42 = arith.constant 0.00999999977 : f32
    %133 = vector.broadcast %cst_42 : f32 to vector<128x128xf32>
    %134 = arith.mulf %133, %130 : vector<128x128xf32>
    %135 = arith.select %132, %130, %134 : vector<128x128xi1>, vector<128x128xf32>
    %136 = vector.extract_strided_slice %129 {offsets = [0, 128], sizes = [128, 128], strides = [1, 1]} : vector<128x640xf32> to vector<128x128xf32>
    %137 = vector.extract_strided_slice %129 {offsets = [0, 256], sizes = [128, 384], strides = [1, 1]} : vector<128x640xf32> to vector<128x384xf32>
    %138 = arith.truncf %135 : vector<128x128xf32> to vector<128x128xbf16>
    %cst_43 = arith.constant dense<0.000000e+00> : vector<128x128xf32>
    %139 = tpu.matmul %9, %138, %cst_43 {dimension_numbers = #tpu.dot_dimension_numbers<[1], [0], [0], [1], [0, 0, 1, 1], [], []>} : vector<128x128xbf16>, vector<128x128xbf16>, vector<128x128xf32> -> vector<128x128xf32>
    %cst_44 = arith.constant dense<0.000000e+00> : vector<128x128xf32>
    %140 = tpu.matmul %139, %11, %cst_44 {dimension_numbers = #tpu.dot_dimension_numbers<[1], [0], [0], [1], [0, 0, 1, 1], [], []>} : vector<128x128xf32>, vector<128x128xf32>, vector<128x128xf32> -> vector<128x128xf32>
    %141 = arith.addf %140, %136 : vector<128x128xf32>
    %cst_45 = arith.constant 0.000000e+00 : f32
    %142 = vector.broadcast %cst_45 : f32 to vector<128x128xf32>
    %143 = arith.cmpf oge, %141, %142 : vector<128x128xf32>
    %cst_46 = arith.constant 0.00999999977 : f32
    %144 = vector.broadcast %cst_46 : f32 to vector<128x128xf32>
    %145 = arith.mulf %144, %141 : vector<128x128xf32>
    %146 = arith.select %143, %141, %145 : vector<128x128xi1>, vector<128x128xf32>
    %cst_47 = arith.constant dense<0.000000e+00> : vector<128x384xf32>
    %147 = tpu.matmul %146, %12, %cst_47 {dimension_numbers = #tpu.dot_dimension_numbers<[1], [0], [0], [1], [0, 0, 1, 1], [], []>} : vector<128x128xf32>, vector<128x384xf32>, vector<128x384xf32> -> vector<128x384xf32>
    %148 = arith.addf %147, %18 : vector<128x384xf32>
    %149 = vector.extract_strided_slice %148 {offsets = [0, 0], sizes = [128, 128], strides = [1, 1]} : vector<128x384xf32> to vector<128x128xf32>
    %150 = vector.extract_strided_slice %137 {offsets = [0, 0], sizes = [128, 128], strides = [1, 1]} : vector<128x384xf32> to vector<128x128xf32>
    %151 = arith.addf %149, %150 : vector<128x128xf32>
    %152 = arith.negf %151 : vector<128x128xf32>
    %153 = math.exp %152 : vector<128x128xf32>
    %cst_48 = arith.constant 1.000000e+00 : f32
    %154 = vector.broadcast %cst_48 : f32 to vector<128x128xf32>
    %155 = arith.addf %154, %153 : vector<128x128xf32>
    %156 = arith.divf %154, %155 : vector<128x128xf32>
    %157 = vector.extract_strided_slice %148 {offsets = [0, 128], sizes = [128, 128], strides = [1, 1]} : vector<128x384xf32> to vector<128x128xf32>
    %158 = vector.extract_strided_slice %137 {offsets = [0, 128], sizes = [128, 128], strides = [1, 1]} : vector<128x384xf32> to vector<128x128xf32>
    %159 = arith.addf %157, %158 : vector<128x128xf32>
    %160 = arith.negf %159 : vector<128x128xf32>
    %161 = math.exp %160 : vector<128x128xf32>
    %cst_49 = arith.constant 1.000000e+00 : f32
    %162 = vector.broadcast %cst_49 : f32 to vector<128x128xf32>
    %163 = arith.addf %162, %161 : vector<128x128xf32>
    %164 = arith.divf %162, %163 : vector<128x128xf32>
    %165 = vector.extract_strided_slice %148 {offsets = [0, 256], sizes = [128, 128], strides = [1, 1]} : vector<128x384xf32> to vector<128x128xf32>
    %166 = vector.extract_strided_slice %137 {offsets = [0, 256], sizes = [128, 128], strides = [1, 1]} : vector<128x384xf32> to vector<128x128xf32>
    %167 = arith.mulf %156, %166 : vector<128x128xf32>
    %168 = arith.addf %165, %167 : vector<128x128xf32>
    %169 = math.tanh %168 : vector<128x128xf32>
    %cst_50 = arith.constant 1.000000e+00 : f32
    %170 = vector.broadcast %cst_50 : f32 to vector<128x128xf32>
    %171 = arith.subf %170, %164 : vector<128x128xf32>
    %172 = arith.mulf %171, %169 : vector<128x128xf32>
    %173 = arith.mulf %164, %127 : vector<128x128xf32>
    %174 = arith.addf %172, %173 : vector<128x128xf32>
    %175 = arith.mulf %174, %8 : vector<128x128xf32>
    %176 = vector.shape_cast %175 : vector<128x128xf32> to vector<1x128x128xf32>
    %cst_51 = arith.constant dense<0.000000e+00> : vector<1xf32>
    %177 = vector.multi_reduction <add>, %176, %cst_51 [1, 2] : vector<1x128x128xf32> to vector<1xf32>
    %178 = vector.shape_cast %177 : vector<1xf32> to vector<1x1x1xf32>
    %179 = vector.extract %178[0, 0, 0] : f32 from vector<1x1x1xf32>
    %180 = vector.broadcast %179 : f32 to vector<1x1xf32>
    %181 = arith.mulf %175, %175 : vector<128x128xf32>
    %182 = vector.shape_cast %181 : vector<128x128xf32> to vector<1x128x128xf32>
    %cst_52 = arith.constant dense<0.000000e+00> : vector<1xf32>
    %183 = vector.multi_reduction <add>, %182, %cst_52 [1, 2] : vector<1x128x128xf32> to vector<1xf32>
    %184 = vector.shape_cast %183 : vector<1xf32> to vector<1x1x1xf32>
    %185 = vector.extract %184[0, 0, 0] : f32 from vector<1x1x1xf32>
    %186 = vector.broadcast %185 : f32 to vector<1x1xf32>
    %cst_53 = arith.constant 0.001953125 : f32
    %187 = vector.broadcast %cst_53 : f32 to vector<1x1xf32>
    %188 = arith.mulf %180, %187 : vector<1x1xf32>
    %cst_54 = arith.constant 0.001953125 : f32
    %189 = vector.broadcast %cst_54 : f32 to vector<1x1xf32>
    %190 = arith.mulf %186, %189 : vector<1x1xf32>
    %191 = arith.mulf %188, %188 : vector<1x1xf32>
    %192 = arith.subf %190, %191 : vector<1x1xf32>
    %cst_55 = arith.constant 0.000000e+00 : f32
    %193 = vector.broadcast %cst_55 : f32 to vector<1x1xf32>
    %194 = arith.maximumf %192, %193 : vector<1x1xf32>
    %195 = math.sqrt %194 : vector<1x1xf32>
    %cst_56 = arith.constant 9.99999974E-6 : f32
    %196 = vector.broadcast %cst_56 : f32 to vector<1x1xf32>
    %197 = arith.addf %195, %196 : vector<1x1xf32>
    %198 = tpu.reciprocal %197 {approx = true} : vector<1x1xf32> -> vector<1x1xf32>
    %199 = vector.broadcast %188 : vector<1x1xf32> to vector<128x128xf32>
    %200 = arith.subf %174, %199 : vector<128x128xf32>
    %201 = vector.broadcast %198 : vector<1x1xf32> to vector<128x128xf32>
    %202 = arith.mulf %200, %201 : vector<128x128xf32>
    %c0_57 = arith.constant 0 : index
    %c0_58 = arith.constant 0 : index
    %203 = vector.load %arg9[%c0_57, %c0_58] : memref<128x128xf32, #tpu.memory_space<vmem>>, vector<128x128xf32>
    tpu.vector_store %arg9[%c0_57, %c0_58], %202 {strides = array<i32>} : memref<128x128xf32, #tpu.memory_space<vmem>>, vector<128x128xf32>,
    return
  }
}

</mosaic_0001>

<llo_original>
// kernel: tpu_custom_call.1
$region0: #{tpu_custom_call.1}
  #allocation0 [shape = 'u32[]', space=smem, size = 0x4, offset = 0x4, fixed_abs, tag = 'smem constant byte address 0x4 - core index']
  #allocation1 [shape = 'u32[144,128]{1,0:T(1,128)}', space=vmem, size = 0x12000, scoped, tag = 'internal scratch']
  %s0 = inlined_call_operand.hbm [shape: f32[128,128], index: 0, kind: input, shape index: {}]
  %s1 = inlined_call_operand.hbm [shape: bf16[128,128], index: 1, kind: input, shape index: {}]
  %s2 = inlined_call_operand.hbm [shape: f32[128,128], index: 2, kind: input, shape index: {}]
  %s3 = inlined_call_operand.vmem [shape: f32[1,128], index: 3, kind: input, shape index: {}]
  %s4 = inlined_call_operand.hbm [shape: f32[128,640], index: 4, kind: input, shape index: {}]
  %s5 = inlined_call_operand.vmem [shape: f32[1,640], index: 5, kind: input, shape index: {}]
  %s6 = inlined_call_operand.hbm [shape: f32[128,128], index: 6, kind: input, shape index: {}]
  %s7 = inlined_call_operand.hbm [shape: f32[128,384], index: 7, kind: input, shape index: {}]
  %s8 = inlined_call_operand.vmem [shape: f32[1,384], index: 8, kind: input, shape index: {}]
  %s9 = inlined_call_operand.hbm [shape: f32[128,128], index: 9, kind: output, shape index: {}]
  %s10 = sld [smem:[#allocation0]]
  $region70: #{tpu_custom_call.1} parent=0
    _
  %s12 = ssub.s32 1, %s10
  %s13 = scalar_select 0, %s12, %s10
  $region1: #{tpu_custom_call.1} parent=0
    #allocation2 [shape = 'u8[65536]{0}', space=vmem, size = 0x10000, scoped, tag = 'input window, operand 0, single buffered']
    #allocation3 [shape = 's32[1]{0}', space=sflag, size = 0x4, scoped, tag = 'scoped memory for tpu_custom_call.1']
    #allocation4 [shape = 's32[1]{0}', space=sflag, size = 0x4, scoped, tag = 'scoped memory for tpu_custom_call.1']
    #allocation5 [shape = 'u8[32768]{0}', space=vmem, size = 0x8000, scoped, tag = 'input window, operand 1, single buffered']
    #allocation6 [shape = 's32[1]{0}', space=sflag, size = 0x4, scoped, tag = 'scoped memory for tpu_custom_call.1']
    #allocation7 [shape = 'u8[65536]{0}', space=vmem, size = 0x10000, scoped, tag = 'input window, operand 2, single buffered']
    #allocation8 [shape = 'u8[327680]{0}', space=vmem, size = 0x50000, scoped, tag = 'input window, operand 4, single buffered']
    #allocation9 [shape = 's32[1]{0}', space=sflag, size = 0x4, scoped, tag = 'scoped memory for tpu_custom_call.1']
    #allocation10 [shape = 'u8[65536]{0}', space=vmem, size = 0x10000, scoped, tag = 'input window, operand 6, single buffered']
    #allocation11 [shape = 'u8[196608]{0}', space=vmem, size = 0x30000, scoped, tag = 'input window, operand 7, single buffered']
    #allocation12 [shape = 's32[1]{0}', space=sflag, size = 0x4, scoped, tag = 'scoped memory for tpu_custom_call.1']
    #allocation13 [shape = 'u8[65536]{0}', space=vmem, size = 0x10000, scoped, tag = 'output window, operand 0, single buffered']
    %14 = vsyncpa [#allocation3], 0
    %15 = vsyncpa [#allocation6], 0
    %16 = vsyncpa [#allocation9], 0
    %17 = vsyncpa [#allocation12], 0
    %18 = vsyncpa [#allocation4], 0
    // Predicated region
    $region2: #{tpu_custom_call.1} parent=1 // pred_check
      _
    $region3: #{tpu_custom_call.1} parent=1 // pred_check_branch
      %20 = sbr.rel (0) target = $region5
    $region4: #{tpu_custom_call.1} parent=1 // pred_region
      %s22 = ssub.s32 2048, 2048
      %23 = vsyncadd [#allocation3], %s22
      %s24 = sshll.u32 [#allocation2], 4
      %s25 = int_to_ptr.vmem [resolvable:$true] %s24
      %30 = dma.hbm_to_vmem [thread:$0]  %s0, 2048, %s25, [#allocation3], 128, 128, 8
    $region5: #{tpu_custom_call.1} parent=1 // pred_fallthru
      _
    // Predicated region
    $region6: #{tpu_custom_call.1} parent=1 // pred_check
      _
    $region7: #{tpu_custom_call.1} parent=1 // pred_check_branch
      %32 = sbr.rel (0) target = $region9
    $region8: #{tpu_custom_call.1} parent=1 // pred_region
      %s34 = ssub.s32 1024, 1024
      %35 = vsyncadd [#allocation6], %s34
      %s36 = sshll.u32 [#allocation5], 4
      %s37 = int_to_ptr.vmem [resolvable:$true] %s36
      %42 = dma.hbm_to_vmem [thread:$0]  %s1, 1024, %s37, [#allocation6], 64, 64, 4
    $region9: #{tpu_custom_call.1} parent=1 // pred_fallthru
      _
    // Predicated region
    $region10: #{tpu_custom_call.1} parent=1 // pred_check
      _
    $region11: #{tpu_custom_call.1} parent=1 // pred_check_branch
      %44 = sbr.rel (0) target = $region13
    $region12: #{tpu_custom_call.1} parent=1 // pred_region
      %s46 = ssub.s32 2048, 2048
      %47 = vsyncadd [#allocation6], %s46
      %s48 = sshll.u32 [#allocation7], 4
      %s49 = int_to_ptr.vmem [resolvable:$true] %s48
      %54 = dma.hbm_to_vmem [thread:$0]  %s2, 2048, %s49, [#allocation6], 128, 128, 8
    $region13: #{tpu_custom_call.1} parent=1 // pred_fallthru
      _
    // Predicated region
    $region14: #{tpu_custom_call.1} parent=1 // pred_check
      _
    $region15: #{tpu_custom_call.1} parent=1 // pred_check_branch
      %56 = sbr.rel (0) target = $region17
    $region16: #{tpu_custom_call.1} parent=1 // pred_region
      _
    $region17: #{tpu_custom_call.1} parent=1 // pred_fallthru
      _
    // Predicated region
    $region18: #{tpu_custom_call.1} parent=1 // pred_check
      _
    $region19: #{tpu_custom_call.1} parent=1 // pred_check_branch
      %58 = sbr.rel (0) target = $region21
    $region20: #{tpu_custom_call.1} parent=1 // pred_region
      %s60 = ssub.s32 10240, 10240
      %61 = vsyncadd [#allocation9], %s60
      %s62 = sshll.u32 [#allocation8], 4
      %s63 = int_to_ptr.vmem [resolvable:$true] %s62
      %68 = dma.hbm_to_vmem [thread:$0]  %s4, 10240, %s63, [#allocation9], 640, 640, 40
    $region21: #{tpu_custom_call.1} parent=1 // pred_fallthru
      _
    // Predicated region
    $region22: #{tpu_custom_call.1} parent=1 // pred_check
      _
    $region23: #{tpu_custom_call.1} parent=1 // pred_check_branch
      %70 = sbr.rel (0) target = $region25
    $region24: #{tpu_custom_call.1} parent=1 // pred_region
      _
    $region25: #{tpu_custom_call.1} parent=1 // pred_fallthru
      _
    // Predicated region
    $region26: #{tpu_custom_call.1} parent=1 // pred_check
      _
    $region27: #{tpu_custom_call.1} parent=1 // pred_check_branch
      %72 = sbr.rel (0) target = $region29
    $region28: #{tpu_custom_call.1} parent=1 // pred_region
      %s74 = ssub.s32 2048, 2048
      %75 = vsyncadd [#allocation9], %s74
      %s76 = sshll.u32 [#allocation10], 4
      %s77 = int_to_ptr.vmem [resolvable:$true] %s76
      %82 = dma.hbm_to_vmem [thread:$0]  %s6, 2048, %s77, [#allocation9], 128, 128, 8
    $region29: #{tpu_custom_call.1} parent=1 // pred_fallthru
      _
    // Predicated region
    $region30: #{tpu_custom_call.1} parent=1 // pred_check
      _
    $region31: #{tpu_custom_call.1} parent=1 // pred_check_branch
      %84 = sbr.rel (0) target = $region33
    $region32: #{tpu_custom_call.1} parent=1 // pred_region
      %s86 = ssub.s32 6144, 6144
      %87 = vsyncadd [#allocation12], %s86
      %s88 = sshll.u32 [#allocation11], 4
      %s89 = int_to_ptr.vmem [resolvable:$true] %s88
      %94 = dma.hbm_to_vmem [thread:$0]  %s7, 6144, %s89, [#allocation12], 384, 384, 24
    $region33: #{tpu_custom_call.1} parent=1 // pred_fallthru
      _
    // Predicated region
    $region34: #{tpu_custom_call.1} parent=1 // pred_check
      _
    $region35: #{tpu_custom_call.1} parent=1 // pred_check_branch
      %96 = sbr.rel (0) target = $region37
    $region36: #{tpu_custom_call.1} parent=1 // pred_region
      _
    $region37: #{tpu_custom_call.1} parent=1 // pred_fallthru
      _
    // Predicated region
    $region38: #{tpu_custom_call.1} parent=1 // pred_check
      _
    $region39: #{tpu_custom_call.1} parent=1 // pred_check_branch
      %98 = sbr.rel (0) target = $region41
    $region40: #{tpu_custom_call.1} parent=1 // pred_region
      %99 = dma.done [#allocation3], 2048
    $region41: #{tpu_custom_call.1} parent=1 // pred_fallthru
      _
    // Predicated region
    $region42: #{tpu_custom_call.1} parent=1 // pred_check
      _
    $region43: #{tpu_custom_call.1} parent=1 // pred_check_branch
      %101 = sbr.rel (0) target = $region45
    $region44: #{tpu_custom_call.1} parent=1 // pred_region
      %102 = dma.done [#allocation6], 1024
    $region45: #{tpu_custom_call.1} parent=1 // pred_fallthru
      _
    // Predicated region
    $region46: #{tpu_custom_call.1} parent=1 // pred_check
      _
    $region47: #{tpu_custom_call.1} parent=1 // pred_check_branch
      %104 = sbr.rel (0) target = $region49
    $region48: #{tpu_custom_call.1} parent=1 // pred_region
      %105 = dma.done [#allocation6], 2048
    $region49: #{tpu_custom_call.1} parent=1 // pred_fallthru
      _
    // Predicated region
    $region50: #{tpu_custom_call.1} parent=1 // pred_check
      _
    $region51: #{tpu_custom_call.1} parent=1 // pred_check_branch
      %107 = sbr.rel (0) target = $region53
    $region52: #{tpu_custom_call.1} parent=1 // pred_region
      %108 = dma.done [#allocation9], 10240
    $region53: #{tpu_custom_call.1} parent=1 // pred_fallthru
      _
    // Predicated region
    $region54: #{tpu_custom_call.1} parent=1 // pred_check
      _
    $region55: #{tpu_custom_call.1} parent=1 // pred_check_branch
      %110 = sbr.rel (0) target = $region57
    $region56: #{tpu_custom_call.1} parent=1 // pred_region
      %111 = dma.done [#allocation9], 2048
    $region57: #{tpu_custom_call.1} parent=1 // pred_fallthru
      _
    // Predicated region
    $region58: #{tpu_custom_call.1} parent=1 // pred_check
      _
    $region59: #{tpu_custom_call.1} parent=1 // pred_check_branch
      %113 = sbr.rel (0) target = $region61
    $region60: #{tpu_custom_call.1} parent=1 // pred_region
      %114 = dma.done [#allocation12], 6144
    $region61: #{tpu_custom_call.1} parent=1 // pred_fallthru
      _
    %v116 = vlaneseq
    %v117 = vshrl.u32 %v116, 7
    %v118 = vadd.s32 %v117, 8
    %v119 = vadd.s32 %v117, 16
    %v120 = vadd.s32 %v117, 24
    %v121 = vadd.s32 %v117, 32
    %v122 = vadd.s32 %v117, 40
    %v123 = vadd.s32 %v117, 48
    %v124 = vadd.s32 %v117, 56
    %v125 = vadd.s32 %v117, 64
    %v126 = vadd.s32 %v117, 72
    %v127 = vadd.s32 %v117, 80
    %v128 = vadd.s32 %v117, 88
    %v129 = vadd.s32 %v117, 96
    %v130 = vadd.s32 %v117, 104
    %v131 = vadd.s32 %v117, 112
    %v132 = vadd.s32 %v117, 120
    %vm133 = vcmp.lt.s32.totalorder %v117, 16
    %vm134 = vcmp.lt.s32.totalorder %v118, 16
    %vm135 = vcmp.lt.s32.totalorder %v119, 16
    %vm136 = vcmp.lt.s32.totalorder %v120, 16
    %vm137 = vcmp.lt.s32.totalorder %v121, 16
    %vm138 = vcmp.lt.s32.totalorder %v122, 16
    %vm139 = vcmp.lt.s32.totalorder %v123, 16
    %vm140 = vcmp.lt.s32.totalorder %v124, 16
    %vm141 = vcmp.lt.s32.totalorder %v125, 16
    %vm142 = vcmp.lt.s32.totalorder %v126, 16
    %vm143 = vcmp.lt.s32.totalorder %v127, 16
    %vm144 = vcmp.lt.s32.totalorder %v128, 16
    %vm145 = vcmp.lt.s32.totalorder %v129, 16
    %vm146 = vcmp.lt.s32.totalorder %v130, 16
    %vm147 = vcmp.lt.s32.totalorder %v131, 16
    %vm148 = vcmp.lt.s32.totalorder %v132, 16
    %v149 = vlaneseq
    %v150 = vand.u32 %v149, 127
    %vm151 = vcmp.lt.s32.totalorder %v150, 32
    %vm152 = vmand %vm133, %vm151
    %vm153 = vmand %vm134, %vm151
    %vm154 = vmand %vm135, %vm151
    %vm155 = vmand %vm136, %vm151
    %vm156 = vmand %vm137, %vm151
    %vm157 = vmand %vm138, %vm151
    %vm158 = vmand %vm139, %vm151
    %vm159 = vmand %vm140, %vm151
    %vm160 = vmand %vm141, %vm151
    %vm161 = vmand %vm142, %vm151
    %vm162 = vmand %vm143, %vm151
    %vm163 = vmand %vm144, %vm151
    %vm164 = vmand %vm145, %vm151
    %vm165 = vmand %vm146, %vm151
    %vm166 = vmand %vm147, %vm151
    %vm167 = vmand %vm148, %vm151
    %v168 = vsel %vm152, 1, 0
    %v169 = vsel %vm153, 1, 0
    %v170 = vsel %vm154, 1, 0
    %v171 = vsel %vm155, 1, 0
    %v172 = vsel %vm156, 1, 0
    %v173 = vsel %vm157, 1, 0
    %v174 = vsel %vm158, 1, 0
    %v175 = vsel %vm159, 1, 0
    %v176 = vsel %vm160, 1, 0
    %v177 = vsel %vm161, 1, 0
    %v178 = vsel %vm162, 1, 0
    %v179 = vsel %vm163, 1, 0
    %v180 = vsel %vm164, 1, 0
    %v181 = vsel %vm165, 1, 0
    %v182 = vsel %vm166, 1, 0
    %v183 = vsel %vm167, 1, 0
    %v184 = vcvt.s32.f32 %v168
    %v185 = vcvt.s32.f32 %v169
    %v186 = vcvt.s32.f32 %v170
    %v187 = vcvt.s32.f32 %v171
    %v188 = vcvt.s32.f32 %v172
    %v189 = vcvt.s32.f32 %v173
    %v190 = vcvt.s32.f32 %v174
    %v191 = vcvt.s32.f32 %v175
    %v192 = vcvt.s32.f32 %v176
    %v193 = vcvt.s32.f32 %v177
    %v194 = vcvt.s32.f32 %v178
    %v195 = vcvt.s32.f32 %v179
    %v196 = vcvt.s32.f32 %v180
    %v197 = vcvt.s32.f32 %v181
    %v198 = vcvt.s32.f32 %v182
    %v199 = vcvt.s32.f32 %v183
    %v200 = vld [vmem:[#allocation5] sm:$0xf]
    %v201 = vld [vmem:[#allocation5 + $0x4] sm:$0xf]
    %v202 = vld [vmem:[#allocation5 + $0x8] sm:$0xf]
    %v203 = vld [vmem:[#allocation5 + $0xc] sm:$0xf]
    %v204 = vld [vmem:[#allocation5 + $0x10] sm:$0xf]
    %v205 = vld [vmem:[#allocation5 + $0x14] sm:$0xf]
    %v206 = vld [vmem:[#allocation5 + $0x18] sm:$0xf]
    %v207 = vld [vmem:[#allocation5 + $0x1c] sm:$0xf]
    %v208 = vld [vmem:[#allocation5 + $0x20] sm:$0xf]
    %v209 = vld [vmem:[#allocation5 + $0x24] sm:$0xf]
    %v210 = vld [vmem:[#allocation5 + $0x28] sm:$0xf]
    %v211 = vld [vmem:[#allocation5 + $0x2c] sm:$0xf]
    %v212 = vld [vmem:[#allocation5 + $0x30] sm:$0xf]
    %v213 = vld [vmem:[#allocation5 + $0x34] sm:$0xf]
    %v214 = vld [vmem:[#allocation5 + $0x38] sm:$0xf]
    %v215 = vld [vmem:[#allocation5 + $0x3c] sm:$0xf]
    %v216 = vld [vmem:[#allocation8] sm:$0xff]
    %v217 = vld [vmem:[#allocation8 + $0x8] sm:$0xff]
    %v218 = vld [vmem:[#allocation8 + $0x10] sm:$0xff]
    %v219 = vld [vmem:[#allocation8 + $0x18] sm:$0xff]
    %v220 = vld [vmem:[#allocation8 + $0x20] sm:$0xff]
    %v221 = vld [vmem:[#allocation8 + $0x28] sm:$0xff]
    %v222 = vld [vmem:[#allocation8 + $0x30] sm:$0xff]
    %v223 = vld [vmem:[#allocation8 + $0x38] sm:$0xff]
    %v224 = vld [vmem:[#allocation8 + $0x40] sm:$0xff]
    %v225 = vld [vmem:[#allocation8 + $0x48] sm:$0xff]
    %v226 = vld [vmem:[#allocation8 + $0x50] sm:$0xff]
    %v227 = vld [vmem:[#allocation8 + $0x58] sm:$0xff]
    %v228 = vld [vmem:[#allocation8 + $0x60] sm:$0xff]
    %v229 = vld [vmem:[#allocation8 + $0x68] sm:$0xff]
    %v230 = vld [vmem:[#allocation8 + $0x70] sm:$0xff]
    %v231 = vld [vmem:[#allocation8 + $0x78] sm:$0xff]
    %v232 = vld [vmem:[#allocation8 + $0x80] sm:$0xff]
    %v233 = vld [vmem:[#allocation8 + $0x88] sm:$0xff]
    %v234 = vld [vmem:[#allocation8 + $0x90] sm:$0xff]
    %v235 = vld [vmem:[#allocation8 + $0x98] sm:$0xff]
    %v236 = vld [vmem:[#allocation8 + $0xa0] sm:$0xff]
    %v237 = vld [vmem:[#allocation8 + $0xa8] sm:$0xff]
    %v238 = vld [vmem:[#allocation8 + $0xb0] sm:$0xff]
    %v239 = vld [vmem:[#allocation8 + $0xb8] sm:$0xff]
    %v240 = vld [vmem:[#allocation8 + $0xc0] sm:$0xff]
    %v241 = vld [vmem:[#allocation8 + $0xc8] sm:$0xff]
    %v242 = vld [vmem:[#allocation8 + $0xd0] sm:$0xff]
    %v243 = vld [vmem:[#allocation8 + $0xd8] sm:$0xff]
    %v244 = vld [vmem:[#allocation8 + $0xe0] sm:$0xff]
    %v245 = vld [vmem:[#allocation8 + $0xe8] sm:$0xff]
    %v246 = vld [vmem:[#allocation8 + $0xf0] sm:$0xff]
    %v247 = vld [vmem:[#allocation8 + $0xf8] sm:$0xff]
    %v248 = vld [vmem:[#allocation8 + $0x100] sm:$0xff]
    %v249 = vld [vmem:[#allocation8 + $0x108] sm:$0xff]
    %v250 = vld [vmem:[#allocation8 + $0x110] sm:$0xff]
    %v251 = vld [vmem:[#allocation8 + $0x118] sm:$0xff]
    %v252 = vld [vmem:[#allocation8 + $0x120] sm:$0xff]
    %v253 = vld [vmem:[#allocation8 + $0x128] sm:$0xff]
    %v254 = vld [vmem:[#allocation8 + $0x130] sm:$0xff]
    %v255 = vld [vmem:[#allocation8 + $0x138] sm:$0xff]
    %v256 = vld [vmem:[#allocation8 + $0x140] sm:$0xff]
    %v257 = vld [vmem:[#allocation8 + $0x148] sm:$0xff]
    %v258 = vld [vmem:[#allocation8 + $0x150] sm:$0xff]
    %v259 = vld [vmem:[#allocation8 + $0x158] sm:$0xff]
    %v260 = vld [vmem:[#allocation8 + $0x160] sm:$0xff]
    %v261 = vld [vmem:[#allocation8 + $0x168] sm:$0xff]
    %v262 = vld [vmem:[#allocation8 + $0x170] sm:$0xff]
    %v263 = vld [vmem:[#allocation8 + $0x178] sm:$0xff]
    %v264 = vld [vmem:[#allocation8 + $0x180] sm:$0xff]
    %v265 = vld [vmem:[#allocation8 + $0x188] sm:$0xff]
    %v266 = vld [vmem:[#allocation8 + $0x190] sm:$0xff]
    %v267 = vld [vmem:[#allocation8 + $0x198] sm:$0xff]
    %v268 = vld [vmem:[#allocation8 + $0x1a0] sm:$0xff]
    %v269 = vld [vmem:[#allocation8 + $0x1a8] sm:$0xff]
    %v270 = vld [vmem:[#allocation8 + $0x1b0] sm:$0xff]
    %v271 = vld [vmem:[#allocation8 + $0x1b8] sm:$0xff]
    %v272 = vld [vmem:[#allocation8 + $0x1c0] sm:$0xff]
    %v273 = vld [vmem:[#allocation8 + $0x1c8] sm:$0xff]
    %v274 = vld [vmem:[#allocation8 + $0x1d0] sm:$0xff]
    %v275 = vld [vmem:[#allocation8 + $0x1d8] sm:$0xff]
    %v276 = vld [vmem:[#allocation8 + $0x1e0] sm:$0xff]
    %v277 = vld [vmem:[#allocation8 + $0x1e8] sm:$0xff]
    %v278 = vld [vmem:[#allocation8 + $0x1f0] sm:$0xff]
    %v279 = vld [vmem:[#allocation8 + $0x1f8] sm:$0xff]
    %v280 = vld [vmem:[#allocation8 + $0x200] sm:$0xff]
    %v281 = vld [vmem:[#allocation8 + $0x208] sm:$0xff]
    %v282 = vld [vmem:[#allocation8 + $0x210] sm:$0xff]
    %v283 = vld [vmem:[#allocation8 + $0x218] sm:$0xff]
    %v284 = vld [vmem:[#allocation8 + $0x220] sm:$0xff]
    %v285 = vld [vmem:[#allocation8 + $0x228] sm:$0xff]
    %v286 = vld [vmem:[#allocation8 + $0x230] sm:$0xff]
    %v287 = vld [vmem:[#allocation8 + $0x238] sm:$0xff]
    %v288 = vld [vmem:[#allocation8 + $0x240] sm:$0xff]
    %v289 = vld [vmem:[#allocation8 + $0x248] sm:$0xff]
    %v290 = vld [vmem:[#allocation8 + $0x250] sm:$0xff]
    %v291 = vld [vmem:[#allocation8 + $0x258] sm:$0xff]
    %v292 = vld [vmem:[#allocation8 + $0x260] sm:$0xff]
    %v293 = vld [vmem:[#allocation8 + $0x268] sm:$0xff]
    %v294 = vld [vmem:[#allocation8 + $0x270] sm:$0xff]
    %v295 = vld [vmem:[#allocation8 + $0x278] sm:$0xff]
    %v296 = vld [vmem:[#allocation10] sm:$0xff]
    %v297 = vld [vmem:[#allocation10 + $0x8] sm:$0xff]
    %v298 = vld [vmem:[#allocation10 + $0x10] sm:$0xff]
    %v299 = vld [vmem:[#allocation10 + $0x18] sm:$0xff]
    %v300 = vld [vmem:[#allocation10 + $0x20] sm:$0xff]
    %v301 = vld [vmem:[#allocation10 + $0x28] sm:$0xff]
    %v302 = vld [vmem:[#allocation10 + $0x30] sm:$0xff]
    %v303 = vld [vmem:[#allocation10 + $0x38] sm:$0xff]
    %v304 = vld [vmem:[#allocation10 + $0x40] sm:$0xff]
    %v305 = vld [vmem:[#allocation10 + $0x48] sm:$0xff]
    %v306 = vld [vmem:[#allocation10 + $0x50] sm:$0xff]
    %v307 = vld [vmem:[#allocation10 + $0x58] sm:$0xff]
    %v308 = vld [vmem:[#allocation10 + $0x60] sm:$0xff]
    %v309 = vld [vmem:[#allocation10 + $0x68] sm:$0xff]
    %v310 = vld [vmem:[#allocation10 + $0x70] sm:$0xff]
    %v311 = vld [vmem:[#allocation10 + $0x78] sm:$0xff]
    %v312 = vld [vmem:[#allocation11] sm:$0xff]
    %v313 = vld [vmem:[#allocation11 + $0x8] sm:$0xff]
    %v314 = vld [vmem:[#allocation11 + $0x10] sm:$0xff]
    %v315 = vld [vmem:[#allocation11 + $0x18] sm:$0xff]
    %v316 = vld [vmem:[#allocation11 + $0x20] sm:$0xff]
    %v317 = vld [vmem:[#allocation11 + $0x28] sm:$0xff]
    %v318 = vld [vmem:[#allocation11 + $0x30] sm:$0xff]
    %v319 = vld [vmem:[#allocation11 + $0x38] sm:$0xff]
    %v320 = vld [vmem:[#allocation11 + $0x40] sm:$0xff]
    %v321 = vld [vmem:[#allocation11 + $0x48] sm:$0xff]
    %v322 = vld [vmem:[#allocation11 + $0x50] sm:$0xff]
    %v323 = vld [vmem:[#allocation11 + $0x58] sm:$0xff]
    %v324 = vld [vmem:[#allocation11 + $0x60] sm:$0xff]
    %v325 = vld [vmem:[#allocation11 + $0x68] sm:$0xff]
    %v326 = vld [vmem:[#allocation11 + $0x70] sm:$0xff]
    %v327 = vld [vmem:[#allocation11 + $0x78] sm:$0xff]
    %v328 = vld [vmem:[#allocation11 + $0x80] sm:$0xff]
    %v329 = vld [vmem:[#allocation11 + $0x88] sm:$0xff]
    %v330 = vld [vmem:[#allocation11 + $0x90] sm:$0xff]
    %v331 = vld [vmem:[#allocation11 + $0x98] sm:$0xff]
    %v332 = vld [vmem:[#allocation11 + $0xa0] sm:$0xff]
    %v333 = vld [vmem:[#allocation11 + $0xa8] sm:$0xff]
    %v334 = vld [vmem:[#allocation11 + $0xb0] sm:$0xff]
    %v335 = vld [vmem:[#allocation11 + $0xb8] sm:$0xff]
    %v336 = vld [vmem:[#allocation11 + $0xc0] sm:$0xff]
    %v337 = vld [vmem:[#allocation11 + $0xc8] sm:$0xff]
    %v338 = vld [vmem:[#allocation11 + $0xd0] sm:$0xff]
    %v339 = vld [vmem:[#allocation11 + $0xd8] sm:$0xff]
    %v340 = vld [vmem:[#allocation11 + $0xe0] sm:$0xff]
    %v341 = vld [vmem:[#allocation11 + $0xe8] sm:$0xff]
    %v342 = vld [vmem:[#allocation11 + $0xf0] sm:$0xff]
    %v343 = vld [vmem:[#allocation11 + $0xf8] sm:$0xff]
    %v344 = vld [vmem:[#allocation11 + $0x100] sm:$0xff]
    %v345 = vld [vmem:[#allocation11 + $0x108] sm:$0xff]
    %v346 = vld [vmem:[#allocation11 + $0x110] sm:$0xff]
    %v347 = vld [vmem:[#allocation11 + $0x118] sm:$0xff]
    %v348 = vld [vmem:[#allocation11 + $0x120] sm:$0xff]
    %v349 = vld [vmem:[#allocation11 + $0x128] sm:$0xff]
    %v350 = vld [vmem:[#allocation11 + $0x130] sm:$0xff]
    %v351 = vld [vmem:[#allocation11 + $0x138] sm:$0xff]
    %v352 = vld [vmem:[#allocation11 + $0x140] sm:$0xff]
    %v353 = vld [vmem:[#allocation11 + $0x148] sm:$0xff]
    %v354 = vld [vmem:[#allocation11 + $0x150] sm:$0xff]
    %v355 = vld [vmem:[#allocation11 + $0x158] sm:$0xff]
    %v356 = vld [vmem:[#allocation11 + $0x160] sm:$0xff]
    %v357 = vld [vmem:[#allocation11 + $0x168] sm:$0xff]
    %v358 = vld [vmem:[#allocation11 + $0x170] sm:$0xff]
    %v359 = vld [vmem:[#allocation11 + $0x178] sm:$0xff]
    %v360 = vld [vmem:[%s5] sm:$0x1f]
    %v362 = vlaneseq
    %v363 = vshrl.u32 %v362, 7
    %v364 = vsub.s32 0, %v363
    %v365 = vrot.slane %v360, %v364
    %v366 = vlaneseq
    %v367 = vshrl.u32 %v366, 7
    %v368 = vsub.s32 1, %v367
    %v369 = vrot.slane %v360, %v368
    %v370 = vlaneseq
    %v371 = vshrl.u32 %v370, 7
    %v372 = vsub.s32 2, %v371
    %v373 = vrot.slane %v360, %v372
    %v374 = vlaneseq
    %v375 = vshrl.u32 %v374, 7
    %v376 = vsub.s32 3, %v375
    %v377 = vrot.slane %v360, %v376
    %v378 = vlaneseq
    %v379 = vshrl.u32 %v378, 7
    %v380 = vsub.s32 4, %v379
    %v381 = vrot.slane %v360, %v380
    %v387 = vld [vmem:[%s8] sm:$0x7]
    %v389 = vlaneseq
    %v390 = vshrl.u32 %v389, 7
    %v391 = vsub.s32 0, %v390
    %v392 = vrot.slane %v387, %v391
    %v393 = vlaneseq
    %v394 = vshrl.u32 %v393, 7
    %v395 = vsub.s32 1, %v394
    %v396 = vrot.slane %v387, %v395
    %v397 = vlaneseq
    %v398 = vshrl.u32 %v397, 7
    %v399 = vsub.s32 2, %v398
    %v400 = vrot.slane %v387, %v399
    %v404 = vld [vmem:[#allocation2] sm:$0xff]
    %v405 = vld [vmem:[#allocation2 + $0x8] sm:$0xff]
    %v406 = vld [vmem:[#allocation2 + $0x10] sm:$0xff]
    %v407 = vld [vmem:[#allocation2 + $0x18] sm:$0xff]
    %v408 = vld [vmem:[#allocation2 + $0x20] sm:$0xff]
    %v409 = vld [vmem:[#allocation2 + $0x28] sm:$0xff]
    %v410 = vld [vmem:[#allocation2 + $0x30] sm:$0xff]
    %v411 = vld [vmem:[#allocation2 + $0x38] sm:$0xff]
    %v412 = vld [vmem:[#allocation2 + $0x40] sm:$0xff]
    %v413 = vld [vmem:[#allocation2 + $0x48] sm:$0xff]
    %v414 = vld [vmem:[#allocation2 + $0x50] sm:$0xff]
    %v415 = vld [vmem:[#allocation2 + $0x58] sm:$0xff]
    %v416 = vld [vmem:[#allocation2 + $0x60] sm:$0xff]
    %v417 = vld [vmem:[#allocation2 + $0x68] sm:$0xff]
    %v418 = vld [vmem:[#allocation2 + $0x70] sm:$0xff]
    %v419 = vld [vmem:[#allocation2 + $0x78] sm:$0xff]
    %v420 = vld [vmem:[#allocation7] sm:$0xff]
    %v421 = vld [vmem:[#allocation7 + $0x8] sm:$0xff]
    %v422 = vld [vmem:[#allocation7 + $0x10] sm:$0xff]
    %v423 = vld [vmem:[#allocation7 + $0x18] sm:$0xff]
    %v424 = vld [vmem:[#allocation7 + $0x20] sm:$0xff]
    %v425 = vld [vmem:[#allocation7 + $0x28] sm:$0xff]
    %v426 = vld [vmem:[#allocation7 + $0x30] sm:$0xff]
    %v427 = vld [vmem:[#allocation7 + $0x38] sm:$0xff]
    %v428 = vld [vmem:[#allocation7 + $0x40] sm:$0xff]
    %v429 = vld [vmem:[#allocation7 + $0x48] sm:$0xff]
    %v430 = vld [vmem:[#allocation7 + $0x50] sm:$0xff]
    %v431 = vld [vmem:[#allocation7 + $0x58] sm:$0xff]
    %v432 = vld [vmem:[#allocation7 + $0x60] sm:$0xff]
    %v433 = vld [vmem:[#allocation7 + $0x68] sm:$0xff]
    %v434 = vld [vmem:[#allocation7 + $0x70] sm:$0xff]
    %v435 = vld [vmem:[#allocation7 + $0x78] sm:$0xff]
    %v436 = vld [vmem:[%s3] sm:$0x1]
    %v438 = vlaneseq
    %v439 = vshrl.u32 %v438, 7
    %v440 = vsub.s32 0, %v439
    %v441 = vrot.slane %v436, %v440
    %443 = vmatprep.subr.mxu0 0.0
    %444 = vmatpush1.msra.mxu0 %v435
    %445 = vmatprep.subr.mxu0 0.0
    %446 = vmatpush1.msra.mxu0 %v434
    %447 = vmatprep.subr.mxu0 0.0
    %448 = vmatpush1.msra.mxu0 %v433
    %449 = vmatprep.subr.mxu0 0.0
    %450 = vmatpush1.msra.mxu0 %v432
    %451 = vmatprep.subr.mxu0 0.0
    %452 = vmatpush1.msra.mxu0 %v431
    %453 = vmatprep.subr.mxu0 0.0
    %454 = vmatpush1.msra.mxu0 %v430
    %455 = vmatprep.subr.mxu0 0.0
    %456 = vmatpush1.msra.mxu0 %v429
    %457 = vmatprep.subr.mxu0 0.0
    %458 = vmatpush1.msra.mxu0 %v428
    %459 = vmatprep.subr.mxu0 0.0
    %460 = vmatpush1.msra.mxu0 %v427
    %461 = vmatprep.subr.mxu0 0.0
    %462 = vmatpush1.msra.mxu0 %v426
    %463 = vmatprep.subr.mxu0 0.0
    %464 = vmatpush1.msra.mxu0 %v425
    %465 = vmatprep.subr.mxu0 0.0
    %466 = vmatpush1.msra.mxu0 %v424
    %467 = vmatprep.subr.mxu0 0.0
    %468 = vmatpush1.msra.mxu0 %v423
    %469 = vmatprep.subr.mxu0 0.0
    %470 = vmatpush1.msra.mxu0 %v422
    %471 = vmatprep.subr.mxu0 0.0
    %472 = vmatpush1.msra.mxu0 %v421
    %473 = vmatprep.subr.mxu0 0.0
    %474 = vmatpush1.msra.mxu0 %v420
    %475 = vmatprep.subr.mxu0 0.0
    %476 = vmatpush2.msra.mxu0 0.0
    %477 = vmatprep.subr.mxu0 0.0
    %478 = vmatpush2.msra.mxu0 0.0
    %479 = vmatprep.subr.mxu0 0.0
    %480 = vmatpush2.msra.mxu0 0.0
    %481 = vmatprep.subr.mxu0 0.0
    %482 = vmatpush2.msra.mxu0 0.0
    %483 = vmatprep.subr.mxu0 0.0
    %484 = vmatpush2.msra.mxu0 0.0
    %485 = vmatprep.subr.mxu0 0.0
    %486 = vmatpush2.msra.mxu0 0.0
    %487 = vmatprep.subr.mxu0 0.0
    %488 = vmatpush2.msra.mxu0 0.0
    %489 = vmatprep.subr.mxu0 0.0
    %490 = vmatpush2.msra.mxu0 0.0
    %491 = vmatprep.subr.mxu0 0.0
    %492 = vmatpush2.msra.mxu0 0.0
    %493 = vmatprep.subr.mxu0 0.0
    %494 = vmatpush2.msra.mxu0 0.0
    %495 = vmatprep.subr.mxu0 0.0
    %496 = vmatpush2.msra.mxu0 0.0
    %497 = vmatprep.subr.mxu0 0.0
    %498 = vmatpush2.msra.mxu0 0.0
    %499 = vmatprep.subr.mxu0 0.0
    %500 = vmatpush2.msra.mxu0 0.0
    %501 = vmatprep.subr.mxu0 0.0
    %502 = vmatpush2.msra.mxu0 0.0
    %503 = vmatprep.subr.mxu0 0.0
    %504 = vmatpush2.msra.mxu0 0.0
    %505 = vmatprep.subr.mxu0 0.0
    %506 = vmatpush2.msra.mxu0 0.0
    %507 = vmatprep.mubr.f32.mxu0 0.0
    %508 = vmatmul.mubr.f32.gmra.mxu0 %v404
    %v509 = vpop.f32.mrf.mxu0
    %v510 = vadd.f32 %v441, %v509
    %v511 = vpop.f32.mrf.mxu0
    %512 = vmatprep.mubr.f32.mxu0 0.0
    %513 = vmatmul.mubr.f32.gmra.mxu0 %v405
    %v514 = vpop.f32.mrf.mxu0
    %v515 = vadd.f32 %v441, %v514
    %v516 = vpop.f32.mrf.mxu0
    %517 = vmatprep.mubr.f32.mxu0 0.0
    %518 = vmatmul.mubr.f32.gmra.mxu0 %v406
    %v519 = vpop.f32.mrf.mxu0
    %v520 = vadd.f32 %v441, %v519
    %v521 = vpop.f32.mrf.mxu0
    %522 = vmatprep.mubr.f32.mxu0 0.0
    %523 = vmatmul.mubr.f32.gmra.mxu0 %v407
    %v524 = vpop.f32.mrf.mxu0
    %v525 = vadd.f32 %v441, %v524
    %v526 = vpop.f32.mrf.mxu0
    %527 = vmatprep.mubr.f32.mxu0 0.0
    %528 = vmatmul.mubr.f32.gmra.mxu0 %v408
    %v529 = vpop.f32.mrf.mxu0
    %v530 = vadd.f32 %v441, %v529
    %v531 = vpop.f32.mrf.mxu0
    %532 = vmatprep.mubr.f32.mxu0 0.0
    %533 = vmatmul.mubr.f32.gmra.mxu0 %v409
    %v534 = vpop.f32.mrf.mxu0
    %v535 = vadd.f32 %v441, %v534
    %v536 = vpop.f32.mrf.mxu0
    %537 = vmatprep.mubr.f32.mxu0 0.0
    %538 = vmatmul.mubr.f32.gmra.mxu0 %v410
    %v539 = vpop.f32.mrf.mxu0
    %v540 = vadd.f32 %v441, %v539
    %v541 = vpop.f32.mrf.mxu0
    %542 = vmatprep.mubr.f32.mxu0 0.0
    %543 = vmatmul.mubr.f32.gmra.mxu0 %v411
    %v544 = vpop.f32.mrf.mxu0
    %v545 = vadd.f32 %v441, %v544
    %v546 = vpop.f32.mrf.mxu0
    %547 = vmatprep.mubr.f32.mxu0 0.0
    %548 = vmatmul.mubr.f32.gmra.mxu0 %v412
    %v549 = vpop.f32.mrf.mxu0
    %v550 = vadd.f32 %v441, %v549
    %v551 = vpop.f32.mrf.mxu0
    %552 = vmatprep.mubr.f32.mxu0 0.0
    %553 = vmatmul.mubr.f32.gmra.mxu0 %v413
    %v554 = vpop.f32.mrf.mxu0
    %v555 = vadd.f32 %v441, %v554
    %v556 = vpop.f32.mrf.mxu0
    %557 = vmatprep.mubr.f32.mxu0 0.0
    %558 = vmatmul.mubr.f32.gmra.mxu0 %v414
    %v559 = vpop.f32.mrf.mxu0
    %v560 = vadd.f32 %v441, %v559
    %v561 = vpop.f32.mrf.mxu0
    %562 = vmatprep.mubr.f32.mxu0 0.0
    %563 = vmatmul.mubr.f32.gmra.mxu0 %v415
    %v564 = vpop.f32.mrf.mxu0
    %v565 = vadd.f32 %v441, %v564
    %v566 = vpop.f32.mrf.mxu0
    %567 = vmatprep.mubr.f32.mxu0 0.0
    %568 = vmatmul.mubr.f32.gmra.mxu0 %v416
    %v569 = vpop.f32.mrf.mxu0
    %v570 = vadd.f32 %v441, %v569
    %v571 = vpop.f32.mrf.mxu0
    %572 = vmatprep.mubr.f32.mxu0 0.0
    %573 = vmatmul.mubr.f32.gmra.mxu0 %v417
    %v574 = vpop.f32.mrf.mxu0
    %v575 = vadd.f32 %v441, %v574
    %v576 = vpop.f32.mrf.mxu0
    %577 = vmatprep.mubr.f32.mxu0 0.0
    %578 = vmatmul.mubr.f32.gmra.mxu0 %v418
    %v579 = vpop.f32.mrf.mxu0
    %v580 = vadd.f32 %v441, %v579
    %v581 = vpop.f32.mrf.mxu0
    %582 = vmatprep.mubr.f32.mxu0 0.0
    %583 = vmatmul.mubr.f32.gmra.mxu0 %v419
    %v584 = vpop.f32.mrf.mxu0
    %v585 = vadd.f32 %v441, %v584
    %v586 = vpop.f32.mrf.mxu0
    %587 = vdwg.mxu0
    %v588 = vmul.f32 %v510, %v184
    %v589 = vmul.f32 %v515, %v185
    %v590 = vmul.f32 %v520, %v186
    %v591 = vmul.f32 %v525, %v187
    %v592 = vmul.f32 %v530, %v188
    %v593 = vmul.f32 %v535, %v189
    %v594 = vmul.f32 %v540, %v190
    %v595 = vmul.f32 %v545, %v191
    %v596 = vmul.f32 %v550, %v192
    %v597 = vmul.f32 %v555, %v193
    %v598 = vmul.f32 %v560, %v194
    %v599 = vmul.f32 %v565, %v195
    %v600 = vmul.f32 %v570, %v196
    %v601 = vmul.f32 %v575, %v197
    %v602 = vmul.f32 %v580, %v198
    %v603 = vmul.f32 %v585, %v199
    %v604 = vadd.f32 %v588, %v589
    %v605 = vadd.f32 %v604, %v590
    %v606 = vadd.f32 %v605, %v591
    %v607 = vadd.f32 %v606, %v592
    %v608 = vadd.f32 %v607, %v593
    %v609 = vadd.f32 %v608, %v594
    %v610 = vadd.f32 %v609, %v595
    %v611 = vadd.f32 %v610, %v596
    %v612 = vadd.f32 %v611, %v597
    %v613 = vadd.f32 %v612, %v598
    %v614 = vadd.f32 %v613, %v599
    %v615 = vadd.f32 %v614, %v600
    %v616 = vadd.f32 %v615, %v601
    %v617 = vadd.f32 %v616, %v602
    %v618 = vadd.f32 %v617, %v603
    %619 = vadd.xlane.f32.xlu0 %v618
    %v620 = vpop.xlane.xlu0 %619
    %v621 = vrot.slane %v620, 4
    %v622 = vadd.f32 %v620, %v621
    %v623 = vrot.slane %v622, 2
    %v624 = vadd.f32 %v622, %v623
    %v625 = vrot.slane %v624, 1
    %v626 = vadd.f32 %v624, %v625
    %s627 = vtos %v626
    %v628 = vstv %s627
    %v629 = vmul.f32 %v588, %v588
    %v630 = vmul.f32 %v589, %v589
    %v631 = vmul.f32 %v590, %v590
    %v632 = vmul.f32 %v591, %v591
    %v633 = vmul.f32 %v592, %v592
    %v634 = vmul.f32 %v593, %v593
    %v635 = vmul.f32 %v594, %v594
    %v636 = vmul.f32 %v595, %v595
    %v637 = vmul.f32 %v596, %v596
    %v638 = vmul.f32 %v597, %v597
    %v639 = vmul.f32 %v598, %v598
    %v640 = vmul.f32 %v599, %v599
    %v641 = vmul.f32 %v600, %v600
    %v642 = vmul.f32 %v601, %v601
    %v643 = vmul.f32 %v602, %v602
    %v644 = vmul.f32 %v603, %v603
    %v645 = vadd.f32 %v629, %v630
    %v646 = vadd.f32 %v645, %v631
    %v647 = vadd.f32 %v646, %v632
    %v648 = vadd.f32 %v647, %v633
    %v649 = vadd.f32 %v648, %v634
    %v650 = vadd.f32 %v649, %v635
    %v651 = vadd.f32 %v650, %v636
    %v652 = vadd.f32 %v651, %v637
    %v653 = vadd.f32 %v652, %v638
    %v654 = vadd.f32 %v653, %v639
    %v655 = vadd.f32 %v654, %v640
    %v656 = vadd.f32 %v655, %v641
    %v657 = vadd.f32 %v656, %v642
    %v658 = vadd.f32 %v657, %v643
    %v659 = vadd.f32 %v658, %v644
    %660 = vadd.xlane.f32.xlu0 %v659
    %v661 = vpop.xlane.xlu0 %660
    %v662 = vrot.slane %v661, 4
    %v663 = vadd.f32 %v661, %v662
    %v664 = vrot.slane %v663, 2
    %v665 = vadd.f32 %v663, %v664
    %v666 = vrot.slane %v665, 1
    %v667 = vadd.f32 %v665, %v666
    %s668 = vtos %v667
    %v669 = vstv %s668
    %v670 = vmul.f32 %v628, 0.001953125
    %v671 = vmul.f32 %v669, 0.001953125
    %v672 = vmul.f32 %v670, %v670
    %v673 = vsub.f32 %v671, %v672
    %v674 = vmax.f32 %v673, 0.0
    %v675 = vrsqrt.pop %v674
    %v676 = vmul.f32 %v674, %v675
    %vm677 = vcmp.eq.f32.partialorder %v674, inf
    %v678 = vsel %vm677, %v674, %v676
    %vm679 = vcmp.eq.f32.partialorder %v674, 0.0
    %v680 = vand.u32 %v674, 2147483648
    %v681 = vsel %vm679, %v680, %v678
    %v682 = vadd.f32 %v681, 1e-05
    %v683 = vrcp.pop %v682
    %v684 = vsub.f32 %v510, %v670
    %v685 = vsub.f32 %v515, %v670
    %v686 = vsub.f32 %v520, %v670
    %v687 = vsub.f32 %v525, %v670
    %v688 = vsub.f32 %v530, %v670
    %v689 = vsub.f32 %v535, %v670
    %v690 = vsub.f32 %v540, %v670
    %v691 = vsub.f32 %v545, %v670
    %v692 = vsub.f32 %v550, %v670
    %v693 = vsub.f32 %v555, %v670
    %v694 = vsub.f32 %v560, %v670
    %v695 = vsub.f32 %v565, %v670
    %v696 = vsub.f32 %v570, %v670
    %v697 = vsub.f32 %v575, %v670
    %v698 = vsub.f32 %v580, %v670
    %v699 = vsub.f32 %v585, %v670
    %v700 = vmul.f32 %v684, %v683
    %v701 = vmul.f32 %v685, %v683
    %v702 = vmul.f32 %v686, %v683
    %v703 = vmul.f32 %v687, %v683
    %v704 = vmul.f32 %v688, %v683
    %v705 = vmul.f32 %v689, %v683
    %v706 = vmul.f32 %v690, %v683
    %v707 = vmul.f32 %v691, %v683
    %v708 = vmul.f32 %v692, %v683
    %v709 = vmul.f32 %v693, %v683
    %v710 = vmul.f32 %v694, %v683
    %v711 = vmul.f32 %v695, %v683
    %v712 = vmul.f32 %v696, %v683
    %v713 = vmul.f32 %v697, %v683
    %v714 = vmul.f32 %v698, %v683
    %v715 = vmul.f32 %v699, %v683
    %716 = vmatprep.subr.mxu0 %v292
    %717 = vmatpush1.msra.mxu0 %v291
    %718 = vmatprep.subr.mxu0 %v287
    %719 = vmatpush1.msra.mxu0 %v286
    %720 = vmatprep.subr.mxu0 %v282
    %721 = vmatpush1.msra.mxu0 %v281
    %722 = vmatprep.subr.mxu0 %v277
    %723 = vmatpush1.msra.mxu0 %v276
    %724 = vmatprep.subr.mxu0 %v272
    %725 = vmatpush1.msra.mxu0 %v271
    %726 = vmatprep.subr.mxu0 %v267
    %727 = vmatpush1.msra.mxu0 %v266
    %728 = vmatprep.subr.mxu0 %v262
    %729 = vmatpush1.msra.mxu0 %v261
    %730 = vmatprep.subr.mxu0 %v257
    %731 = vmatpush1.msra.mxu0 %v256
    %732 = vmatprep.subr.mxu0 %v252
    %733 = vmatpush1.msra.mxu0 %v251
    %734 = vmatprep.subr.mxu0 %v247
    %735 = vmatpush1.msra.mxu0 %v246
    %736 = vmatprep.subr.mxu0 %v242
    %737 = vmatpush1.msra.mxu0 %v241
    %738 = vmatprep.subr.mxu0 %v237
    %739 = vmatpush1.msra.mxu0 %v236
    %740 = vmatprep.subr.mxu0 %v232
    %741 = vmatpush1.msra.mxu0 %v231
    %742 = vmatprep.subr.mxu0 %v227
    %743 = vmatpush1.msra.mxu0 %v226
    %744 = vmatprep.subr.mxu0 %v222
    %745 = vmatpush1.msra.mxu0 %v221
    %746 = vmatprep.subr.mxu0 %v217
    %747 = vmatpush1.msra.mxu0 %v216
    %748 = vmatprep.subr.mxu0 0.0
    %749 = vmatpush2.msra.mxu0 0.0
    %750 = vmatprep.subr.mxu0 0.0
    %751 = vmatpush2.msra.mxu0 0.0
    %752 = vmatprep.subr.mxu0 0.0
    %753 = vmatpush2.msra.mxu0 0.0
    %754 = vmatprep.subr.mxu0 0.0
    %755 = vmatpush2.msra.mxu0 0.0
    %756 = vmatprep.subr.mxu0 0.0
    %757 = vmatpush2.msra.mxu0 0.0
    %758 = vmatprep.subr.mxu0 0.0
    %759 = vmatpush2.msra.mxu0 0.0
    %760 = vmatprep.subr.mxu0 0.0
    %761 = vmatpush2.msra.mxu0 0.0
    %762 = vmatprep.subr.mxu0 0.0
    %763 = vmatpush2.msra.mxu0 0.0
    %764 = vmatprep.subr.mxu0 0.0
    %765 = vmatpush2.msra.mxu0 0.0
    %766 = vmatprep.subr.mxu0 0.0
    %767 = vmatpush2.msra.mxu0 0.0
    %768 = vmatprep.subr.mxu0 0.0
    %769 = vmatpush2.msra.mxu0 0.0
    %770 = vmatprep.subr.mxu0 0.0
    %771 = vmatpush2.msra.mxu0 0.0
    %772 = vmatprep.subr.mxu0 0.0
    %773 = vmatpush2.msra.mxu0 0.0
    %774 = vmatprep.subr.mxu0 0.0
    %775 = vmatpush2.msra.mxu0 0.0
    %776 = vmatprep.subr.mxu0 0.0
    %777 = vmatpush2.msra.mxu0 0.0
    %778 = vmatprep.subr.mxu0 0.0
    %779 = vmatpush2.msra.mxu0 0.0
    %780 = vmatprep.mubr.f32.mxu0 0.0
    %781 = vmatmul.mubr.f32.gmra.mxu0 %v700
    %v782 = vpop.f32.mrf.mxu0
    %v783 = vadd.f32 %v365, %v782
    %v784 = vpop.f32.mrf.mxu0
    %v785 = vadd.f32 %v369, %v784
    %786 = vmatprep.mubr.f32.mxu0 0.0
    %787 = vmatmul.mubr.f32.gmra.mxu0 %v701
    %v788 = vpop.f32.mrf.mxu0
    %v789 = vadd.f32 %v365, %v788
    %v790 = vpop.f32.mrf.mxu0
    %v791 = vadd.f32 %v369, %v790
    %792 = vmatprep.mubr.f32.mxu0 0.0
    %793 = vmatmul.mubr.f32.gmra.mxu0 %v702
    %v794 = vpop.f32.mrf.mxu0
    %v795 = vadd.f32 %v365, %v794
    %v796 = vpop.f32.mrf.mxu0
    %v797 = vadd.f32 %v369, %v796
    %798 = vmatprep.mubr.f32.mxu0 0.0
    %799 = vmatmul.mubr.f32.gmra.mxu0 %v703
    %v800 = vpop.f32.mrf.mxu0
    %v801 = vadd.f32 %v365, %v800
    %v802 = vpop.f32.mrf.mxu0
    %v803 = vadd.f32 %v369, %v802
    %804 = vmatprep.mubr.f32.mxu0 0.0
    %805 = vmatmul.mubr.f32.gmra.mxu0 %v704
    %v806 = vpop.f32.mrf.mxu0
    %v807 = vadd.f32 %v365, %v806
    %v808 = vpop.f32.mrf.mxu0
    %v809 = vadd.f32 %v369, %v808
    %810 = vmatprep.mubr.f32.mxu0 0.0
    %811 = vmatmul.mubr.f32.gmra.mxu0 %v705
    %v812 = vpop.f32.mrf.mxu0
    %v813 = vadd.f32 %v365, %v812
    %v814 = vpop.f32.mrf.mxu0
    %v815 = vadd.f32 %v369, %v814
    %816 = vmatprep.mubr.f32.mxu0 0.0
    %817 = vmatmul.mubr.f32.gmra.mxu0 %v706
    %v818 = vpop.f32.mrf.mxu0
    %v819 = vadd.f32 %v365, %v818
    %v820 = vpop.f32.mrf.mxu0
    %v821 = vadd.f32 %v369, %v820
    %822 = vmatprep.mubr.f32.mxu0 0.0
    %823 = vmatmul.mubr.f32.gmra.mxu0 %v707
    %v824 = vpop.f32.mrf.mxu0
    %v825 = vadd.f32 %v365, %v824
    %v826 = vpop.f32.mrf.mxu0
    %v827 = vadd.f32 %v369, %v826
    %828 = vmatprep.mubr.f32.mxu0 0.0
    %829 = vmatmul.mubr.f32.gmra.mxu0 %v708
    %v830 = vpop.f32.mrf.mxu0
    %v831 = vadd.f32 %v365, %v830
    %v832 = vpop.f32.mrf.mxu0
    %v833 = vadd.f32 %v369, %v832
    %834 = vmatprep.mubr.f32.mxu0 0.0
    %835 = vmatmul.mubr.f32.gmra.mxu0 %v709
    %v836 = vpop.f32.mrf.mxu0
    %v837 = vadd.f32 %v365, %v836
    %v838 = vpop.f32.mrf.mxu0
    %v839 = vadd.f32 %v369, %v838
    %840 = vmatprep.mubr.f32.mxu0 0.0
    %841 = vmatmul.mubr.f32.gmra.mxu0 %v710
    %v842 = vpop.f32.mrf.mxu0
    %v843 = vadd.f32 %v365, %v842
    %v844 = vpop.f32.mrf.mxu0
    %v845 = vadd.f32 %v369, %v844
    %846 = vmatprep.mubr.f32.mxu0 0.0
    %847 = vmatmul.mubr.f32.gmra.mxu0 %v711
    %v848 = vpop.f32.mrf.mxu0
    %v849 = vadd.f32 %v365, %v848
    %v850 = vpop.f32.mrf.mxu0
    %v851 = vadd.f32 %v369, %v850
    %852 = vmatprep.mubr.f32.mxu0 0.0
    %853 = vmatmul.mubr.f32.gmra.mxu0 %v712
    %v854 = vpop.f32.mrf.mxu0
    %v855 = vadd.f32 %v365, %v854
    %v856 = vpop.f32.mrf.mxu0
    %v857 = vadd.f32 %v369, %v856
    %858 = vmatprep.mubr.f32.mxu0 0.0
    %859 = vmatmul.mubr.f32.gmra.mxu0 %v713
    %v860 = vpop.f32.mrf.mxu0
    %v861 = vadd.f32 %v365, %v860
    %v862 = vpop.f32.mrf.mxu0
    %v863 = vadd.f32 %v369, %v862
    %864 = vmatprep.mubr.f32.mxu0 0.0
    %865 = vmatmul.mubr.f32.gmra.mxu0 %v714
    %v866 = vpop.f32.mrf.mxu0
    %v867 = vadd.f32 %v365, %v866
    %v868 = vpop.f32.mrf.mxu0
    %v869 = vadd.f32 %v369, %v868
    %870 = vmatprep.mubr.f32.mxu0 0.0
    %871 = vmatmul.mubr.f32.gmra.mxu0 %v715
    %v872 = vpop.f32.mrf.mxu0
    %v873 = vadd.f32 %v365, %v872
    %v874 = vpop.f32.mrf.mxu0
    %v875 = vadd.f32 %v369, %v874
    %876 = vdwg.mxu0
    %877 = vmatprep.subr.mxu0 %v294
    %878 = vmatpush1.msra.mxu0 %v293
    %879 = vmatprep.subr.mxu0 %v289
    %880 = vmatpush1.msra.mxu0 %v288
    %881 = vmatprep.subr.mxu0 %v284
    %882 = vmatpush1.msra.mxu0 %v283
    %883 = vmatprep.subr.mxu0 %v279
    %884 = vmatpush1.msra.mxu0 %v278
    %885 = vmatprep.subr.mxu0 %v274
    %886 = vmatpush1.msra.mxu0 %v273
    %887 = vmatprep.subr.mxu0 %v269
    %888 = vmatpush1.msra.mxu0 %v268
    %889 = vmatprep.subr.mxu0 %v264
    %890 = vmatpush1.msra.mxu0 %v263
    %891 = vmatprep.subr.mxu0 %v259
    %892 = vmatpush1.msra.mxu0 %v258
    %893 = vmatprep.subr.mxu0 %v254
    %894 = vmatpush1.msra.mxu0 %v253
    %895 = vmatprep.subr.mxu0 %v249
    %896 = vmatpush1.msra.mxu0 %v248
    %897 = vmatprep.subr.mxu0 %v244
    %898 = vmatpush1.msra.mxu0 %v243
    %899 = vmatprep.subr.mxu0 %v239
    %900 = vmatpush1.msra.mxu0 %v238
    %901 = vmatprep.subr.mxu0 %v234
    %902 = vmatpush1.msra.mxu0 %v233
    %903 = vmatprep.subr.mxu0 %v229
    %904 = vmatpush1.msra.mxu0 %v228
    %905 = vmatprep.subr.mxu0 %v224
    %906 = vmatpush1.msra.mxu0 %v223
    %907 = vmatprep.subr.mxu0 %v219
    %908 = vmatpush1.msra.mxu0 %v218
    %909 = vmatprep.subr.mxu0 0.0
    %910 = vmatpush2.msra.mxu0 0.0
    %911 = vmatprep.subr.mxu0 0.0
    %912 = vmatpush2.msra.mxu0 0.0
    %913 = vmatprep.subr.mxu0 0.0
    %914 = vmatpush2.msra.mxu0 0.0
    %915 = vmatprep.subr.mxu0 0.0
    %916 = vmatpush2.msra.mxu0 0.0
    %917 = vmatprep.subr.mxu0 0.0
    %918 = vmatpush2.msra.mxu0 0.0
    %919 = vmatprep.subr.mxu0 0.0
    %920 = vmatpush2.msra.mxu0 0.0
    %921 = vmatprep.subr.mxu0 0.0
    %922 = vmatpush2.msra.mxu0 0.0
    %923 = vmatprep.subr.mxu0 0.0
    %924 = vmatpush2.msra.mxu0 0.0
    %925 = vmatprep.subr.mxu0 0.0
    %926 = vmatpush2.msra.mxu0 0.0
    %927 = vmatprep.subr.mxu0 0.0
    %928 = vmatpush2.msra.mxu0 0.0
    %929 = vmatprep.subr.mxu0 0.0
    %930 = vmatpush2.msra.mxu0 0.0
    %931 = vmatprep.subr.mxu0 0.0
    %932 = vmatpush2.msra.mxu0 0.0
    %933 = vmatprep.subr.mxu0 0.0
    %934 = vmatpush2.msra.mxu0 0.0
    %935 = vmatprep.subr.mxu0 0.0
    %936 = vmatpush2.msra.mxu0 0.0
    %937 = vmatprep.subr.mxu0 0.0
    %938 = vmatpush2.msra.mxu0 0.0
    %939 = vmatprep.subr.mxu0 0.0
    %940 = vmatpush2.msra.mxu0 0.0
    %941 = vmatprep.mubr.f32.mxu0 0.0
    %942 = vmatmul.mubr.f32.gmra.mxu0 %v700
    %v943 = vpop.f32.mrf.mxu0
    %v944 = vadd.f32 %v373, %v943
    %v945 = vpop.f32.mrf.mxu0
    %v946 = vadd.f32 %v377, %v945
    %947 = vmatprep.mubr.f32.mxu0 0.0
    %948 = vmatmul.mubr.f32.gmra.mxu0 %v701
    %v949 = vpop.f32.mrf.mxu0
    %v950 = vadd.f32 %v373, %v949
    %v951 = vpop.f32.mrf.mxu0
    %v952 = vadd.f32 %v377, %v951
    %953 = vmatprep.mubr.f32.mxu0 0.0
    %954 = vmatmul.mubr.f32.gmra.mxu0 %v702
    %v955 = vpop.f32.mrf.mxu0
    %v956 = vadd.f32 %v373, %v955
    %v957 = vpop.f32.mrf.mxu0
    %v958 = vadd.f32 %v377, %v957
    %959 = vmatprep.mubr.f32.mxu0 0.0
    %960 = vmatmul.mubr.f32.gmra.mxu0 %v703
    %v961 = vpop.f32.mrf.mxu0
    %v962 = vadd.f32 %v373, %v961
    %v963 = vpop.f32.mrf.mxu0
    %v964 = vadd.f32 %v377, %v963
    %965 = vmatprep.mubr.f32.mxu0 0.0
    %966 = vmatmul.mubr.f32.gmra.mxu0 %v704
    %v967 = vpop.f32.mrf.mxu0
    %v968 = vadd.f32 %v373, %v967
    %v969 = vpop.f32.mrf.mxu0
    %v970 = vadd.f32 %v377, %v969
    %971 = vmatprep.mubr.f32.mxu0 0.0
    %972 = vmatmul.mubr.f32.gmra.mxu0 %v705
    %v973 = vpop.f32.mrf.mxu0
    %v974 = vadd.f32 %v373, %v973
    %v975 = vpop.f32.mrf.mxu0
    %v976 = vadd.f32 %v377, %v975
    %977 = vmatprep.mubr.f32.mxu0 0.0
    %978 = vmatmul.mubr.f32.gmra.mxu0 %v706
    %v979 = vpop.f32.mrf.mxu0
    %v980 = vadd.f32 %v373, %v979
    %v981 = vpop.f32.mrf.mxu0
    %v982 = vadd.f32 %v377, %v981
    %983 = vmatprep.mubr.f32.mxu0 0.0
    %984 = vmatmul.mubr.f32.gmra.mxu0 %v707
    %v985 = vpop.f32.mrf.mxu0
    %v986 = vadd.f32 %v373, %v985
    %v987 = vpop.f32.mrf.mxu0
    %v988 = vadd.f32 %v377, %v987
    %989 = vmatprep.mubr.f32.mxu0 0.0
    %990 = vmatmul.mubr.f32.gmra.mxu0 %v708
    %v991 = vpop.f32.mrf.mxu0
    %v992 = vadd.f32 %v373, %v991
    %v993 = vpop.f32.mrf.mxu0
    %v994 = vadd.f32 %v377, %v993
    %995 = vmatprep.mubr.f32.mxu0 0.0
    %996 = vmatmul.mubr.f32.gmra.mxu0 %v709
    %v997 = vpop.f32.mrf.mxu0
    %v998 = vadd.f32 %v373, %v997
    %v999 = vpop.f32.mrf.mxu0
    %v1000 = vadd.f32 %v377, %v999
    %1001 = vmatprep.mubr.f32.mxu0 0.0
    %1002 = vmatmul.mubr.f32.gmra.mxu0 %v710
    %v1003 = vpop.f32.mrf.mxu0
    %v1004 = vadd.f32 %v373, %v1003
    %v1005 = vpop.f32.mrf.mxu0
    %v1006 = vadd.f32 %v377, %v1005
    %1007 = vmatprep.mubr.f32.mxu0 0.0
    %1008 = vmatmul.mubr.f32.gmra.mxu0 %v711
    %v1009 = vpop.f32.mrf.mxu0
    %v1010 = vadd.f32 %v373, %v1009
    %v1011 = vpop.f32.mrf.mxu0
    %v1012 = vadd.f32 %v377, %v1011
    %1013 = vmatprep.mubr.f32.mxu0 0.0
    %1014 = vmatmul.mubr.f32.gmra.mxu0 %v712
    %v1015 = vpop.f32.mrf.mxu0
    %v1016 = vadd.f32 %v373, %v1015
    %v1017 = vpop.f32.mrf.mxu0
    %v1018 = vadd.f32 %v377, %v1017
    %1019 = vmatprep.mubr.f32.mxu0 0.0
    %1020 = vmatmul.mubr.f32.gmra.mxu0 %v713
    %v1021 = vpop.f32.mrf.mxu0
    %v1022 = vadd.f32 %v373, %v1021
    %v1023 = vpop.f32.mrf.mxu0
    %v1024 = vadd.f32 %v377, %v1023
    %1025 = vmatprep.mubr.f32.mxu0 0.0
    %1026 = vmatmul.mubr.f32.gmra.mxu0 %v714
    %v1027 = vpop.f32.mrf.mxu0
    %v1028 = vadd.f32 %v373, %v1027
    %v1029 = vpop.f32.mrf.mxu0
    %v1030 = vadd.f32 %v377, %v1029
    %1031 = vmatprep.mubr.f32.mxu0 0.0
    %1032 = vmatmul.mubr.f32.gmra.mxu0 %v715
    %v1033 = vpop.f32.mrf.mxu0
    %v1034 = vadd.f32 %v373, %v1033
    %v1035 = vpop.f32.mrf.mxu0
    %v1036 = vadd.f32 %v377, %v1035
    %1037 = vdwg.mxu0
    %1038 = vmatprep.subr.mxu0 0.0
    %1039 = vmatpush1.msra.mxu0 %v295
    %1040 = vmatprep.subr.mxu0 0.0
    %1041 = vmatpush1.msra.mxu0 %v290
    %1042 = vmatprep.subr.mxu0 0.0
    %1043 = vmatpush1.msra.mxu0 %v285
    %1044 = vmatprep.subr.mxu0 0.0
    %1045 = vmatpush1.msra.mxu0 %v280
    %1046 = vmatprep.subr.mxu0 0.0
    %1047 = vmatpush1.msra.mxu0 %v275
    %1048 = vmatprep.subr.mxu0 0.0
    %1049 = vmatpush1.msra.mxu0 %v270
    %1050 = vmatprep.subr.mxu0 0.0
    %1051 = vmatpush1.msra.mxu0 %v265
    %1052 = vmatprep.subr.mxu0 0.0
    %1053 = vmatpush1.msra.mxu0 %v260
    %1054 = vmatprep.subr.mxu0 0.0
    %1055 = vmatpush1.msra.mxu0 %v255
    %1056 = vmatprep.subr.mxu0 0.0
    %1057 = vmatpush1.msra.mxu0 %v250
    %1058 = vmatprep.subr.mxu0 0.0
    %1059 = vmatpush1.msra.mxu0 %v245
    %1060 = vmatprep.subr.mxu0 0.0
    %1061 = vmatpush1.msra.mxu0 %v240
    %1062 = vmatprep.subr.mxu0 0.0
    %1063 = vmatpush1.msra.mxu0 %v235
    %1064 = vmatprep.subr.mxu0 0.0
    %1065 = vmatpush1.msra.mxu0 %v230
    %1066 = vmatprep.subr.mxu0 0.0
    %1067 = vmatpush1.msra.mxu0 %v225
    %1068 = vmatprep.subr.mxu0 0.0
    %1069 = vmatpush1.msra.mxu0 %v220
    %1070 = vmatprep.subr.mxu0 0.0
    %1071 = vmatpush2.msra.mxu0 0.0
    %1072 = vmatprep.subr.mxu0 0.0
    %1073 = vmatpush2.msra.mxu0 0.0
    %1074 = vmatprep.subr.mxu0 0.0
    %1075 = vmatpush2.msra.mxu0 0.0
    %1076 = vmatprep.subr.mxu0 0.0
    %1077 = vmatpush2.msra.mxu0 0.0
    %1078 = vmatprep.subr.mxu0 0.0
    %1079 = vmatpush2.msra.mxu0 0.0
    %1080 = vmatprep.subr.mxu0 0.0
    %1081 = vmatpush2.msra.mxu0 0.0
    %1082 = vmatprep.subr.mxu0 0.0
    %1083 = vmatpush2.msra.mxu0 0.0
    %1084 = vmatprep.subr.mxu0 0.0
    %1085 = vmatpush2.msra.mxu0 0.0
    %1086 = vmatprep.subr.mxu0 0.0
    %1087 = vmatpush2.msra.mxu0 0.0
    %1088 = vmatprep.subr.mxu0 0.0
    %1089 = vmatpush2.msra.mxu0 0.0
    %1090 = vmatprep.subr.mxu0 0.0
    %1091 = vmatpush2.msra.mxu0 0.0
    %1092 = vmatprep.subr.mxu0 0.0
    %1093 = vmatpush2.msra.mxu0 0.0
    %1094 = vmatprep.subr.mxu0 0.0
    %1095 = vmatpush2.msra.mxu0 0.0
    %1096 = vmatprep.subr.mxu0 0.0
    %1097 = vmatpush2.msra.mxu0 0.0
    %1098 = vmatprep.subr.mxu0 0.0
    %1099 = vmatpush2.msra.mxu0 0.0
    %1100 = vmatprep.subr.mxu0 0.0
    %1101 = vmatpush2.msra.mxu0 0.0
    %1102 = vmatprep.mubr.f32.mxu0 0.0
    %1103 = vmatmul.mubr.f32.gmra.mxu0 %v700
    %v1104 = vpop.f32.mrf.mxu0
    %v1105 = vadd.f32 %v381, %v1104
    %v1106 = vpop.f32.mrf.mxu0
    %1107 = vmatprep.mubr.f32.mxu0 0.0
    %1108 = vmatmul.mubr.f32.gmra.mxu0 %v701
    %v1109 = vpop.f32.mrf.mxu0
    %v1110 = vadd.f32 %v381, %v1109
    %v1111 = vpop.f32.mrf.mxu0
    %1112 = vmatprep.mubr.f32.mxu0 0.0
    %1113 = vmatmul.mubr.f32.gmra.mxu0 %v702
    %v1114 = vpop.f32.mrf.mxu0
    %v1115 = vadd.f32 %v381, %v1114
    %v1116 = vpop.f32.mrf.mxu0
    %1117 = vmatprep.mubr.f32.mxu0 0.0
    %1118 = vmatmul.mubr.f32.gmra.mxu0 %v703
    %v1119 = vpop.f32.mrf.mxu0
    %v1120 = vadd.f32 %v381, %v1119
    %v1121 = vpop.f32.mrf.mxu0
    %1122 = vmatprep.mubr.f32.mxu0 0.0
    %1123 = vmatmul.mubr.f32.gmra.mxu0 %v704
    %v1124 = vpop.f32.mrf.mxu0
    %v1125 = vadd.f32 %v381, %v1124
    %v1126 = vpop.f32.mrf.mxu0
    %1127 = vmatprep.mubr.f32.mxu0 0.0
    %1128 = vmatmul.mubr.f32.gmra.mxu0 %v705
    %v1129 = vpop.f32.mrf.mxu0
    %v1130 = vadd.f32 %v381, %v1129
    %v1131 = vpop.f32.mrf.mxu0
    %1132 = vmatprep.mubr.f32.mxu0 0.0
    %1133 = vmatmul.mubr.f32.gmra.mxu0 %v706
    %v1134 = vpop.f32.mrf.mxu0
    %v1135 = vadd.f32 %v381, %v1134
    %v1136 = vpop.f32.mrf.mxu0
    %1137 = vmatprep.mubr.f32.mxu0 0.0
    %1138 = vmatmul.mubr.f32.gmra.mxu0 %v707
    %v1139 = vpop.f32.mrf.mxu0
    %v1140 = vadd.f32 %v381, %v1139
    %v1141 = vpop.f32.mrf.mxu0
    %1142 = vmatprep.mubr.f32.mxu0 0.0
    %1143 = vmatmul.mubr.f32.gmra.mxu0 %v708
    %v1144 = vpop.f32.mrf.mxu0
    %v1145 = vadd.f32 %v381, %v1144
    %v1146 = vpop.f32.mrf.mxu0
    %1147 = vmatprep.mubr.f32.mxu0 0.0
    %1148 = vmatmul.mubr.f32.gmra.mxu0 %v709
    %v1149 = vpop.f32.mrf.mxu0
    %v1150 = vadd.f32 %v381, %v1149
    %v1151 = vpop.f32.mrf.mxu0
    %1152 = vmatprep.mubr.f32.mxu0 0.0
    %1153 = vmatmul.mubr.f32.gmra.mxu0 %v710
    %v1154 = vpop.f32.mrf.mxu0
    %v1155 = vadd.f32 %v381, %v1154
    %v1156 = vpop.f32.mrf.mxu0
    %1157 = vmatprep.mubr.f32.mxu0 0.0
    %1158 = vmatmul.mubr.f32.gmra.mxu0 %v711
    %v1159 = vpop.f32.mrf.mxu0
    %v1160 = vadd.f32 %v381, %v1159
    %v1161 = vpop.f32.mrf.mxu0
    %1162 = vmatprep.mubr.f32.mxu0 0.0
    %1163 = vmatmul.mubr.f32.gmra.mxu0 %v712
    %v1164 = vpop.f32.mrf.mxu0
    %v1165 = vadd.f32 %v381, %v1164
    %v1166 = vpop.f32.mrf.mxu0
    %1167 = vmatprep.mubr.f32.mxu0 0.0
    %1168 = vmatmul.mubr.f32.gmra.mxu0 %v713
    %v1169 = vpop.f32.mrf.mxu0
    %v1170 = vadd.f32 %v381, %v1169
    %v1171 = vpop.f32.mrf.mxu0
    %1172 = vmatprep.mubr.f32.mxu0 0.0
    %1173 = vmatmul.mubr.f32.gmra.mxu0 %v714
    %v1174 = vpop.f32.mrf.mxu0
    %v1175 = vadd.f32 %v381, %v1174
    %v1176 = vpop.f32.mrf.mxu0
    %1177 = vmatprep.mubr.f32.mxu0 0.0
    %1178 = vmatmul.mubr.f32.gmra.mxu0 %v715
    %v1179 = vpop.f32.mrf.mxu0
    %v1180 = vadd.f32 %v381, %v1179
    %v1181 = vpop.f32.mrf.mxu0
    %1182 = vdwg.mxu0
    %vm1183 = vcmp.ge.f32.partialorder %v783, 0.0
    %vm1184 = vcmp.ge.f32.partialorder %v789, 0.0
    %vm1185 = vcmp.ge.f32.partialorder %v795, 0.0
    %vm1186 = vcmp.ge.f32.partialorder %v801, 0.0
    %vm1187 = vcmp.ge.f32.partialorder %v807, 0.0
    %vm1188 = vcmp.ge.f32.partialorder %v813, 0.0
    %vm1189 = vcmp.ge.f32.partialorder %v819, 0.0
    %vm1190 = vcmp.ge.f32.partialorder %v825, 0.0
    %vm1191 = vcmp.ge.f32.partialorder %v831, 0.0
    %vm1192 = vcmp.ge.f32.partialorder %v837, 0.0
    %vm1193 = vcmp.ge.f32.partialorder %v843, 0.0
    %vm1194 = vcmp.ge.f32.partialorder %v849, 0.0
    %vm1195 = vcmp.ge.f32.partialorder %v855, 0.0
    %vm1196 = vcmp.ge.f32.partialorder %v861, 0.0
    %vm1197 = vcmp.ge.f32.partialorder %v867, 0.0
    %vm1198 = vcmp.ge.f32.partialorder %v873, 0.0
    %v1199 = vmul.f32 %v783, 0.01
    %v1200 = vmul.f32 %v789, 0.01
    %v1201 = vmul.f32 %v795, 0.01
    %v1202 = vmul.f32 %v801, 0.01
    %v1203 = vmul.f32 %v807, 0.01
    %v1204 = vmul.f32 %v813, 0.01
    %v1205 = vmul.f32 %v819, 0.01
    %v1206 = vmul.f32 %v825, 0.01
    %v1207 = vmul.f32 %v831, 0.01
    %v1208 = vmul.f32 %v837, 0.01
    %v1209 = vmul.f32 %v843, 0.01
    %v1210 = vmul.f32 %v849, 0.01
    %v1211 = vmul.f32 %v855, 0.01
    %v1212 = vmul.f32 %v861, 0.01
    %v1213 = vmul.f32 %v867, 0.01
    %v1214 = vmul.f32 %v873, 0.01
    %v1215 = vsel %vm1183, %v783, %v1199
    %v1216 = vsel %vm1184, %v789, %v1200
    %v1217 = vsel %vm1185, %v795, %v1201
    %v1218 = vsel %vm1186, %v801, %v1202
    %v1219 = vsel %vm1187, %v807, %v1203
    %v1220 = vsel %vm1188, %v813, %v1204
    %v1221 = vsel %vm1189, %v819, %v1205
    %v1222 = vsel %vm1190, %v825, %v1206
    %v1223 = vsel %vm1191, %v831, %v1207
    %v1224 = vsel %vm1192, %v837, %v1208
    %v1225 = vsel %vm1193, %v843, %v1209
    %v1226 = vsel %vm1194, %v849, %v1210
    %v1227 = vsel %vm1195, %v855, %v1211
    %v1228 = vsel %vm1196, %v861, %v1212
    %v1229 = vsel %vm1197, %v867, %v1213
    %v1230 = vsel %vm1198, %v873, %v1214
    %v1231 = vpack.c.bf16 %v1216, %v1215
    %v1232 = vpack.c.bf16 %v1218, %v1217
    %v1233 = vpack.c.bf16 %v1220, %v1219
    %v1234 = vpack.c.bf16 %v1222, %v1221
    %v1235 = vpack.c.bf16 %v1224, %v1223
    %v1236 = vpack.c.bf16 %v1226, %v1225
    %v1237 = vpack.c.bf16 %v1228, %v1227
    %v1238 = vpack.c.bf16 %v1230, %v1229
    %v1255 = vunpack.c.l.b16 %v200
    %v1256 = vunpack.c.l.b16 %v201
    %v1257 = vunpack.c.l.b16 %v202
    %v1258 = vunpack.c.l.b16 %v203
    %v1259 = vunpack.c.l.b16 %v204
    %v1260 = vunpack.c.l.b16 %v205
    %v1261 = vunpack.c.l.b16 %v206
    %v1262 = vunpack.c.l.b16 %v207
    %v1263 = vunpack.c.l.b16 %v208
    %v1264 = vunpack.c.l.b16 %v209
    %v1265 = vunpack.c.l.b16 %v210
    %v1266 = vunpack.c.l.b16 %v211
    %v1267 = vunpack.c.l.b16 %v212
    %v1268 = vunpack.c.l.b16 %v213
    %v1269 = vunpack.c.l.b16 %v214
    %v1270 = vunpack.c.l.b16 %v215
    %v1271 = vpack.c.b16 %v1256, %v1255
    %v1272 = vpack.c.b16 %v1258, %v1257
    %v1273 = vpack.c.b16 %v1260, %v1259
    %v1274 = vpack.c.b16 %v1262, %v1261
    %v1275 = vpack.c.b16 %v1264, %v1263
    %v1276 = vpack.c.b16 %v1266, %v1265
    %v1277 = vpack.c.b16 %v1268, %v1267
    %v1278 = vpack.c.b16 %v1270, %v1269
    %1287 = vmatprep.subr.bf16.mxu0 0
    %1288 = vmatpush1.bf16.msra.mxu0 %v1238
    %1289 = vmatprep.subr.bf16.mxu0 0
    %1290 = vmatpush1.bf16.msra.mxu0 %v1237
    %1291 = vmatprep.subr.bf16.mxu0 0
    %1292 = vmatpush1.bf16.msra.mxu0 %v1236
    %1293 = vmatprep.subr.bf16.mxu0 0
    %1294 = vmatpush1.bf16.msra.mxu0 %v1235
    %1295 = vmatprep.subr.bf16.mxu0 0
    %1296 = vmatpush1.bf16.msra.mxu0 %v1234
    %1297 = vmatprep.subr.bf16.mxu0 0
    %1298 = vmatpush1.bf16.msra.mxu0 %v1233
    %1299 = vmatprep.subr.bf16.mxu0 0
    %1300 = vmatpush1.bf16.msra.mxu0 %v1232
    %1301 = vmatprep.subr.bf16.mxu0 0
    %1302 = vmatpush1.bf16.msra.mxu0 %v1231
    %1303 = vmatprep.subr.bf16.mxu0 0
    %1304 = vmatpush2.bf16.msra.mxu0 0
    %1305 = vmatprep.subr.bf16.mxu0 0
    %1306 = vmatpush2.bf16.msra.mxu0 0
    %1307 = vmatprep.subr.bf16.mxu0 0
    %1308 = vmatpush2.bf16.msra.mxu0 0
    %1309 = vmatprep.subr.bf16.mxu0 0
    %1310 = vmatpush2.bf16.msra.mxu0 0
    %1311 = vmatprep.subr.bf16.mxu0 0
    %1312 = vmatpush2.bf16.msra.mxu0 0
    %1313 = vmatprep.subr.bf16.mxu0 0
    %1314 = vmatpush2.bf16.msra.mxu0 0
    %1315 = vmatprep.subr.bf16.mxu0 0
    %1316 = vmatpush2.bf16.msra.mxu0 0
    %1317 = vmatprep.subr.bf16.mxu0 0
    %1318 = vmatpush2.bf16.msra.mxu0 0
    %1319 = vmatprep.mubr.bf16.mxu0 0
    %1320 = vmatmul.mubr.bf16.gmra.mxu0 %v1271
    %v1321 = vpop.f32.mrf.mxu0
    %v1322 = vadd.f32 0.0, %v1321
    %v1323 = vpop.f32.mrf.mxu0
    %v1324 = vpop.f32.mrf.mxu0
    %v1325 = vadd.f32 0.0, %v1324
    %v1326 = vpop.f32.mrf.mxu0
    %1327 = vmatprep.mubr.bf16.mxu0 0
    %1328 = vmatmul.mubr.bf16.gmra.mxu0 %v1272
    %v1329 = vpop.f32.mrf.mxu0
    %v1330 = vadd.f32 0.0, %v1329
    %v1331 = vpop.f32.mrf.mxu0
    %v1332 = vpop.f32.mrf.mxu0
    %v1333 = vadd.f32 0.0, %v1332
    %v1334 = vpop.f32.mrf.mxu0
    %1335 = vmatprep.mubr.bf16.mxu0 0
    %1336 = vmatmul.mubr.bf16.gmra.mxu0 %v1273
    %v1337 = vpop.f32.mrf.mxu0
    %v1338 = vadd.f32 0.0, %v1337
    %v1339 = vpop.f32.mrf.mxu0
    %v1340 = vpop.f32.mrf.mxu0
    %v1341 = vadd.f32 0.0, %v1340
    %v1342 = vpop.f32.mrf.mxu0
    %1343 = vmatprep.mubr.bf16.mxu0 0
    %1344 = vmatmul.mubr.bf16.gmra.mxu0 %v1274
    %v1345 = vpop.f32.mrf.mxu0
    %v1346 = vadd.f32 0.0, %v1345
    %v1347 = vpop.f32.mrf.mxu0
    %v1348 = vpop.f32.mrf.mxu0
    %v1349 = vadd.f32 0.0, %v1348
    %v1350 = vpop.f32.mrf.mxu0
    %1351 = vmatprep.mubr.bf16.mxu0 0
    %1352 = vmatmul.mubr.bf16.gmra.mxu0 %v1275
    %v1353 = vpop.f32.mrf.mxu0
    %v1354 = vadd.f32 0.0, %v1353
    %v1355 = vpop.f32.mrf.mxu0
    %v1356 = vpop.f32.mrf.mxu0
    %v1357 = vadd.f32 0.0, %v1356
    %v1358 = vpop.f32.mrf.mxu0
    %1359 = vmatprep.mubr.bf16.mxu0 0
    %1360 = vmatmul.mubr.bf16.gmra.mxu0 %v1276
    %v1361 = vpop.f32.mrf.mxu0
    %v1362 = vadd.f32 0.0, %v1361
    %v1363 = vpop.f32.mrf.mxu0
    %v1364 = vpop.f32.mrf.mxu0
    %v1365 = vadd.f32 0.0, %v1364
    %v1366 = vpop.f32.mrf.mxu0
    %1367 = vmatprep.mubr.bf16.mxu0 0
    %1368 = vmatmul.mubr.bf16.gmra.mxu0 %v1277
    %v1369 = vpop.f32.mrf.mxu0
    %v1370 = vadd.f32 0.0, %v1369
    %v1371 = vpop.f32.mrf.mxu0
    %v1372 = vpop.f32.mrf.mxu0
    %v1373 = vadd.f32 0.0, %v1372
    %v1374 = vpop.f32.mrf.mxu0
    %1375 = vmatprep.mubr.bf16.mxu0 0
    %1376 = vmatmul.mubr.bf16.gmra.mxu0 %v1278
    %v1377 = vpop.f32.mrf.mxu0
    %v1378 = vadd.f32 0.0, %v1377
    %v1379 = vpop.f32.mrf.mxu0
    %v1380 = vpop.f32.mrf.mxu0
    %v1381 = vadd.f32 0.0, %v1380
    %v1382 = vpop.f32.mrf.mxu0
    %1383 = vdwg.mxu0
    %1384 = vmatprep.subr.mxu0 0.0
    %1385 = vmatpush1.msra.mxu0 %v311
    %1386 = vmatprep.subr.mxu0 0.0
    %1387 = vmatpush1.msra.mxu0 %v310
    %1388 = vmatprep.subr.mxu0 0.0
    %1389 = vmatpush1.msra.mxu0 %v309
    %1390 = vmatprep.subr.mxu0 0.0
    %1391 = vmatpush1.msra.mxu0 %v308
    %1392 = vmatprep.subr.mxu0 0.0
    %1393 = vmatpush1.msra.mxu0 %v307
    %1394 = vmatprep.subr.mxu0 0.0
    %1395 = vmatpush1.msra.mxu0 %v306
    %1396 = vmatprep.subr.mxu0 0.0
    %1397 = vmatpush1.msra.mxu0 %v305
    %1398 = vmatprep.subr.mxu0 0.0
    %1399 = vmatpush1.msra.mxu0 %v304
    %1400 = vmatprep.subr.mxu0 0.0
    %1401 = vmatpush1.msra.mxu0 %v303
    %1402 = vmatprep.subr.mxu0 0.0
    %1403 = vmatpush1.msra.mxu0 %v302
    %1404 = vmatprep.subr.mxu0 0.0
    %1405 = vmatpush1.msra.mxu0 %v301
    %1406 = vmatprep.subr.mxu0 0.0
    %1407 = vmatpush1.msra.mxu0 %v300
    %1408 = vmatprep.subr.mxu0 0.0
    %1409 = vmatpush1.msra.mxu0 %v299
    %1410 = vmatprep.subr.mxu0 0.0
    %1411 = vmatpush1.msra.mxu0 %v298
    %1412 = vmatprep.subr.mxu0 0.0
    %1413 = vmatpush1.msra.mxu0 %v297
    %1414 = vmatprep.subr.mxu0 0.0
    %1415 = vmatpush1.msra.mxu0 %v296
    %1416 = vmatprep.subr.mxu0 0.0
    %1417 = vmatpush2.msra.mxu0 0.0
    %1418 = vmatprep.subr.mxu0 0.0
    %1419 = vmatpush2.msra.mxu0 0.0
    %1420 = vmatprep.subr.mxu0 0.0
    %1421 = vmatpush2.msra.mxu0 0.0
    %1422 = vmatprep.subr.mxu0 0.0
    %1423 = vmatpush2.msra.mxu0 0.0
    %1424 = vmatprep.subr.mxu0 0.0
    %1425 = vmatpush2.msra.mxu0 0.0
    %1426 = vmatprep.subr.mxu0 0.0
    %1427 = vmatpush2.msra.mxu0 0.0
    %1428 = vmatprep.subr.mxu0 0.0
    %1429 = vmatpush2.msra.mxu0 0.0
    %1430 = vmatprep.subr.mxu0 0.0
    %1431 = vmatpush2.msra.mxu0 0.0
    %1432 = vmatprep.subr.mxu0 0.0
    %1433 = vmatpush2.msra.mxu0 0.0
    %1434 = vmatprep.subr.mxu0 0.0
    %1435 = vmatpush2.msra.mxu0 0.0
    %1436 = vmatprep.subr.mxu0 0.0
    %1437 = vmatpush2.msra.mxu0 0.0
    %1438 = vmatprep.subr.mxu0 0.0
    %1439 = vmatpush2.msra.mxu0 0.0
    %1440 = vmatprep.subr.mxu0 0.0
    %1441 = vmatpush2.msra.mxu0 0.0
    %1442 = vmatprep.subr.mxu0 0.0
    %1443 = vmatpush2.msra.mxu0 0.0
    %1444 = vmatprep.subr.mxu0 0.0
    %1445 = vmatpush2.msra.mxu0 0.0
    %1446 = vmatprep.subr.mxu0 0.0
    %1447 = vmatpush2.msra.mxu0 0.0
    %1448 = vmatprep.mubr.f32.mxu0 0.0
    %1449 = vmatmul.mubr.f32.gmra.mxu0 %v1322
    %v1450 = vpop.f32.mrf.mxu0
    %v1451 = vadd.f32 %v785, %v1450
    %v1452 = vpop.f32.mrf.mxu0
    %1453 = vmatprep.mubr.f32.mxu0 0.0
    %1454 = vmatmul.mubr.f32.gmra.mxu0 %v1325
    %v1455 = vpop.f32.mrf.mxu0
    %v1456 = vadd.f32 %v791, %v1455
    %v1457 = vpop.f32.mrf.mxu0
    %1458 = vmatprep.mubr.f32.mxu0 0.0
    %1459 = vmatmul.mubr.f32.gmra.mxu0 %v1330
    %v1460 = vpop.f32.mrf.mxu0
    %v1461 = vadd.f32 %v797, %v1460
    %v1462 = vpop.f32.mrf.mxu0
    %1463 = vmatprep.mubr.f32.mxu0 0.0
    %1464 = vmatmul.mubr.f32.gmra.mxu0 %v1333
    %v1465 = vpop.f32.mrf.mxu0
    %v1466 = vadd.f32 %v803, %v1465
    %v1467 = vpop.f32.mrf.mxu0
    %1468 = vmatprep.mubr.f32.mxu0 0.0
    %1469 = vmatmul.mubr.f32.gmra.mxu0 %v1338
    %v1470 = vpop.f32.mrf.mxu0
    %v1471 = vadd.f32 %v809, %v1470
    %v1472 = vpop.f32.mrf.mxu0
    %1473 = vmatprep.mubr.f32.mxu0 0.0
    %1474 = vmatmul.mubr.f32.gmra.mxu0 %v1341
    %v1475 = vpop.f32.mrf.mxu0
    %v1476 = vadd.f32 %v815, %v1475
    %v1477 = vpop.f32.mrf.mxu0
    %1478 = vmatprep.mubr.f32.mxu0 0.0
    %1479 = vmatmul.mubr.f32.gmra.mxu0 %v1346
    %v1480 = vpop.f32.mrf.mxu0
    %v1481 = vadd.f32 %v821, %v1480
    %v1482 = vpop.f32.mrf.mxu0
    %1483 = vmatprep.mubr.f32.mxu0 0.0
    %1484 = vmatmul.mubr.f32.gmra.mxu0 %v1349
    %v1485 = vpop.f32.mrf.mxu0
    %v1486 = vadd.f32 %v827, %v1485
    %v1487 = vpop.f32.mrf.mxu0
    %1488 = vmatprep.mubr.f32.mxu0 0.0
    %1489 = vmatmul.mubr.f32.gmra.mxu0 %v1354
    %v1490 = vpop.f32.mrf.mxu0
    %v1491 = vadd.f32 %v833, %v1490
    %v1492 = vpop.f32.mrf.mxu0
    %1493 = vmatprep.mubr.f32.mxu0 0.0
    %1494 = vmatmul.mubr.f32.gmra.mxu0 %v1357
    %v1495 = vpop.f32.mrf.mxu0
    %v1496 = vadd.f32 %v839, %v1495
    %v1497 = vpop.f32.mrf.mxu0
    %1498 = vmatprep.mubr.f32.mxu0 0.0
    %1499 = vmatmul.mubr.f32.gmra.mxu0 %v1362
    %v1500 = vpop.f32.mrf.mxu0
    %v1501 = vadd.f32 %v845, %v1500
    %v1502 = vpop.f32.mrf.mxu0
    %1503 = vmatprep.mubr.f32.mxu0 0.0
    %1504 = vmatmul.mubr.f32.gmra.mxu0 %v1365
    %v1505 = vpop.f32.mrf.mxu0
    %v1506 = vadd.f32 %v851, %v1505
    %v1507 = vpop.f32.mrf.mxu0
    %1508 = vmatprep.mubr.f32.mxu0 0.0
    %1509 = vmatmul.mubr.f32.gmra.mxu0 %v1370
    %v1510 = vpop.f32.mrf.mxu0
    %v1511 = vadd.f32 %v857, %v1510
    %v1512 = vpop.f32.mrf.mxu0
    %1513 = vmatprep.mubr.f32.mxu0 0.0
    %1514 = vmatmul.mubr.f32.gmra.mxu0 %v1373
    %v1515 = vpop.f32.mrf.mxu0
    %v1516 = vadd.f32 %v863, %v1515
    %v1517 = vpop.f32.mrf.mxu0
    %1518 = vmatprep.mubr.f32.mxu0 0.0
    %1519 = vmatmul.mubr.f32.gmra.mxu0 %v1378
    %v1520 = vpop.f32.mrf.mxu0
    %v1521 = vadd.f32 %v869, %v1520
    %v1522 = vpop.f32.mrf.mxu0
    %1523 = vmatprep.mubr.f32.mxu0 0.0
    %1524 = vmatmul.mubr.f32.gmra.mxu0 %v1381
    %v1525 = vpop.f32.mrf.mxu0
    %v1526 = vadd.f32 %v875, %v1525
    %v1527 = vpop.f32.mrf.mxu0
    %1528 = vdwg.mxu0
    %vm1529 = vcmp.ge.f32.partialorder %v1451, 0.0
    %vm1530 = vcmp.ge.f32.partialorder %v1456, 0.0
    %vm1531 = vcmp.ge.f32.partialorder %v1461, 0.0
    %vm1532 = vcmp.ge.f32.partialorder %v1466, 0.0
    %vm1533 = vcmp.ge.f32.partialorder %v1471, 0.0
    %vm1534 = vcmp.ge.f32.partialorder %v1476, 0.0
    %vm1535 = vcmp.ge.f32.partialorder %v1481, 0.0
    %vm1536 = vcmp.ge.f32.partialorder %v1486, 0.0
    %vm1537 = vcmp.ge.f32.partialorder %v1491, 0.0
    %vm1538 = vcmp.ge.f32.partialorder %v1496, 0.0
    %vm1539 = vcmp.ge.f32.partialorder %v1501, 0.0
    %vm1540 = vcmp.ge.f32.partialorder %v1506, 0.0
    %vm1541 = vcmp.ge.f32.partialorder %v1511, 0.0
    %vm1542 = vcmp.ge.f32.partialorder %v1516, 0.0
    %vm1543 = vcmp.ge.f32.partialorder %v1521, 0.0
    %vm1544 = vcmp.ge.f32.partialorder %v1526, 0.0
    %v1545 = vmul.f32 %v1451, 0.01
    %v1546 = vmul.f32 %v1456, 0.01
    %v1547 = vmul.f32 %v1461, 0.01
    %v1548 = vmul.f32 %v1466, 0.01
    %v1549 = vmul.f32 %v1471, 0.01
    %v1550 = vmul.f32 %v1476, 0.01
    %v1551 = vmul.f32 %v1481, 0.01
    %v1552 = vmul.f32 %v1486, 0.01
    %v1553 = vmul.f32 %v1491, 0.01
    %v1554 = vmul.f32 %v1496, 0.01
    %v1555 = vmul.f32 %v1501, 0.01
    %v1556 = vmul.f32 %v1506, 0.01
    %v1557 = vmul.f32 %v1511, 0.01
    %v1558 = vmul.f32 %v1516, 0.01
    %v1559 = vmul.f32 %v1521, 0.01
    %v1560 = vmul.f32 %v1526, 0.01
    %v1561 = vsel %vm1529, %v1451, %v1545
    %v1562 = vsel %vm1530, %v1456, %v1546
    %v1563 = vsel %vm1531, %v1461, %v1547
    %v1564 = vsel %vm1532, %v1466, %v1548
    %v1565 = vsel %vm1533, %v1471, %v1549
    %v1566 = vsel %vm1534, %v1476, %v1550
    %v1567 = vsel %vm1535, %v1481, %v1551
    %v1568 = vsel %vm1536, %v1486, %v1552
    %v1569 = vsel %vm1537, %v1491, %v1553
    %v1570 = vsel %vm1538, %v1496, %v1554
    %v1571 = vsel %vm1539, %v1501, %v1555
    %v1572 = vsel %vm1540, %v1506, %v1556
    %v1573 = vsel %vm1541, %v1511, %v1557
    %v1574 = vsel %vm1542, %v1516, %v1558
    %v1575 = vsel %vm1543, %v1521, %v1559
    %v1576 = vsel %vm1544, %v1526, %v1560
    %1577 = vmatprep.subr.mxu0 %v358
    %1578 = vmatpush1.msra.mxu0 %v357
    %1579 = vmatprep.subr.mxu0 %v355
    %1580 = vmatpush1.msra.mxu0 %v354
    %1581 = vmatprep.subr.mxu0 %v352
    %1582 = vmatpush1.msra.mxu0 %v351
    %1583 = vmatprep.subr.mxu0 %v349
    %1584 = vmatpush1.msra.mxu0 %v348
    %1585 = vmatprep.subr.mxu0 %v346
    %1586 = vmatpush1.msra.mxu0 %v345
    %1587 = vmatprep.subr.mxu0 %v343
    %1588 = vmatpush1.msra.mxu0 %v342
    %1589 = vmatprep.subr.mxu0 %v340
    %1590 = vmatpush1.msra.mxu0 %v339
    %1591 = vmatprep.subr.mxu0 %v337
    %1592 = vmatpush1.msra.mxu0 %v336
    %1593 = vmatprep.subr.mxu0 %v334
    %1594 = vmatpush1.msra.mxu0 %v333
    %1595 = vmatprep.subr.mxu0 %v331
    %1596 = vmatpush1.msra.mxu0 %v330
    %1597 = vmatprep.subr.mxu0 %v328
    %1598 = vmatpush1.msra.mxu0 %v327
    %1599 = vmatprep.subr.mxu0 %v325
    %1600 = vmatpush1.msra.mxu0 %v324
    %1601 = vmatprep.subr.mxu0 %v322
    %1602 = vmatpush1.msra.mxu0 %v321
    %1603 = vmatprep.subr.mxu0 %v319
    %1604 = vmatpush1.msra.mxu0 %v318
    %1605 = vmatprep.subr.mxu0 %v316
    %1606 = vmatpush1.msra.mxu0 %v315
    %1607 = vmatprep.subr.mxu0 %v313
    %1608 = vmatpush1.msra.mxu0 %v312
    %1609 = vmatprep.subr.mxu0 0.0
    %1610 = vmatpush2.msra.mxu0 0.0
    %1611 = vmatprep.subr.mxu0 0.0
    %1612 = vmatpush2.msra.mxu0 0.0
    %1613 = vmatprep.subr.mxu0 0.0
    %1614 = vmatpush2.msra.mxu0 0.0
    %1615 = vmatprep.subr.mxu0 0.0
    %1616 = vmatpush2.msra.mxu0 0.0
    %1617 = vmatprep.subr.mxu0 0.0
    %1618 = vmatpush2.msra.mxu0 0.0
    %1619 = vmatprep.subr.mxu0 0.0
    %1620 = vmatpush2.msra.mxu0 0.0
    %1621 = vmatprep.subr.mxu0 0.0
    %1622 = vmatpush2.msra.mxu0 0.0
    %1623 = vmatprep.subr.mxu0 0.0
    %1624 = vmatpush2.msra.mxu0 0.0
    %1625 = vmatprep.subr.mxu0 0.0
    %1626 = vmatpush2.msra.mxu0 0.0
    %1627 = vmatprep.subr.mxu0 0.0
    %1628 = vmatpush2.msra.mxu0 0.0
    %1629 = vmatprep.subr.mxu0 0.0
    %1630 = vmatpush2.msra.mxu0 0.0
    %1631 = vmatprep.subr.mxu0 0.0
    %1632 = vmatpush2.msra.mxu0 0.0
    %1633 = vmatprep.subr.mxu0 0.0
    %1634 = vmatpush2.msra.mxu0 0.0
    %1635 = vmatprep.subr.mxu0 0.0
    %1636 = vmatpush2.msra.mxu0 0.0
    %1637 = vmatprep.subr.mxu0 0.0
    %1638 = vmatpush2.msra.mxu0 0.0
    %1639 = vmatprep.subr.mxu0 0.0
    %1640 = vmatpush2.msra.mxu0 0.0
    %1641 = vmatprep.mubr.f32.mxu0 0.0
    %1642 = vmatmul.mubr.f32.gmra.mxu0 %v1561
    %v1643 = vpop.f32.mrf.mxu0
    %v1644 = vadd.f32 %v392, %v1643
    %v1645 = vpop.f32.mrf.mxu0
    %v1646 = vadd.f32 %v396, %v1645
    %1647 = vmatprep.mubr.f32.mxu0 0.0
    %1648 = vmatmul.mubr.f32.gmra.mxu0 %v1562
    %v1649 = vpop.f32.mrf.mxu0
    %v1650 = vadd.f32 %v392, %v1649
    %v1651 = vpop.f32.mrf.mxu0
    %v1652 = vadd.f32 %v396, %v1651
    %1653 = vmatprep.mubr.f32.mxu0 0.0
    %1654 = vmatmul.mubr.f32.gmra.mxu0 %v1563
    %v1655 = vpop.f32.mrf.mxu0
    %v1656 = vadd.f32 %v392, %v1655
    %v1657 = vpop.f32.mrf.mxu0
    %v1658 = vadd.f32 %v396, %v1657
    %1659 = vmatprep.mubr.f32.mxu0 0.0
    %1660 = vmatmul.mubr.f32.gmra.mxu0 %v1564
    %v1661 = vpop.f32.mrf.mxu0
    %v1662 = vadd.f32 %v392, %v1661
    %v1663 = vpop.f32.mrf.mxu0
    %v1664 = vadd.f32 %v396, %v1663
    %1665 = vmatprep.mubr.f32.mxu0 0.0
    %1666 = vmatmul.mubr.f32.gmra.mxu0 %v1565
    %v1667 = vpop.f32.mrf.mxu0
    %v1668 = vadd.f32 %v392, %v1667
    %v1669 = vpop.f32.mrf.mxu0
    %v1670 = vadd.f32 %v396, %v1669
    %1671 = vmatprep.mubr.f32.mxu0 0.0
    %1672 = vmatmul.mubr.f32.gmra.mxu0 %v1566
    %v1673 = vpop.f32.mrf.mxu0
    %v1674 = vadd.f32 %v392, %v1673
    %v1675 = vpop.f32.mrf.mxu0
    %v1676 = vadd.f32 %v396, %v1675
    %1677 = vmatprep.mubr.f32.mxu0 0.0
    %1678 = vmatmul.mubr.f32.gmra.mxu0 %v1567
    %v1679 = vpop.f32.mrf.mxu0
    %v1680 = vadd.f32 %v392, %v1679
    %v1681 = vpop.f32.mrf.mxu0
    %v1682 = vadd.f32 %v396, %v1681
    %1683 = vmatprep.mubr.f32.mxu0 0.0
    %1684 = vmatmul.mubr.f32.gmra.mxu0 %v1568
    %v1685 = vpop.f32.mrf.mxu0
    %v1686 = vadd.f32 %v392, %v1685
    %v1687 = vpop.f32.mrf.mxu0
    %v1688 = vadd.f32 %v396, %v1687
    %1689 = vmatprep.mubr.f32.mxu0 0.0
    %1690 = vmatmul.mubr.f32.gmra.mxu0 %v1569
    %v1691 = vpop.f32.mrf.mxu0
    %v1692 = vadd.f32 %v392, %v1691
    %v1693 = vpop.f32.mrf.mxu0
    %v1694 = vadd.f32 %v396, %v1693
    %1695 = vmatprep.mubr.f32.mxu0 0.0
    %1696 = vmatmul.mubr.f32.gmra.mxu0 %v1570
    %v1697 = vpop.f32.mrf.mxu0
    %v1698 = vadd.f32 %v392, %v1697
    %v1699 = vpop.f32.mrf.mxu0
    %v1700 = vadd.f32 %v396, %v1699
    %1701 = vmatprep.mubr.f32.mxu0 0.0
    %1702 = vmatmul.mubr.f32.gmra.mxu0 %v1571
    %v1703 = vpop.f32.mrf.mxu0
    %v1704 = vadd.f32 %v392, %v1703
    %v1705 = vpop.f32.mrf.mxu0
    %v1706 = vadd.f32 %v396, %v1705
    %1707 = vmatprep.mubr.f32.mxu0 0.0
    %1708 = vmatmul.mubr.f32.gmra.mxu0 %v1572
    %v1709 = vpop.f32.mrf.mxu0
    %v1710 = vadd.f32 %v392, %v1709
    %v1711 = vpop.f32.mrf.mxu0
    %v1712 = vadd.f32 %v396, %v1711
    %1713 = vmatprep.mubr.f32.mxu0 0.0
    %1714 = vmatmul.mubr.f32.gmra.mxu0 %v1573
    %v1715 = vpop.f32.mrf.mxu0
    %v1716 = vadd.f32 %v392, %v1715
    %v1717 = vpop.f32.mrf.mxu0
    %v1718 = vadd.f32 %v396, %v1717
    %1719 = vmatprep.mubr.f32.mxu0 0.0
    %1720 = vmatmul.mubr.f32.gmra.mxu0 %v1574
    %v1721 = vpop.f32.mrf.mxu0
    %v1722 = vadd.f32 %v392, %v1721
    %v1723 = vpop.f32.mrf.mxu0
    %v1724 = vadd.f32 %v396, %v1723
    %1725 = vmatprep.mubr.f32.mxu0 0.0
    %1726 = vmatmul.mubr.f32.gmra.mxu0 %v1575
    %v1727 = vpop.f32.mrf.mxu0
    %v1728 = vadd.f32 %v392, %v1727
    %v1729 = vpop.f32.mrf.mxu0
    %v1730 = vadd.f32 %v396, %v1729
    %1731 = vmatprep.mubr.f32.mxu0 0.0
    %1732 = vmatmul.mubr.f32.gmra.mxu0 %v1576
    %v1733 = vpop.f32.mrf.mxu0
    %v1734 = vadd.f32 %v392, %v1733
    %v1735 = vpop.f32.mrf.mxu0
    %v1736 = vadd.f32 %v396, %v1735
    %1737 = vdwg.mxu0
    %1738 = vmatprep.subr.mxu0 0.0
    %1739 = vmatpush1.msra.mxu0 %v359
    %1740 = vmatprep.subr.mxu0 0.0
    %1741 = vmatpush1.msra.mxu0 %v356
    %1742 = vmatprep.subr.mxu0 0.0
    %1743 = vmatpush1.msra.mxu0 %v353
    %1744 = vmatprep.subr.mxu0 0.0
    %1745 = vmatpush1.msra.mxu0 %v350
    %1746 = vmatprep.subr.mxu0 0.0
    %1747 = vmatpush1.msra.mxu0 %v347
    %1748 = vmatprep.subr.mxu0 0.0
    %1749 = vmatpush1.msra.mxu0 %v344
    %1750 = vmatprep.subr.mxu0 0.0
    %1751 = vmatpush1.msra.mxu0 %v341
    %1752 = vmatprep.subr.mxu0 0.0
    %1753 = vmatpush1.msra.mxu0 %v338
    %1754 = vmatprep.subr.mxu0 0.0
    %1755 = vmatpush1.msra.mxu0 %v335
    %1756 = vmatprep.subr.mxu0 0.0
    %1757 = vmatpush1.msra.mxu0 %v332
    %1758 = vmatprep.subr.mxu0 0.0
    %1759 = vmatpush1.msra.mxu0 %v329
    %1760 = vmatprep.subr.mxu0 0.0
    %1761 = vmatpush1.msra.mxu0 %v326
    %1762 = vmatprep.subr.mxu0 0.0
    %1763 = vmatpush1.msra.mxu0 %v323
    %1764 = vmatprep.subr.mxu0 0.0
    %1765 = vmatpush1.msra.mxu0 %v320
    %1766 = vmatprep.subr.mxu0 0.0
    %1767 = vmatpush1.msra.mxu0 %v317
    %1768 = vmatprep.subr.mxu0 0.0
    %1769 = vmatpush1.msra.mxu0 %v314
    %1770 = vmatprep.subr.mxu0 0.0
    %1771 = vmatpush2.msra.mxu0 0.0
    %1772 = vmatprep.subr.mxu0 0.0
    %1773 = vmatpush2.msra.mxu0 0.0
    %1774 = vmatprep.subr.mxu0 0.0
    %1775 = vmatpush2.msra.mxu0 0.0
    %1776 = vmatprep.subr.mxu0 0.0
    %1777 = vmatpush2.msra.mxu0 0.0
    %1778 = vmatprep.subr.mxu0 0.0
    %1779 = vmatpush2.msra.mxu0 0.0
    %1780 = vmatprep.subr.mxu0 0.0
    %1781 = vmatpush2.msra.mxu0 0.0
    %1782 = vmatprep.subr.mxu0 0.0
    %1783 = vmatpush2.msra.mxu0 0.0
    %1784 = vmatprep.subr.mxu0 0.0
    %1785 = vmatpush2.msra.mxu0 0.0
    %1786 = vmatprep.subr.mxu0 0.0
    %1787 = vmatpush2.msra.mxu0 0.0
    %1788 = vmatprep.subr.mxu0 0.0
    %1789 = vmatpush2.msra.mxu0 0.0
    %1790 = vmatprep.subr.mxu0 0.0
    %1791 = vmatpush2.msra.mxu0 0.0
    %1792 = vmatprep.subr.mxu0 0.0
    %1793 = vmatpush2.msra.mxu0 0.0
    %1794 = vmatprep.subr.mxu0 0.0
    %1795 = vmatpush2.msra.mxu0 0.0
    %1796 = vmatprep.subr.mxu0 0.0
    %1797 = vmatpush2.msra.mxu0 0.0
    %1798 = vmatprep.subr.mxu0 0.0
    %1799 = vmatpush2.msra.mxu0 0.0
    %1800 = vmatprep.subr.mxu0 0.0
    %1801 = vmatpush2.msra.mxu0 0.0
    %1802 = vmatprep.mubr.f32.mxu0 0.0
    %1803 = vmatmul.mubr.f32.gmra.mxu0 %v1561
    %v1804 = vpop.f32.mrf.mxu0
    %v1805 = vadd.f32 %v400, %v1804
    %v1806 = vpop.f32.mrf.mxu0
    %1807 = vmatprep.mubr.f32.mxu0 0.0
    %1808 = vmatmul.mubr.f32.gmra.mxu0 %v1562
    %v1809 = vpop.f32.mrf.mxu0
    %v1810 = vadd.f32 %v400, %v1809
    %v1811 = vpop.f32.mrf.mxu0
    %1812 = vmatprep.mubr.f32.mxu0 0.0
    %1813 = vmatmul.mubr.f32.gmra.mxu0 %v1563
    %v1814 = vpop.f32.mrf.mxu0
    %v1815 = vadd.f32 %v400, %v1814
    %v1816 = vpop.f32.mrf.mxu0
    %1817 = vmatprep.mubr.f32.mxu0 0.0
    %1818 = vmatmul.mubr.f32.gmra.mxu0 %v1564
    %v1819 = vpop.f32.mrf.mxu0
    %v1820 = vadd.f32 %v400, %v1819
    %v1821 = vpop.f32.mrf.mxu0
    %1822 = vmatprep.mubr.f32.mxu0 0.0
    %1823 = vmatmul.mubr.f32.gmra.mxu0 %v1565
    %v1824 = vpop.f32.mrf.mxu0
    %v1825 = vadd.f32 %v400, %v1824
    %v1826 = vpop.f32.mrf.mxu0
    %1827 = vmatprep.mubr.f32.mxu0 0.0
    %1828 = vmatmul.mubr.f32.gmra.mxu0 %v1566
    %v1829 = vpop.f32.mrf.mxu0
    %v1830 = vadd.f32 %v400, %v1829
    %v1831 = vpop.f32.mrf.mxu0
    %1832 = vmatprep.mubr.f32.mxu0 0.0
    %1833 = vmatmul.mubr.f32.gmra.mxu0 %v1567
    %v1834 = vpop.f32.mrf.mxu0
    %v1835 = vadd.f32 %v400, %v1834
    %v1836 = vpop.f32.mrf.mxu0
    %1837 = vmatprep.mubr.f32.mxu0 0.0
    %1838 = vmatmul.mubr.f32.gmra.mxu0 %v1568
    %v1839 = vpop.f32.mrf.mxu0
    %v1840 = vadd.f32 %v400, %v1839
    %v1841 = vpop.f32.mrf.mxu0
    %1842 = vmatprep.mubr.f32.mxu0 0.0
    %1843 = vmatmul.mubr.f32.gmra.mxu0 %v1569
    %v1844 = vpop.f32.mrf.mxu0
    %v1845 = vadd.f32 %v400, %v1844
    %v1846 = vpop.f32.mrf.mxu0
    %1847 = vmatprep.mubr.f32.mxu0 0.0
    %1848 = vmatmul.mubr.f32.gmra.mxu0 %v1570
    %v1849 = vpop.f32.mrf.mxu0
    %v1850 = vadd.f32 %v400, %v1849
    %v1851 = vpop.f32.mrf.mxu0
    %1852 = vmatprep.mubr.f32.mxu0 0.0
    %1853 = vmatmul.mubr.f32.gmra.mxu0 %v1571
    %v1854 = vpop.f32.mrf.mxu0
    %v1855 = vadd.f32 %v400, %v1854
    %v1856 = vpop.f32.mrf.mxu0
    %1857 = vmatprep.mubr.f32.mxu0 0.0
    %1858 = vmatmul.mubr.f32.gmra.mxu0 %v1572
    %v1859 = vpop.f32.mrf.mxu0
    %v1860 = vadd.f32 %v400, %v1859
    %v1861 = vpop.f32.mrf.mxu0
    %1862 = vmatprep.mubr.f32.mxu0 0.0
    %1863 = vmatmul.mubr.f32.gmra.mxu0 %v1573
    %v1864 = vpop.f32.mrf.mxu0
    %v1865 = vadd.f32 %v400, %v1864
    %v1866 = vpop.f32.mrf.mxu0
    %1867 = vmatprep.mubr.f32.mxu0 0.0
    %1868 = vmatmul.mubr.f32.gmra.mxu0 %v1574
    %v1869 = vpop.f32.mrf.mxu0
    %v1870 = vadd.f32 %v400, %v1869
    %v1871 = vpop.f32.mrf.mxu0
    %1872 = vmatprep.mubr.f32.mxu0 0.0
    %1873 = vmatmul.mubr.f32.gmra.mxu0 %v1575
    %v1874 = vpop.f32.mrf.mxu0
    %v1875 = vadd.f32 %v400, %v1874
    %v1876 = vpop.f32.mrf.mxu0
    %1877 = vmatprep.mubr.f32.mxu0 0.0
    %1878 = vmatmul.mubr.f32.gmra.mxu0 %v1576
    %v1879 = vpop.f32.mrf.mxu0
    %v1880 = vadd.f32 %v400, %v1879
    %v1881 = vpop.f32.mrf.mxu0
    %1882 = vdwg.mxu0
    %v1883 = vadd.f32 %v1644, %v944
    %v1884 = vadd.f32 %v1650, %v950
    %v1885 = vadd.f32 %v1656, %v956
    %v1886 = vadd.f32 %v1662, %v962
    %v1887 = vadd.f32 %v1668, %v968
    %v1888 = vadd.f32 %v1674, %v974
    %v1889 = vadd.f32 %v1680, %v980
    %v1890 = vadd.f32 %v1686, %v986
    %v1891 = vadd.f32 %v1692, %v992
    %v1892 = vadd.f32 %v1698, %v998
    %v1893 = vadd.f32 %v1704, %v1004
    %v1894 = vadd.f32 %v1710, %v1010
    %v1895 = vadd.f32 %v1716, %v1016
    %v1896 = vadd.f32 %v1722, %v1022
    %v1897 = vadd.f32 %v1728, %v1028
    %v1898 = vadd.f32 %v1734, %v1034
    %v1899 = vxor.u32 %v1883, 2147483648
    %v1900 = vxor.u32 %v1884, 2147483648
    %v1901 = vxor.u32 %v1885, 2147483648
    %v1902 = vxor.u32 %v1886, 2147483648
    %v1903 = vxor.u32 %v1887, 2147483648
    %v1904 = vxor.u32 %v1888, 2147483648
    %v1905 = vxor.u32 %v1889, 2147483648
    %v1906 = vxor.u32 %v1890, 2147483648
    %v1907 = vxor.u32 %v1891, 2147483648
    %v1908 = vxor.u32 %v1892, 2147483648
    %v1909 = vxor.u32 %v1893, 2147483648
    %v1910 = vxor.u32 %v1894, 2147483648
    %v1911 = vxor.u32 %v1895, 2147483648
    %v1912 = vxor.u32 %v1896, 2147483648
    %v1913 = vxor.u32 %v1897, 2147483648
    %v1914 = vxor.u32 %v1898, 2147483648
    %v1915 = vmul.f32 %v1899, 1.442695
    %v1916 = vpow.pop %v1915
    %v1917 = vmul.f32 %v1900, 1.442695
    %v1918 = vpow.pop %v1917
    %v1919 = vmul.f32 %v1901, 1.442695
    %v1920 = vpow.pop %v1919
    %v1921 = vmul.f32 %v1902, 1.442695
    %v1922 = vpow.pop %v1921
    %v1923 = vmul.f32 %v1903, 1.442695
    %v1924 = vpow.pop %v1923
    %v1925 = vmul.f32 %v1904, 1.442695
    %v1926 = vpow.pop %v1925
    %v1927 = vmul.f32 %v1905, 1.442695
    %v1928 = vpow.pop %v1927
    %v1929 = vmul.f32 %v1906, 1.442695
    %v1930 = vpow.pop %v1929
    %v1931 = vmul.f32 %v1907, 1.442695
    %v1932 = vpow.pop %v1931
    %v1933 = vmul.f32 %v1908, 1.442695
    %v1934 = vpow.pop %v1933
    %v1935 = vmul.f32 %v1909, 1.442695
    %v1936 = vpow.pop %v1935
    %v1937 = vmul.f32 %v1910, 1.442695
    %v1938 = vpow.pop %v1937
    %v1939 = vmul.f32 %v1911, 1.442695
    %v1940 = vpow.pop %v1939
    %v1941 = vmul.f32 %v1912, 1.442695
    %v1942 = vpow.pop %v1941
    %v1943 = vmul.f32 %v1913, 1.442695
    %v1944 = vpow.pop %v1943
    %v1945 = vmul.f32 %v1914, 1.442695
    %v1946 = vpow.pop %v1945
    %v1947 = vadd.f32 %v1916, 1.0
    %v1948 = vadd.f32 %v1918, 1.0
    %v1949 = vadd.f32 %v1920, 1.0
    %v1950 = vadd.f32 %v1922, 1.0
    %v1951 = vadd.f32 %v1924, 1.0
    %v1952 = vadd.f32 %v1926, 1.0
    %v1953 = vadd.f32 %v1928, 1.0
    %v1954 = vadd.f32 %v1930, 1.0
    %v1955 = vadd.f32 %v1932, 1.0
    %v1956 = vadd.f32 %v1934, 1.0
    %v1957 = vadd.f32 %v1936, 1.0
    %v1958 = vadd.f32 %v1938, 1.0
    %v1959 = vadd.f32 %v1940, 1.0
    %v1960 = vadd.f32 %v1942, 1.0
    %v1961 = vadd.f32 %v1944, 1.0
    %v1962 = vadd.f32 %v1946, 1.0
    %v1963 = vrcp.pop %v1947
    %v1964 = vmul.f32 1.0, %v1963
    %v1965 = vrcp.pop %v1948
    %v1966 = vmul.f32 1.0, %v1965
    %v1967 = vrcp.pop %v1949
    %v1968 = vmul.f32 1.0, %v1967
    %v1969 = vrcp.pop %v1950
    %v1970 = vmul.f32 1.0, %v1969
    %v1971 = vrcp.pop %v1951
    %v1972 = vmul.f32 1.0, %v1971
    %v1973 = vrcp.pop %v1952
    %v1974 = vmul.f32 1.0, %v1973
    %v1975 = vrcp.pop %v1953
    %v1976 = vmul.f32 1.0, %v1975
    %v1977 = vrcp.pop %v1954
    %v1978 = vmul.f32 1.0, %v1977
    %v1979 = vrcp.pop %v1955
    %v1980 = vmul.f32 1.0, %v1979
    %v1981 = vrcp.pop %v1956
    %v1982 = vmul.f32 1.0, %v1981
    %v1983 = vrcp.pop %v1957
    %v1984 = vmul.f32 1.0, %v1983
    %v1985 = vrcp.pop %v1958
    %v1986 = vmul.f32 1.0, %v1985
    %v1987 = vrcp.pop %v1959
    %v1988 = vmul.f32 1.0, %v1987
    %v1989 = vrcp.pop %v1960
    %v1990 = vmul.f32 1.0, %v1989
    %v1991 = vrcp.pop %v1961
    %v1992 = vmul.f32 1.0, %v1991
    %v1993 = vrcp.pop %v1962
    %v1994 = vmul.f32 1.0, %v1993
    %v1995 = vadd.f32 %v1646, %v946
    %v1996 = vadd.f32 %v1652, %v952
    %v1997 = vadd.f32 %v1658, %v958
    %v1998 = vadd.f32 %v1664, %v964
    %v1999 = vadd.f32 %v1670, %v970
    %v2000 = vadd.f32 %v1676, %v976
    %v2001 = vadd.f32 %v1682, %v982
    %v2002 = vadd.f32 %v1688, %v988
    %v2003 = vadd.f32 %v1694, %v994
    %v2004 = vadd.f32 %v1700, %v1000
    %v2005 = vadd.f32 %v1706, %v1006
    %v2006 = vadd.f32 %v1712, %v1012
    %v2007 = vadd.f32 %v1718, %v1018
    %v2008 = vadd.f32 %v1724, %v1024
    %v2009 = vadd.f32 %v1730, %v1030
    %v2010 = vadd.f32 %v1736, %v1036
    %v2011 = vxor.u32 %v1995, 2147483648
    %v2012 = vxor.u32 %v1996, 2147483648
    %v2013 = vxor.u32 %v1997, 2147483648
    %v2014 = vxor.u32 %v1998, 2147483648
    %v2015 = vxor.u32 %v1999, 2147483648
    %v2016 = vxor.u32 %v2000, 2147483648
    %v2017 = vxor.u32 %v2001, 2147483648
    %v2018 = vxor.u32 %v2002, 2147483648
    %v2019 = vxor.u32 %v2003, 2147483648
    %v2020 = vxor.u32 %v2004, 2147483648
    %v2021 = vxor.u32 %v2005, 2147483648
    %v2022 = vxor.u32 %v2006, 2147483648
    %v2023 = vxor.u32 %v2007, 2147483648
    %v2024 = vxor.u32 %v2008, 2147483648
    %v2025 = vxor.u32 %v2009, 2147483648
    %v2026 = vxor.u32 %v2010, 2147483648
    %v2027 = vmul.f32 %v2011, 1.442695
    %v2028 = vpow.pop %v2027
    %v2029 = vmul.f32 %v2012, 1.442695
    %v2030 = vpow.pop %v2029
    %v2031 = vmul.f32 %v2013, 1.442695
    %v2032 = vpow.pop %v2031
    %v2033 = vmul.f32 %v2014, 1.442695
    %v2034 = vpow.pop %v2033
    %v2035 = vmul.f32 %v2015, 1.442695
    %v2036 = vpow.pop %v2035
    %v2037 = vmul.f32 %v2016, 1.442695
    %v2038 = vpow.pop %v2037
    %v2039 = vmul.f32 %v2017, 1.442695
    %v2040 = vpow.pop %v2039
    %v2041 = vmul.f32 %v2018, 1.442695
    %v2042 = vpow.pop %v2041
    %v2043 = vmul.f32 %v2019, 1.442695
    %v2044 = vpow.pop %v2043
    %v2045 = vmul.f32 %v2020, 1.442695
    %v2046 = vpow.pop %v2045
    %v2047 = vmul.f32 %v2021, 1.442695
    %v2048 = vpow.pop %v2047
    %v2049 = vmul.f32 %v2022, 1.442695
    %v2050 = vpow.pop %v2049
    %v2051 = vmul.f32 %v2023, 1.442695
    %v2052 = vpow.pop %v2051
    %v2053 = vmul.f32 %v2024, 1.442695
    %v2054 = vpow.pop %v2053
    %v2055 = vmul.f32 %v2025, 1.442695
    %v2056 = vpow.pop %v2055
    %v2057 = vmul.f32 %v2026, 1.442695
    %v2058 = vpow.pop %v2057
    %v2059 = vadd.f32 %v2028, 1.0
    %v2060 = vadd.f32 %v2030, 1.0
    %v2061 = vadd.f32 %v2032, 1.0
    %v2062 = vadd.f32 %v2034, 1.0
    %v2063 = vadd.f32 %v2036, 1.0
    %v2064 = vadd.f32 %v2038, 1.0
    %v2065 = vadd.f32 %v2040, 1.0
    %v2066 = vadd.f32 %v2042, 1.0
    %v2067 = vadd.f32 %v2044, 1.0
    %v2068 = vadd.f32 %v2046, 1.0
    %v2069 = vadd.f32 %v2048, 1.0
    %v2070 = vadd.f32 %v2050, 1.0
    %v2071 = vadd.f32 %v2052, 1.0
    %v2072 = vadd.f32 %v2054, 1.0
    %v2073 = vadd.f32 %v2056, 1.0
    %v2074 = vadd.f32 %v2058, 1.0
    %v2075 = vrcp.pop %v2059
    %v2076 = vmul.f32 1.0, %v2075
    %v2077 = vrcp.pop %v2060
    %v2078 = vmul.f32 1.0, %v2077
    %v2079 = vrcp.pop %v2061
    %v2080 = vmul.f32 1.0, %v2079
    %v2081 = vrcp.pop %v2062
    %v2082 = vmul.f32 1.0, %v2081
    %v2083 = vrcp.pop %v2063
    %v2084 = vmul.f32 1.0, %v2083
    %v2085 = vrcp.pop %v2064
    %v2086 = vmul.f32 1.0, %v2085
    %v2087 = vrcp.pop %v2065
    %v2088 = vmul.f32 1.0, %v2087
    %v2089 = vrcp.pop %v2066
    %v2090 = vmul.f32 1.0, %v2089
    %v2091 = vrcp.pop %v2067
    %v2092 = vmul.f32 1.0, %v2091
    %v2093 = vrcp.pop %v2068
    %v2094 = vmul.f32 1.0, %v2093
    %v2095 = vrcp.pop %v2069
    %v2096 = vmul.f32 1.0, %v2095
    %v2097 = vrcp.pop %v2070
    %v2098 = vmul.f32 1.0, %v2097
    %v2099 = vrcp.pop %v2071
    %v2100 = vmul.f32 1.0, %v2099
    %v2101 = vrcp.pop %v2072
    %v2102 = vmul.f32 1.0, %v2101
    %v2103 = vrcp.pop %v2073
    %v2104 = vmul.f32 1.0, %v2103
    %v2105 = vrcp.pop %v2074
    %v2106 = vmul.f32 1.0, %v2105
    %v2107 = vmul.f32 %v1964, %v1105
    %v2108 = vmul.f32 %v1966, %v1110
    %v2109 = vmul.f32 %v1968, %v1115
    %v2110 = vmul.f32 %v1970, %v1120
    %v2111 = vmul.f32 %v1972, %v1125
    %v2112 = vmul.f32 %v1974, %v1130
    %v2113 = vmul.f32 %v1976, %v1135
    %v2114 = vmul.f32 %v1978, %v1140
    %v2115 = vmul.f32 %v1980, %v1145
    %v2116 = vmul.f32 %v1982, %v1150
    %v2117 = vmul.f32 %v1984, %v1155
    %v2118 = vmul.f32 %v1986, %v1160
    %v2119 = vmul.f32 %v1988, %v1165
    %v2120 = vmul.f32 %v1990, %v1170
    %v2121 = vmul.f32 %v1992, %v1175
    %v2122 = vmul.f32 %v1994, %v1180
    %v2123 = vadd.f32 %v1805, %v2107
    %v2124 = vadd.f32 %v1810, %v2108
    %v2125 = vadd.f32 %v1815, %v2109
    %v2126 = vadd.f32 %v1820, %v2110
    %v2127 = vadd.f32 %v1825, %v2111
    %v2128 = vadd.f32 %v1830, %v2112
    %v2129 = vadd.f32 %v1835, %v2113
    %v2130 = vadd.f32 %v1840, %v2114
    %v2131 = vadd.f32 %v1845, %v2115
    %v2132 = vadd.f32 %v1850, %v2116
    %v2133 = vadd.f32 %v1855, %v2117
    %v2134 = vadd.f32 %v1860, %v2118
    %v2135 = vadd.f32 %v1865, %v2119
    %v2136 = vadd.f32 %v1870, %v2120
    %v2137 = vadd.f32 %v1875, %v2121
    %v2138 = vadd.f32 %v1880, %v2122
    %v2139 = vtanh.pop %v2123
    %v2140 = vtanh.pop %v2124
    %v2141 = vtanh.pop %v2125
    %v2142 = vtanh.pop %v2126
    %v2143 = vtanh.pop %v2127
    %v2144 = vtanh.pop %v2128
    %v2145 = vtanh.pop %v2129
    %v2146 = vtanh.pop %v2130
    %v2147 = vtanh.pop %v2131
    %v2148 = vtanh.pop %v2132
    %v2149 = vtanh.pop %v2133
    %v2150 = vtanh.pop %v2134
    %v2151 = vtanh.pop %v2135
    %v2152 = vtanh.pop %v2136
    %v2153 = vtanh.pop %v2137
    %v2154 = vtanh.pop %v2138
    %v2155 = vsub.f32 1.0, %v2076
    %v2156 = vsub.f32 1.0, %v2078
    %v2157 = vsub.f32 1.0, %v2080
    %v2158 = vsub.f32 1.0, %v2082
    %v2159 = vsub.f32 1.0, %v2084
    %v2160 = vsub.f32 1.0, %v2086
    %v2161 = vsub.f32 1.0, %v2088
    %v2162 = vsub.f32 1.0, %v2090
    %v2163 = vsub.f32 1.0, %v2092
    %v2164 = vsub.f32 1.0, %v2094
    %v2165 = vsub.f32 1.0, %v2096
    %v2166 = vsub.f32 1.0, %v2098
    %v2167 = vsub.f32 1.0, %v2100
    %v2168 = vsub.f32 1.0, %v2102
    %v2169 = vsub.f32 1.0, %v2104
    %v2170 = vsub.f32 1.0, %v2106
    %v2171 = vmul.f32 %v2155, %v2139
    %v2172 = vmul.f32 %v2156, %v2140
    %v2173 = vmul.f32 %v2157, %v2141
    %v2174 = vmul.f32 %v2158, %v2142
    %v2175 = vmul.f32 %v2159, %v2143
    %v2176 = vmul.f32 %v2160, %v2144
    %v2177 = vmul.f32 %v2161, %v2145
    %v2178 = vmul.f32 %v2162, %v2146
    %v2179 = vmul.f32 %v2163, %v2147
    %v2180 = vmul.f32 %v2164, %v2148
    %v2181 = vmul.f32 %v2165, %v2149
    %v2182 = vmul.f32 %v2166, %v2150
    %v2183 = vmul.f32 %v2167, %v2151
    %v2184 = vmul.f32 %v2168, %v2152
    %v2185 = vmul.f32 %v2169, %v2153
    %v2186 = vmul.f32 %v2170, %v2154
    %v2187 = vmul.f32 %v2076, %v700
    %v2188 = vmul.f32 %v2078, %v701
    %v2189 = vmul.f32 %v2080, %v702
    %v2190 = vmul.f32 %v2082, %v703
    %v2191 = vmul.f32 %v2084, %v704
    %v2192 = vmul.f32 %v2086, %v705
    %v2193 = vmul.f32 %v2088, %v706
    %v2194 = vmul.f32 %v2090, %v707
    %v2195 = vmul.f32 %v2092, %v708
    %v2196 = vmul.f32 %v2094, %v709
    %v2197 = vmul.f32 %v2096, %v710
    %v2198 = vmul.f32 %v2098, %v711
    %v2199 = vmul.f32 %v2100, %v712
    %v2200 = vmul.f32 %v2102, %v713
    %v2201 = vmul.f32 %v2104, %v714
    %v2202 = vmul.f32 %v2106, %v715
    %v2203 = vadd.f32 %v2171, %v2187
    %v2204 = vadd.f32 %v2172, %v2188
    %v2205 = vadd.f32 %v2173, %v2189
    %v2206 = vadd.f32 %v2174, %v2190
    %v2207 = vadd.f32 %v2175, %v2191
    %v2208 = vadd.f32 %v2176, %v2192
    %v2209 = vadd.f32 %v2177, %v2193
    %v2210 = vadd.f32 %v2178, %v2194
    %v2211 = vadd.f32 %v2179, %v2195
    %v2212 = vadd.f32 %v2180, %v2196
    %v2213 = vadd.f32 %v2181, %v2197
    %v2214 = vadd.f32 %v2182, %v2198
    %v2215 = vadd.f32 %v2183, %v2199
    %v2216 = vadd.f32 %v2184, %v2200
    %v2217 = vadd.f32 %v2185, %v2201
    %v2218 = vadd.f32 %v2186, %v2202
    %v2219 = vmul.f32 %v2203, %v184
    %v2220 = vmul.f32 %v2204, %v185
    %v2221 = vmul.f32 %v2205, %v186
    %v2222 = vmul.f32 %v2206, %v187
    %v2223 = vmul.f32 %v2207, %v188
    %v2224 = vmul.f32 %v2208, %v189
    %v2225 = vmul.f32 %v2209, %v190
    %v2226 = vmul.f32 %v2210, %v191
    %v2227 = vmul.f32 %v2211, %v192
    %v2228 = vmul.f32 %v2212, %v193
    %v2229 = vmul.f32 %v2213, %v194
    %v2230 = vmul.f32 %v2214, %v195
    %v2231 = vmul.f32 %v2215, %v196
    %v2232 = vmul.f32 %v2216, %v197
    %v2233 = vmul.f32 %v2217, %v198
    %v2234 = vmul.f32 %v2218, %v199
    %v2235 = vadd.f32 %v2219, %v2220
    %v2236 = vadd.f32 %v2235, %v2221
    %v2237 = vadd.f32 %v2236, %v2222
    %v2238 = vadd.f32 %v2237, %v2223
    %v2239 = vadd.f32 %v2238, %v2224
    %v2240 = vadd.f32 %v2239, %v2225
    %v2241 = vadd.f32 %v2240, %v2226
    %v2242 = vadd.f32 %v2241, %v2227
    %v2243 = vadd.f32 %v2242, %v2228
    %v2244 = vadd.f32 %v2243, %v2229
    %v2245 = vadd.f32 %v2244, %v2230
    %v2246 = vadd.f32 %v2245, %v2231
    %v2247 = vadd.f32 %v2246, %v2232
    %v2248 = vadd.f32 %v2247, %v2233
    %v2249 = vadd.f32 %v2248, %v2234
    %2250 = vadd.xlane.f32.xlu0 %v2249
    %v2251 = vpop.xlane.xlu0 %2250
    %v2252 = vrot.slane %v2251, 4
    %v2253 = vadd.f32 %v2251, %v2252
    %v2254 = vrot.slane %v2253, 2
    %v2255 = vadd.f32 %v2253, %v2254
    %v2256 = vrot.slane %v2255, 1
    %v2257 = vadd.f32 %v2255, %v2256
    %s2258 = vtos %v2257
    %v2259 = vstv %s2258
    %v2260 = vmul.f32 %v2219, %v2219
    %v2261 = vmul.f32 %v2220, %v2220
    %v2262 = vmul.f32 %v2221, %v2221
    %v2263 = vmul.f32 %v2222, %v2222
    %v2264 = vmul.f32 %v2223, %v2223
    %v2265 = vmul.f32 %v2224, %v2224
    %v2266 = vmul.f32 %v2225, %v2225
    %v2267 = vmul.f32 %v2226, %v2226
    %v2268 = vmul.f32 %v2227, %v2227
    %v2269 = vmul.f32 %v2228, %v2228
    %v2270 = vmul.f32 %v2229, %v2229
    %v2271 = vmul.f32 %v2230, %v2230
    %v2272 = vmul.f32 %v2231, %v2231
    %v2273 = vmul.f32 %v2232, %v2232
    %v2274 = vmul.f32 %v2233, %v2233
    %v2275 = vmul.f32 %v2234, %v2234
    %v2276 = vadd.f32 %v2260, %v2261
    %v2277 = vadd.f32 %v2276, %v2262
    %v2278 = vadd.f32 %v2277, %v2263
    %v2279 = vadd.f32 %v2278, %v2264
    %v2280 = vadd.f32 %v2279, %v2265
    %v2281 = vadd.f32 %v2280, %v2266
    %v2282 = vadd.f32 %v2281, %v2267
    %v2283 = vadd.f32 %v2282, %v2268
    %v2284 = vadd.f32 %v2283, %v2269
    %v2285 = vadd.f32 %v2284, %v2270
    %v2286 = vadd.f32 %v2285, %v2271
    %v2287 = vadd.f32 %v2286, %v2272
    %v2288 = vadd.f32 %v2287, %v2273
    %v2289 = vadd.f32 %v2288, %v2274
    %v2290 = vadd.f32 %v2289, %v2275
    %2291 = vadd.xlane.f32.xlu0 %v2290
    %v2292 = vpop.xlane.xlu0 %2291
    %v2293 = vrot.slane %v2292, 4
    %v2294 = vadd.f32 %v2292, %v2293
    %v2295 = vrot.slane %v2294, 2
    %v2296 = vadd.f32 %v2294, %v2295
    %v2297 = vrot.slane %v2296, 1
    %v2298 = vadd.f32 %v2296, %v2297
    %s2299 = vtos %v2298
    %v2300 = vstv %s2299
    %v2301 = vmul.f32 %v2259, 0.001953125
    %v2302 = vmul.f32 %v2300, 0.001953125
    %v2303 = vmul.f32 %v2301, %v2301
    %v2304 = vsub.f32 %v2302, %v2303
    %v2305 = vmax.f32 %v2304, 0.0
    %v2306 = vrsqrt.pop %v2305
    %v2307 = vmul.f32 %v2305, %v2306
    %vm2308 = vcmp.eq.f32.partialorder %v2305, inf
    %v2309 = vsel %vm2308, %v2305, %v2307
    %vm2310 = vcmp.eq.f32.partialorder %v2305, 0.0
    %v2311 = vand.u32 %v2305, 2147483648
    %v2312 = vsel %vm2310, %v2311, %v2309
    %v2313 = vadd.f32 %v2312, 1e-05
    %v2314 = vrcp.pop %v2313
    %v2315 = vsub.f32 %v2203, %v2301
    %v2316 = vsub.f32 %v2204, %v2301
    %v2317 = vsub.f32 %v2205, %v2301
    %v2318 = vsub.f32 %v2206, %v2301
    %v2319 = vsub.f32 %v2207, %v2301
    %v2320 = vsub.f32 %v2208, %v2301
    %v2321 = vsub.f32 %v2209, %v2301
    %v2322 = vsub.f32 %v2210, %v2301
    %v2323 = vsub.f32 %v2211, %v2301
    %v2324 = vsub.f32 %v2212, %v2301
    %v2325 = vsub.f32 %v2213, %v2301
    %v2326 = vsub.f32 %v2214, %v2301
    %v2327 = vsub.f32 %v2215, %v2301
    %v2328 = vsub.f32 %v2216, %v2301
    %v2329 = vsub.f32 %v2217, %v2301
    %v2330 = vsub.f32 %v2218, %v2301
    %v2331 = vmul.f32 %v2315, %v2314
    %v2332 = vmul.f32 %v2316, %v2314
    %v2333 = vmul.f32 %v2317, %v2314
    %v2334 = vmul.f32 %v2318, %v2314
    %v2335 = vmul.f32 %v2319, %v2314
    %v2336 = vmul.f32 %v2320, %v2314
    %v2337 = vmul.f32 %v2321, %v2314
    %v2338 = vmul.f32 %v2322, %v2314
    %v2339 = vmul.f32 %v2323, %v2314
    %v2340 = vmul.f32 %v2324, %v2314
    %v2341 = vmul.f32 %v2325, %v2314
    %v2342 = vmul.f32 %v2326, %v2314
    %v2343 = vmul.f32 %v2327, %v2314
    %v2344 = vmul.f32 %v2328, %v2314
    %v2345 = vmul.f32 %v2329, %v2314
    %v2346 = vmul.f32 %v2330, %v2314
    %2347 = vmatprep.subr.mxu0 %v292
    %2348 = vmatpush1.msra.mxu0 %v291
    %2349 = vmatprep.subr.mxu0 %v287
    %2350 = vmatpush1.msra.mxu0 %v286
    %2351 = vmatprep.subr.mxu0 %v282
    %2352 = vmatpush1.msra.mxu0 %v281
    %2353 = vmatprep.subr.mxu0 %v277
    %2354 = vmatpush1.msra.mxu0 %v276
    %2355 = vmatprep.subr.mxu0 %v272
    %2356 = vmatpush1.msra.mxu0 %v271
    %2357 = vmatprep.subr.mxu0 %v267
    %2358 = vmatpush1.msra.mxu0 %v266
    %2359 = vmatprep.subr.mxu0 %v262
    %2360 = vmatpush1.msra.mxu0 %v261
    %2361 = vmatprep.subr.mxu0 %v257
    %2362 = vmatpush1.msra.mxu0 %v256
    %2363 = vmatprep.subr.mxu0 %v252
    %2364 = vmatpush1.msra.mxu0 %v251
    %2365 = vmatprep.subr.mxu0 %v247
    %2366 = vmatpush1.msra.mxu0 %v246
    %2367 = vmatprep.subr.mxu0 %v242
    %2368 = vmatpush1.msra.mxu0 %v241
    %2369 = vmatprep.subr.mxu0 %v237
    %2370 = vmatpush1.msra.mxu0 %v236
    %2371 = vmatprep.subr.mxu0 %v232
    %2372 = vmatpush1.msra.mxu0 %v231
    %2373 = vmatprep.subr.mxu0 %v227
    %2374 = vmatpush1.msra.mxu0 %v226
    %2375 = vmatprep.subr.mxu0 %v222
    %2376 = vmatpush1.msra.mxu0 %v221
    %2377 = vmatprep.subr.mxu0 %v217
    %2378 = vmatpush1.msra.mxu0 %v216
    %2379 = vmatprep.subr.mxu0 0.0
    %2380 = vmatpush2.msra.mxu0 0.0
    %2381 = vmatprep.subr.mxu0 0.0
    %2382 = vmatpush2.msra.mxu0 0.0
    %2383 = vmatprep.subr.mxu0 0.0
    %2384 = vmatpush2.msra.mxu0 0.0
    %2385 = vmatprep.subr.mxu0 0.0
    %2386 = vmatpush2.msra.mxu0 0.0
    %2387 = vmatprep.subr.mxu0 0.0
    %2388 = vmatpush2.msra.mxu0 0.0
    %2389 = vmatprep.subr.mxu0 0.0
    %2390 = vmatpush2.msra.mxu0 0.0
    %2391 = vmatprep.subr.mxu0 0.0
    %2392 = vmatpush2.msra.mxu0 0.0
    %2393 = vmatprep.subr.mxu0 0.0
    %2394 = vmatpush2.msra.mxu0 0.0
    %2395 = vmatprep.subr.mxu0 0.0
    %2396 = vmatpush2.msra.mxu0 0.0
    %2397 = vmatprep.subr.mxu0 0.0
    %2398 = vmatpush2.msra.mxu0 0.0
    %2399 = vmatprep.subr.mxu0 0.0
    %2400 = vmatpush2.msra.mxu0 0.0
    %2401 = vmatprep.subr.mxu0 0.0
    %2402 = vmatpush2.msra.mxu0 0.0
    %2403 = vmatprep.subr.mxu0 0.0
    %2404 = vmatpush2.msra.mxu0 0.0
    %2405 = vmatprep.subr.mxu0 0.0
    %2406 = vmatpush2.msra.mxu0 0.0
    %2407 = vmatprep.subr.mxu0 0.0
    %2408 = vmatpush2.msra.mxu0 0.0
    %2409 = vmatprep.subr.mxu0 0.0
    %2410 = vmatpush2.msra.mxu0 0.0
    %2411 = vmatprep.mubr.f32.mxu0 0.0
    %2412 = vmatmul.mubr.f32.gmra.mxu0 %v2331
    %v2413 = vpop.f32.mrf.mxu0
    %v2414 = vadd.f32 %v365, %v2413
    %v2415 = vpop.f32.mrf.mxu0
    %v2416 = vadd.f32 %v369, %v2415
    %2417 = vmatprep.mubr.f32.mxu0 0.0
    %2418 = vmatmul.mubr.f32.gmra.mxu0 %v2332
    %v2419 = vpop.f32.mrf.mxu0
    %v2420 = vadd.f32 %v365, %v2419
    %v2421 = vpop.f32.mrf.mxu0
    %v2422 = vadd.f32 %v369, %v2421
    %2423 = vmatprep.mubr.f32.mxu0 0.0
    %2424 = vmatmul.mubr.f32.gmra.mxu0 %v2333
    %v2425 = vpop.f32.mrf.mxu0
    %v2426 = vadd.f32 %v365, %v2425
    %v2427 = vpop.f32.mrf.mxu0
    %v2428 = vadd.f32 %v369, %v2427
    %2429 = vmatprep.mubr.f32.mxu0 0.0
    %2430 = vmatmul.mubr.f32.gmra.mxu0 %v2334
    %v2431 = vpop.f32.mrf.mxu0
    %v2432 = vadd.f32 %v365, %v2431
    %v2433 = vpop.f32.mrf.mxu0
    %v2434 = vadd.f32 %v369, %v2433
    %2435 = vmatprep.mubr.f32.mxu0 0.0
    %2436 = vmatmul.mubr.f32.gmra.mxu0 %v2335
    %v2437 = vpop.f32.mrf.mxu0
    %v2438 = vadd.f32 %v365, %v2437
    %v2439 = vpop.f32.mrf.mxu0
    %v2440 = vadd.f32 %v369, %v2439
    %2441 = vmatprep.mubr.f32.mxu0 0.0
    %2442 = vmatmul.mubr.f32.gmra.mxu0 %v2336
    %v2443 = vpop.f32.mrf.mxu0
    %v2444 = vadd.f32 %v365, %v2443
    %v2445 = vpop.f32.mrf.mxu0
    %v2446 = vadd.f32 %v369, %v2445
    %2447 = vmatprep.mubr.f32.mxu0 0.0
    %2448 = vmatmul.mubr.f32.gmra.mxu0 %v2337
    %v2449 = vpop.f32.mrf.mxu0
    %v2450 = vadd.f32 %v365, %v2449
    %v2451 = vpop.f32.mrf.mxu0
    %v2452 = vadd.f32 %v369, %v2451
    %2453 = vmatprep.mubr.f32.mxu0 0.0
    %2454 = vmatmul.mubr.f32.gmra.mxu0 %v2338
    %v2455 = vpop.f32.mrf.mxu0
    %v2456 = vadd.f32 %v365, %v2455
    %v2457 = vpop.f32.mrf.mxu0
    %v2458 = vadd.f32 %v369, %v2457
    %2459 = vmatprep.mubr.f32.mxu0 0.0
    %2460 = vmatmul.mubr.f32.gmra.mxu0 %v2339
    %v2461 = vpop.f32.mrf.mxu0
    %v2462 = vadd.f32 %v365, %v2461
    %v2463 = vpop.f32.mrf.mxu0
    %v2464 = vadd.f32 %v369, %v2463
    %2465 = vmatprep.mubr.f32.mxu0 0.0
    %2466 = vmatmul.mubr.f32.gmra.mxu0 %v2340
    %v2467 = vpop.f32.mrf.mxu0
    %v2468 = vadd.f32 %v365, %v2467
    %v2469 = vpop.f32.mrf.mxu0
    %v2470 = vadd.f32 %v369, %v2469
    %2471 = vmatprep.mubr.f32.mxu0 0.0
    %2472 = vmatmul.mubr.f32.gmra.mxu0 %v2341
    %v2473 = vpop.f32.mrf.mxu0
    %v2474 = vadd.f32 %v365, %v2473
    %v2475 = vpop.f32.mrf.mxu0
    %v2476 = vadd.f32 %v369, %v2475
    %2477 = vmatprep.mubr.f32.mxu0 0.0
    %2478 = vmatmul.mubr.f32.gmra.mxu0 %v2342
    %v2479 = vpop.f32.mrf.mxu0
    %v2480 = vadd.f32 %v365, %v2479
    %v2481 = vpop.f32.mrf.mxu0
    %v2482 = vadd.f32 %v369, %v2481
    %2483 = vmatprep.mubr.f32.mxu0 0.0
    %2484 = vmatmul.mubr.f32.gmra.mxu0 %v2343
    %v2485 = vpop.f32.mrf.mxu0
    %v2486 = vadd.f32 %v365, %v2485
    %v2487 = vpop.f32.mrf.mxu0
    %v2488 = vadd.f32 %v369, %v2487
    %2489 = vmatprep.mubr.f32.mxu0 0.0
    %2490 = vmatmul.mubr.f32.gmra.mxu0 %v2344
    %v2491 = vpop.f32.mrf.mxu0
    %v2492 = vadd.f32 %v365, %v2491
    %v2493 = vpop.f32.mrf.mxu0
    %v2494 = vadd.f32 %v369, %v2493
    %2495 = vmatprep.mubr.f32.mxu0 0.0
    %2496 = vmatmul.mubr.f32.gmra.mxu0 %v2345
    %v2497 = vpop.f32.mrf.mxu0
    %v2498 = vadd.f32 %v365, %v2497
    %v2499 = vpop.f32.mrf.mxu0
    %v2500 = vadd.f32 %v369, %v2499
    %2501 = vmatprep.mubr.f32.mxu0 0.0
    %2502 = vmatmul.mubr.f32.gmra.mxu0 %v2346
    %v2503 = vpop.f32.mrf.mxu0
    %v2504 = vadd.f32 %v365, %v2503
    %v2505 = vpop.f32.mrf.mxu0
    %v2506 = vadd.f32 %v369, %v2505
    %2507 = vdwg.mxu0
    %2508 = vmatprep.subr.mxu0 %v294
    %2509 = vmatpush1.msra.mxu0 %v293
    %2510 = vmatprep.subr.mxu0 %v289
    %2511 = vmatpush1.msra.mxu0 %v288
    %2512 = vmatprep.subr.mxu0 %v284
    %2513 = vmatpush1.msra.mxu0 %v283
    %2514 = vmatprep.subr.mxu0 %v279
    %2515 = vmatpush1.msra.mxu0 %v278
    %2516 = vmatprep.subr.mxu0 %v274
    %2517 = vmatpush1.msra.mxu0 %v273
    %2518 = vmatprep.subr.mxu0 %v269
    %2519 = vmatpush1.msra.mxu0 %v268
    %2520 = vmatprep.subr.mxu0 %v264
    %2521 = vmatpush1.msra.mxu0 %v263
    %2522 = vmatprep.subr.mxu0 %v259
    %2523 = vmatpush1.msra.mxu0 %v258
    %2524 = vmatprep.subr.mxu0 %v254
    %2525 = vmatpush1.msra.mxu0 %v253
    %2526 = vmatprep.subr.mxu0 %v249
    %2527 = vmatpush1.msra.mxu0 %v248
    %2528 = vmatprep.subr.mxu0 %v244
    %2529 = vmatpush1.msra.mxu0 %v243
    %2530 = vmatprep.subr.mxu0 %v239
    %2531 = vmatpush1.msra.mxu0 %v238
    %2532 = vmatprep.subr.mxu0 %v234
    %2533 = vmatpush1.msra.mxu0 %v233
    %2534 = vmatprep.subr.mxu0 %v229
    %2535 = vmatpush1.msra.mxu0 %v228
    %2536 = vmatprep.subr.mxu0 %v224
    %2537 = vmatpush1.msra.mxu0 %v223
    %2538 = vmatprep.subr.mxu0 %v219
    %2539 = vmatpush1.msra.mxu0 %v218
    %2540 = vmatprep.subr.mxu0 0.0
    %2541 = vmatpush2.msra.mxu0 0.0
    %2542 = vmatprep.subr.mxu0 0.0
    %2543 = vmatpush2.msra.mxu0 0.0
    %2544 = vmatprep.subr.mxu0 0.0
    %2545 = vmatpush2.msra.mxu0 0.0
    %2546 = vmatprep.subr.mxu0 0.0
    %2547 = vmatpush2.msra.mxu0 0.0
    %2548 = vmatprep.subr.mxu0 0.0
    %2549 = vmatpush2.msra.mxu0 0.0
    %2550 = vmatprep.subr.mxu0 0.0
    %2551 = vmatpush2.msra.mxu0 0.0
    %2552 = vmatprep.subr.mxu0 0.0
    %2553 = vmatpush2.msra.mxu0 0.0
    %2554 = vmatprep.subr.mxu0 0.0
    %2555 = vmatpush2.msra.mxu0 0.0
    %2556 = vmatprep.subr.mxu0 0.0
    %2557 = vmatpush2.msra.mxu0 0.0
    %2558 = vmatprep.subr.mxu0 0.0
    %2559 = vmatpush2.msra.mxu0 0.0
    %2560 = vmatprep.subr.mxu0 0.0
    %2561 = vmatpush2.msra.mxu0 0.0
    %2562 = vmatprep.subr.mxu0 0.0
    %2563 = vmatpush2.msra.mxu0 0.0
    %2564 = vmatprep.subr.mxu0 0.0
    %2565 = vmatpush2.msra.mxu0 0.0
    %2566 = vmatprep.subr.mxu0 0.0
    %2567 = vmatpush2.msra.mxu0 0.0
    %2568 = vmatprep.subr.mxu0 0.0
    %2569 = vmatpush2.msra.mxu0 0.0
    %2570 = vmatprep.subr.mxu0 0.0
    %2571 = vmatpush2.msra.mxu0 0.0
    %2572 = vmatprep.mubr.f32.mxu0 0.0
    %2573 = vmatmul.mubr.f32.gmra.mxu0 %v2331
    %v2574 = vpop.f32.mrf.mxu0
    %v2575 = vadd.f32 %v373, %v2574
    %v2576 = vpop.f32.mrf.mxu0
    %v2577 = vadd.f32 %v377, %v2576
    %2578 = vmatprep.mubr.f32.mxu0 0.0
    %2579 = vmatmul.mubr.f32.gmra.mxu0 %v2332
    %v2580 = vpop.f32.mrf.mxu0
    %v2581 = vadd.f32 %v373, %v2580
    %v2582 = vpop.f32.mrf.mxu0
    %v2583 = vadd.f32 %v377, %v2582
    %2584 = vmatprep.mubr.f32.mxu0 0.0
    %2585 = vmatmul.mubr.f32.gmra.mxu0 %v2333
    %v2586 = vpop.f32.mrf.mxu0
    %v2587 = vadd.f32 %v373, %v2586
    %v2588 = vpop.f32.mrf.mxu0
    %v2589 = vadd.f32 %v377, %v2588
    %2590 = vmatprep.mubr.f32.mxu0 0.0
    %2591 = vmatmul.mubr.f32.gmra.mxu0 %v2334
    %v2592 = vpop.f32.mrf.mxu0
    %v2593 = vadd.f32 %v373, %v2592
    %v2594 = vpop.f32.mrf.mxu0
    %v2595 = vadd.f32 %v377, %v2594
    %2596 = vmatprep.mubr.f32.mxu0 0.0
    %2597 = vmatmul.mubr.f32.gmra.mxu0 %v2335
    %v2598 = vpop.f32.mrf.mxu0
    %v2599 = vadd.f32 %v373, %v2598
    %v2600 = vpop.f32.mrf.mxu0
    %v2601 = vadd.f32 %v377, %v2600
    %2602 = vmatprep.mubr.f32.mxu0 0.0
    %2603 = vmatmul.mubr.f32.gmra.mxu0 %v2336
    %v2604 = vpop.f32.mrf.mxu0
    %v2605 = vadd.f32 %v373, %v2604
    %v2606 = vpop.f32.mrf.mxu0
    %v2607 = vadd.f32 %v377, %v2606
    %2608 = vmatprep.mubr.f32.mxu0 0.0
    %2609 = vmatmul.mubr.f32.gmra.mxu0 %v2337
    %v2610 = vpop.f32.mrf.mxu0
    %v2611 = vadd.f32 %v373, %v2610
    %v2612 = vpop.f32.mrf.mxu0
    %v2613 = vadd.f32 %v377, %v2612
    %2614 = vmatprep.mubr.f32.mxu0 0.0
    %2615 = vmatmul.mubr.f32.gmra.mxu0 %v2338
    %v2616 = vpop.f32.mrf.mxu0
    %v2617 = vadd.f32 %v373, %v2616
    %v2618 = vpop.f32.mrf.mxu0
    %v2619 = vadd.f32 %v377, %v2618
    %2620 = vmatprep.mubr.f32.mxu0 0.0
    %2621 = vmatmul.mubr.f32.gmra.mxu0 %v2339
    %v2622 = vpop.f32.mrf.mxu0
    %v2623 = vadd.f32 %v373, %v2622
    %v2624 = vpop.f32.mrf.mxu0
    %v2625 = vadd.f32 %v377, %v2624
    %2626 = vmatprep.mubr.f32.mxu0 0.0
    %2627 = vmatmul.mubr.f32.gmra.mxu0 %v2340
    %v2628 = vpop.f32.mrf.mxu0
    %v2629 = vadd.f32 %v373, %v2628
    %v2630 = vpop.f32.mrf.mxu0
    %v2631 = vadd.f32 %v377, %v2630
    %2632 = vmatprep.mubr.f32.mxu0 0.0
    %2633 = vmatmul.mubr.f32.gmra.mxu0 %v2341
    %v2634 = vpop.f32.mrf.mxu0
    %v2635 = vadd.f32 %v373, %v2634
    %v2636 = vpop.f32.mrf.mxu0
    %v2637 = vadd.f32 %v377, %v2636
    %2638 = vmatprep.mubr.f32.mxu0 0.0
    %2639 = vmatmul.mubr.f32.gmra.mxu0 %v2342
    %v2640 = vpop.f32.mrf.mxu0
    %v2641 = vadd.f32 %v373, %v2640
    %v2642 = vpop.f32.mrf.mxu0
    %v2643 = vadd.f32 %v377, %v2642
    %2644 = vmatprep.mubr.f32.mxu0 0.0
    %2645 = vmatmul.mubr.f32.gmra.mxu0 %v2343
    %v2646 = vpop.f32.mrf.mxu0
    %v2647 = vadd.f32 %v373, %v2646
    %v2648 = vpop.f32.mrf.mxu0
    %v2649 = vadd.f32 %v377, %v2648
    %2650 = vmatprep.mubr.f32.mxu0 0.0
    %2651 = vmatmul.mubr.f32.gmra.mxu0 %v2344
    %v2652 = vpop.f32.mrf.mxu0
    %v2653 = vadd.f32 %v373, %v2652
    %v2654 = vpop.f32.mrf.mxu0
    %v2655 = vadd.f32 %v377, %v2654
    %2656 = vmatprep.mubr.f32.mxu0 0.0
    %2657 = vmatmul.mubr.f32.gmra.mxu0 %v2345
    %v2658 = vpop.f32.mrf.mxu0
    %v2659 = vadd.f32 %v373, %v2658
    %v2660 = vpop.f32.mrf.mxu0
    %v2661 = vadd.f32 %v377, %v2660
    %2662 = vmatprep.mubr.f32.mxu0 0.0
    %2663 = vmatmul.mubr.f32.gmra.mxu0 %v2346
    %v2664 = vpop.f32.mrf.mxu0
    %v2665 = vadd.f32 %v373, %v2664
    %v2666 = vpop.f32.mrf.mxu0
    %v2667 = vadd.f32 %v377, %v2666
    %2668 = vdwg.mxu0
    %2669 = vmatprep.subr.mxu0 0.0
    %2670 = vmatpush1.msra.mxu0 %v295
    %2671 = vmatprep.subr.mxu0 0.0
    %2672 = vmatpush1.msra.mxu0 %v290
    %2673 = vmatprep.subr.mxu0 0.0
    %2674 = vmatpush1.msra.mxu0 %v285
    %2675 = vmatprep.subr.mxu0 0.0
    %2676 = vmatpush1.msra.mxu0 %v280
    %2677 = vmatprep.subr.mxu0 0.0
    %2678 = vmatpush1.msra.mxu0 %v275
    %2679 = vmatprep.subr.mxu0 0.0
    %2680 = vmatpush1.msra.mxu0 %v270
    %2681 = vmatprep.subr.mxu0 0.0
    %2682 = vmatpush1.msra.mxu0 %v265
    %2683 = vmatprep.subr.mxu0 0.0
    %2684 = vmatpush1.msra.mxu0 %v260
    %2685 = vmatprep.subr.mxu0 0.0
    %2686 = vmatpush1.msra.mxu0 %v255
    %2687 = vmatprep.subr.mxu0 0.0
    %2688 = vmatpush1.msra.mxu0 %v250
    %2689 = vmatprep.subr.mxu0 0.0
    %2690 = vmatpush1.msra.mxu0 %v245
    %2691 = vmatprep.subr.mxu0 0.0
    %2692 = vmatpush1.msra.mxu0 %v240
    %2693 = vmatprep.subr.mxu0 0.0
    %2694 = vmatpush1.msra.mxu0 %v235
    %2695 = vmatprep.subr.mxu0 0.0
    %2696 = vmatpush1.msra.mxu0 %v230
    %2697 = vmatprep.subr.mxu0 0.0
    %2698 = vmatpush1.msra.mxu0 %v225
    %2699 = vmatprep.subr.mxu0 0.0
    %2700 = vmatpush1.msra.mxu0 %v220
    %2701 = vmatprep.subr.mxu0 0.0
    %2702 = vmatpush2.msra.mxu0 0.0
    %2703 = vmatprep.subr.mxu0 0.0
    %2704 = vmatpush2.msra.mxu0 0.0
    %2705 = vmatprep.subr.mxu0 0.0
    %2706 = vmatpush2.msra.mxu0 0.0
    %2707 = vmatprep.subr.mxu0 0.0
    %2708 = vmatpush2.msra.mxu0 0.0
    %2709 = vmatprep.subr.mxu0 0.0
    %2710 = vmatpush2.msra.mxu0 0.0
    %2711 = vmatprep.subr.mxu0 0.0
    %2712 = vmatpush2.msra.mxu0 0.0
    %2713 = vmatprep.subr.mxu0 0.0
    %2714 = vmatpush2.msra.mxu0 0.0
    %2715 = vmatprep.subr.mxu0 0.0
    %2716 = vmatpush2.msra.mxu0 0.0
    %2717 = vmatprep.subr.mxu0 0.0
    %2718 = vmatpush2.msra.mxu0 0.0
    %2719 = vmatprep.subr.mxu0 0.0
    %2720 = vmatpush2.msra.mxu0 0.0
    %2721 = vmatprep.subr.mxu0 0.0
    %2722 = vmatpush2.msra.mxu0 0.0
    %2723 = vmatprep.subr.mxu0 0.0
    %2724 = vmatpush2.msra.mxu0 0.0
    %2725 = vmatprep.subr.mxu0 0.0
    %2726 = vmatpush2.msra.mxu0 0.0
    %2727 = vmatprep.subr.mxu0 0.0
    %2728 = vmatpush2.msra.mxu0 0.0
    %2729 = vmatprep.subr.mxu0 0.0
    %2730 = vmatpush2.msra.mxu0 0.0
    %2731 = vmatprep.subr.mxu0 0.0
    %2732 = vmatpush2.msra.mxu0 0.0
    %2733 = vmatprep.mubr.f32.mxu0 0.0
    %2734 = vmatmul.mubr.f32.gmra.mxu0 %v2331
    %v2735 = vpop.f32.mrf.mxu0
    %v2736 = vadd.f32 %v381, %v2735
    %v2737 = vpop.f32.mrf.mxu0
    %2738 = vmatprep.mubr.f32.mxu0 0.0
    %2739 = vmatmul.mubr.f32.gmra.mxu0 %v2332
    %v2740 = vpop.f32.mrf.mxu0
    %v2741 = vadd.f32 %v381, %v2740
    %v2742 = vpop.f32.mrf.mxu0
    %2743 = vmatprep.mubr.f32.mxu0 0.0
    %2744 = vmatmul.mubr.f32.gmra.mxu0 %v2333
    %v2745 = vpop.f32.mrf.mxu0
    %v2746 = vadd.f32 %v381, %v2745
    %v2747 = vpop.f32.mrf.mxu0
    %2748 = vmatprep.mubr.f32.mxu0 0.0
    %2749 = vmatmul.mubr.f32.gmra.mxu0 %v2334
    %v2750 = vpop.f32.mrf.mxu0
    %v2751 = vadd.f32 %v381, %v2750
    %v2752 = vpop.f32.mrf.mxu0
    %2753 = vmatprep.mubr.f32.mxu0 0.0
    %2754 = vmatmul.mubr.f32.gmra.mxu0 %v2335
    %v2755 = vpop.f32.mrf.mxu0
    %v2756 = vadd.f32 %v381, %v2755
    %v2757 = vpop.f32.mrf.mxu0
    %2758 = vmatprep.mubr.f32.mxu0 0.0
    %2759 = vmatmul.mubr.f32.gmra.mxu0 %v2336
    %v2760 = vpop.f32.mrf.mxu0
    %v2761 = vadd.f32 %v381, %v2760
    %v2762 = vpop.f32.mrf.mxu0
    %2763 = vmatprep.mubr.f32.mxu0 0.0
    %2764 = vmatmul.mubr.f32.gmra.mxu0 %v2337
    %v2765 = vpop.f32.mrf.mxu0
    %v2766 = vadd.f32 %v381, %v2765
    %v2767 = vpop.f32.mrf.mxu0
    %2768 = vmatprep.mubr.f32.mxu0 0.0
    %2769 = vmatmul.mubr.f32.gmra.mxu0 %v2338
    %v2770 = vpop.f32.mrf.mxu0
    %v2771 = vadd.f32 %v381, %v2770
    %v2772 = vpop.f32.mrf.mxu0
    %2773 = vmatprep.mubr.f32.mxu0 0.0
    %2774 = vmatmul.mubr.f32.gmra.mxu0 %v2339
    %v2775 = vpop.f32.mrf.mxu0
    %v2776 = vadd.f32 %v381, %v2775
    %v2777 = vpop.f32.mrf.mxu0
    %2778 = vmatprep.mubr.f32.mxu0 0.0
    %2779 = vmatmul.mubr.f32.gmra.mxu0 %v2340
    %v2780 = vpop.f32.mrf.mxu0
    %v2781 = vadd.f32 %v381, %v2780
    %v2782 = vpop.f32.mrf.mxu0
    %2783 = vmatprep.mubr.f32.mxu0 0.0
    %2784 = vmatmul.mubr.f32.gmra.mxu0 %v2341
    %v2785 = vpop.f32.mrf.mxu0
    %v2786 = vadd.f32 %v381, %v2785
    %v2787 = vpop.f32.mrf.mxu0
    %2788 = vmatprep.mubr.f32.mxu0 0.0
    %2789 = vmatmul.mubr.f32.gmra.mxu0 %v2342
    %v2790 = vpop.f32.mrf.mxu0
    %v2791 = vadd.f32 %v381, %v2790
    %v2792 = vpop.f32.mrf.mxu0
    %2793 = vmatprep.mubr.f32.mxu0 0.0
    %2794 = vmatmul.mubr.f32.gmra.mxu0 %v2343
    %v2795 = vpop.f32.mrf.mxu0
    %v2796 = vadd.f32 %v381, %v2795
    %v2797 = vpop.f32.mrf.mxu0
    %2798 = vmatprep.mubr.f32.mxu0 0.0
    %2799 = vmatmul.mubr.f32.gmra.mxu0 %v2344
    %v2800 = vpop.f32.mrf.mxu0
    %v2801 = vadd.f32 %v381, %v2800
    %v2802 = vpop.f32.mrf.mxu0
    %2803 = vmatprep.mubr.f32.mxu0 0.0
    %2804 = vmatmul.mubr.f32.gmra.mxu0 %v2345
    %v2805 = vpop.f32.mrf.mxu0
    %v2806 = vadd.f32 %v381, %v2805
    %v2807 = vpop.f32.mrf.mxu0
    %2808 = vmatprep.mubr.f32.mxu0 0.0
    %2809 = vmatmul.mubr.f32.gmra.mxu0 %v2346
    %v2810 = vpop.f32.mrf.mxu0
    %v2811 = vadd.f32 %v381, %v2810
    %v2812 = vpop.f32.mrf.mxu0
    %2813 = vdwg.mxu0
    %vm2814 = vcmp.ge.f32.partialorder %v2414, 0.0
    %vm2815 = vcmp.ge.f32.partialorder %v2420, 0.0
    %vm2816 = vcmp.ge.f32.partialorder %v2426, 0.0
    %vm2817 = vcmp.ge.f32.partialorder %v2432, 0.0
    %vm2818 = vcmp.ge.f32.partialorder %v2438, 0.0
    %vm2819 = vcmp.ge.f32.partialorder %v2444, 0.0
    %vm2820 = vcmp.ge.f32.partialorder %v2450, 0.0
    %vm2821 = vcmp.ge.f32.partialorder %v2456, 0.0
    %vm2822 = vcmp.ge.f32.partialorder %v2462, 0.0
    %vm2823 = vcmp.ge.f32.partialorder %v2468, 0.0
    %vm2824 = vcmp.ge.f32.partialorder %v2474, 0.0
    %vm2825 = vcmp.ge.f32.partialorder %v2480, 0.0
    %vm2826 = vcmp.ge.f32.partialorder %v2486, 0.0
    %vm2827 = vcmp.ge.f32.partialorder %v2492, 0.0
    %vm2828 = vcmp.ge.f32.partialorder %v2498, 0.0
    %vm2829 = vcmp.ge.f32.partialorder %v2504, 0.0
    %v2830 = vmul.f32 %v2414, 0.01
    %v2831 = vmul.f32 %v2420, 0.01
    %v2832 = vmul.f32 %v2426, 0.01
    %v2833 = vmul.f32 %v2432, 0.01
    %v2834 = vmul.f32 %v2438, 0.01
    %v2835 = vmul.f32 %v2444, 0.01
    %v2836 = vmul.f32 %v2450, 0.01
    %v2837 = vmul.f32 %v2456, 0.01
    %v2838 = vmul.f32 %v2462, 0.01
    %v2839 = vmul.f32 %v2468, 0.01
    %v2840 = vmul.f32 %v2474, 0.01
    %v2841 = vmul.f32 %v2480, 0.01
    %v2842 = vmul.f32 %v2486, 0.01
    %v2843 = vmul.f32 %v2492, 0.01
    %v2844 = vmul.f32 %v2498, 0.01
    %v2845 = vmul.f32 %v2504, 0.01
    %v2846 = vsel %vm2814, %v2414, %v2830
    %v2847 = vsel %vm2815, %v2420, %v2831
    %v2848 = vsel %vm2816, %v2426, %v2832
    %v2849 = vsel %vm2817, %v2432, %v2833
    %v2850 = vsel %vm2818, %v2438, %v2834
    %v2851 = vsel %vm2819, %v2444, %v2835
    %v2852 = vsel %vm2820, %v2450, %v2836
    %v2853 = vsel %vm2821, %v2456, %v2837
    %v2854 = vsel %vm2822, %v2462, %v2838
    %v2855 = vsel %vm2823, %v2468, %v2839
    %v2856 = vsel %vm2824, %v2474, %v2840
    %v2857 = vsel %vm2825, %v2480, %v2841
    %v2858 = vsel %vm2826, %v2486, %v2842
    %v2859 = vsel %vm2827, %v2492, %v2843
    %v2860 = vsel %vm2828, %v2498, %v2844
    %v2861 = vsel %vm2829, %v2504, %v2845
    %v2862 = vpack.c.bf16 %v2847, %v2846
    %v2863 = vpack.c.bf16 %v2849, %v2848
    %v2864 = vpack.c.bf16 %v2851, %v2850
    %v2865 = vpack.c.bf16 %v2853, %v2852
    %v2866 = vpack.c.bf16 %v2855, %v2854
    %v2867 = vpack.c.bf16 %v2857, %v2856
    %v2868 = vpack.c.bf16 %v2859, %v2858
    %v2869 = vpack.c.bf16 %v2861, %v2860
    %2870 = vmatprep.subr.bf16.mxu0 0
    %2871 = vmatpush1.bf16.msra.mxu0 %v2869
    %2872 = vmatprep.subr.bf16.mxu0 0
    %2873 = vmatpush1.bf16.msra.mxu0 %v2868
    %2874 = vmatprep.subr.bf16.mxu0 0
    %2875 = vmatpush1.bf16.msra.mxu0 %v2867
    %2876 = vmatprep.subr.bf16.mxu0 0
    %2877 = vmatpush1.bf16.msra.mxu0 %v2866
    %2878 = vmatprep.subr.bf16.mxu0 0
    %2879 = vmatpush1.bf16.msra.mxu0 %v2865
    %2880 = vmatprep.subr.bf16.mxu0 0
    %2881 = vmatpush1.bf16.msra.mxu0 %v2864
    %2882 = vmatprep.subr.bf16.mxu0 0
    %2883 = vmatpush1.bf16.msra.mxu0 %v2863
    %2884 = vmatprep.subr.bf16.mxu0 0
    %2885 = vmatpush1.bf16.msra.mxu0 %v2862
    %2886 = vmatprep.subr.bf16.mxu0 0
    %2887 = vmatpush2.bf16.msra.mxu0 0
    %2888 = vmatprep.subr.bf16.mxu0 0
    %2889 = vmatpush2.bf16.msra.mxu0 0
    %2890 = vmatprep.subr.bf16.mxu0 0
    %2891 = vmatpush2.bf16.msra.mxu0 0
    %2892 = vmatprep.subr.bf16.mxu0 0
    %2893 = vmatpush2.bf16.msra.mxu0 0
    %2894 = vmatprep.subr.bf16.mxu0 0
    %2895 = vmatpush2.bf16.msra.mxu0 0
    %2896 = vmatprep.subr.bf16.mxu0 0
    %2897 = vmatpush2.bf16.msra.mxu0 0
    %2898 = vmatprep.subr.bf16.mxu0 0
    %2899 = vmatpush2.bf16.msra.mxu0 0
    %2900 = vmatprep.subr.bf16.mxu0 0
    %2901 = vmatpush2.bf16.msra.mxu0 0
    %2902 = vmatprep.mubr.bf16.mxu0 0
    %2903 = vmatmul.mubr.bf16.gmra.mxu0 %v1271
    %v2904 = vpop.f32.mrf.mxu0
    %v2905 = vadd.f32 0.0, %v2904
    %v2906 = vpop.f32.mrf.mxu0
    %v2907 = vpop.f32.mrf.mxu0
    %v2908 = vadd.f32 0.0, %v2907
    %v2909 = vpop.f32.mrf.mxu0
    %2910 = vmatprep.mubr.bf16.mxu0 0
    %2911 = vmatmul.mubr.bf16.gmra.mxu0 %v1272
    %v2912 = vpop.f32.mrf.mxu0
    %v2913 = vadd.f32 0.0, %v2912
    %v2914 = vpop.f32.mrf.mxu0
    %v2915 = vpop.f32.mrf.mxu0
    %v2916 = vadd.f32 0.0, %v2915
    %v2917 = vpop.f32.mrf.mxu0
    %2918 = vmatprep.mubr.bf16.mxu0 0
    %2919 = vmatmul.mubr.bf16.gmra.mxu0 %v1273
    %v2920 = vpop.f32.mrf.mxu0
    %v2921 = vadd.f32 0.0, %v2920
    %v2922 = vpop.f32.mrf.mxu0
    %v2923 = vpop.f32.mrf.mxu0
    %v2924 = vadd.f32 0.0, %v2923
    %v2925 = vpop.f32.mrf.mxu0
    %2926 = vmatprep.mubr.bf16.mxu0 0
    %2927 = vmatmul.mubr.bf16.gmra.mxu0 %v1274
    %v2928 = vpop.f32.mrf.mxu0
    %v2929 = vadd.f32 0.0, %v2928
    %v2930 = vpop.f32.mrf.mxu0
    %v2931 = vpop.f32.mrf.mxu0
    %v2932 = vadd.f32 0.0, %v2931
    %v2933 = vpop.f32.mrf.mxu0
    %2934 = vmatprep.mubr.bf16.mxu0 0
    %2935 = vmatmul.mubr.bf16.gmra.mxu0 %v1275
    %v2936 = vpop.f32.mrf.mxu0
    %v2937 = vadd.f32 0.0, %v2936
    %v2938 = vpop.f32.mrf.mxu0
    %v2939 = vpop.f32.mrf.mxu0
    %v2940 = vadd.f32 0.0, %v2939
    %v2941 = vpop.f32.mrf.mxu0
    %2942 = vmatprep.mubr.bf16.mxu0 0
    %2943 = vmatmul.mubr.bf16.gmra.mxu0 %v1276
    %v2944 = vpop.f32.mrf.mxu0
    %v2945 = vadd.f32 0.0, %v2944
    %v2946 = vpop.f32.mrf.mxu0
    %v2947 = vpop.f32.mrf.mxu0
    %v2948 = vadd.f32 0.0, %v2947
    %v2949 = vpop.f32.mrf.mxu0
    %2950 = vmatprep.mubr.bf16.mxu0 0
    %2951 = vmatmul.mubr.bf16.gmra.mxu0 %v1277
    %v2952 = vpop.f32.mrf.mxu0
    %v2953 = vadd.f32 0.0, %v2952
    %v2954 = vpop.f32.mrf.mxu0
    %v2955 = vpop.f32.mrf.mxu0
    %v2956 = vadd.f32 0.0, %v2955
    %v2957 = vpop.f32.mrf.mxu0
    %2958 = vmatprep.mubr.bf16.mxu0 0
    %2959 = vmatmul.mubr.bf16.gmra.mxu0 %v1278
    %v2960 = vpop.f32.mrf.mxu0
    %v2961 = vadd.f32 0.0, %v2960
    %v2962 = vpop.f32.mrf.mxu0
    %v2963 = vpop.f32.mrf.mxu0
    %v2964 = vadd.f32 0.0, %v2963
    %v2965 = vpop.f32.mrf.mxu0
    %2966 = vdwg.mxu0
    %2967 = vmatprep.subr.mxu0 0.0
    %2968 = vmatpush1.msra.mxu0 %v311
    %2969 = vmatprep.subr.mxu0 0.0
    %2970 = vmatpush1.msra.mxu0 %v310
    %2971 = vmatprep.subr.mxu0 0.0
    %2972 = vmatpush1.msra.mxu0 %v309
    %2973 = vmatprep.subr.mxu0 0.0
    %2974 = vmatpush1.msra.mxu0 %v308
    %2975 = vmatprep.subr.mxu0 0.0
    %2976 = vmatpush1.msra.mxu0 %v307
    %2977 = vmatprep.subr.mxu0 0.0
    %2978 = vmatpush1.msra.mxu0 %v306
    %2979 = vmatprep.subr.mxu0 0.0
    %2980 = vmatpush1.msra.mxu0 %v305
    %2981 = vmatprep.subr.mxu0 0.0
    %2982 = vmatpush1.msra.mxu0 %v304
    %2983 = vmatprep.subr.mxu0 0.0
    %2984 = vmatpush1.msra.mxu0 %v303
    %2985 = vmatprep.subr.mxu0 0.0
    %2986 = vmatpush1.msra.mxu0 %v302
    %2987 = vmatprep.subr.mxu0 0.0
    %2988 = vmatpush1.msra.mxu0 %v301
    %2989 = vmatprep.subr.mxu0 0.0
    %2990 = vmatpush1.msra.mxu0 %v300
    %2991 = vmatprep.subr.mxu0 0.0
    %2992 = vmatpush1.msra.mxu0 %v299
    %2993 = vmatprep.subr.mxu0 0.0
    %2994 = vmatpush1.msra.mxu0 %v298
    %2995 = vmatprep.subr.mxu0 0.0
    %2996 = vmatpush1.msra.mxu0 %v297
    %2997 = vmatprep.subr.mxu0 0.0
    %2998 = vmatpush1.msra.mxu0 %v296
    %2999 = vmatprep.subr.mxu0 0.0
    %3000 = vmatpush2.msra.mxu0 0.0
    %3001 = vmatprep.subr.mxu0 0.0
    %3002 = vmatpush2.msra.mxu0 0.0
    %3003 = vmatprep.subr.mxu0 0.0
    %3004 = vmatpush2.msra.mxu0 0.0
    %3005 = vmatprep.subr.mxu0 0.0
    %3006 = vmatpush2.msra.mxu0 0.0
    %3007 = vmatprep.subr.mxu0 0.0
    %3008 = vmatpush2.msra.mxu0 0.0
    %3009 = vmatprep.subr.mxu0 0.0
    %3010 = vmatpush2.msra.mxu0 0.0
    %3011 = vmatprep.subr.mxu0 0.0
    %3012 = vmatpush2.msra.mxu0 0.0
    %3013 = vmatprep.subr.mxu0 0.0
    %3014 = vmatpush2.msra.mxu0 0.0
    %3015 = vmatprep.subr.mxu0 0.0
    %3016 = vmatpush2.msra.mxu0 0.0
    %3017 = vmatprep.subr.mxu0 0.0
    %3018 = vmatpush2.msra.mxu0 0.0
    %3019 = vmatprep.subr.mxu0 0.0
    %3020 = vmatpush2.msra.mxu0 0.0
    %3021 = vmatprep.subr.mxu0 0.0
    %3022 = vmatpush2.msra.mxu0 0.0
    %3023 = vmatprep.subr.mxu0 0.0
    %3024 = vmatpush2.msra.mxu0 0.0
    %3025 = vmatprep.subr.mxu0 0.0
    %3026 = vmatpush2.msra.mxu0 0.0
    %3027 = vmatprep.subr.mxu0 0.0
    %3028 = vmatpush2.msra.mxu0 0.0
    %3029 = vmatprep.subr.mxu0 0.0
    %3030 = vmatpush2.msra.mxu0 0.0
    %3031 = vmatprep.mubr.f32.mxu0 0.0
    %3032 = vmatmul.mubr.f32.gmra.mxu0 %v2905
    %v3033 = vpop.f32.mrf.mxu0
    %v3034 = vadd.f32 %v2416, %v3033
    %v3035 = vpop.f32.mrf.mxu0
    %3036 = vmatprep.mubr.f32.mxu0 0.0
    %3037 = vmatmul.mubr.f32.gmra.mxu0 %v2908
    %v3038 = vpop.f32.mrf.mxu0
    %v3039 = vadd.f32 %v2422, %v3038
    %v3040 = vpop.f32.mrf.mxu0
    %3041 = vmatprep.mubr.f32.mxu0 0.0
    %3042 = vmatmul.mubr.f32.gmra.mxu0 %v2913
    %v3043 = vpop.f32.mrf.mxu0
    %v3044 = vadd.f32 %v2428, %v3043
    %v3045 = vpop.f32.mrf.mxu0
    %3046 = vmatprep.mubr.f32.mxu0 0.0
    %3047 = vmatmul.mubr.f32.gmra.mxu0 %v2916
    %v3048 = vpop.f32.mrf.mxu0
    %v3049 = vadd.f32 %v2434, %v3048
    %v3050 = vpop.f32.mrf.mxu0
    %3051 = vmatprep.mubr.f32.mxu0 0.0
    %3052 = vmatmul.mubr.f32.gmra.mxu0 %v2921
    %v3053 = vpop.f32.mrf.mxu0
    %v3054 = vadd.f32 %v2440, %v3053
    %v3055 = vpop.f32.mrf.mxu0
    %3056 = vmatprep.mubr.f32.mxu0 0.0
    %3057 = vmatmul.mubr.f32.gmra.mxu0 %v2924
    %v3058 = vpop.f32.mrf.mxu0
    %v3059 = vadd.f32 %v2446, %v3058
    %v3060 = vpop.f32.mrf.mxu0
    %3061 = vmatprep.mubr.f32.mxu0 0.0
    %3062 = vmatmul.mubr.f32.gmra.mxu0 %v2929
    %v3063 = vpop.f32.mrf.mxu0
    %v3064 = vadd.f32 %v2452, %v3063
    %v3065 = vpop.f32.mrf.mxu0
    %3066 = vmatprep.mubr.f32.mxu0 0.0
    %3067 = vmatmul.mubr.f32.gmra.mxu0 %v2932
    %v3068 = vpop.f32.mrf.mxu0
    %v3069 = vadd.f32 %v2458, %v3068
    %v3070 = vpop.f32.mrf.mxu0
    %3071 = vmatprep.mubr.f32.mxu0 0.0
    %3072 = vmatmul.mubr.f32.gmra.mxu0 %v2937
    %v3073 = vpop.f32.mrf.mxu0
    %v3074 = vadd.f32 %v2464, %v3073
    %v3075 = vpop.f32.mrf.mxu0
    %3076 = vmatprep.mubr.f32.mxu0 0.0
    %3077 = vmatmul.mubr.f32.gmra.mxu0 %v2940
    %v3078 = vpop.f32.mrf.mxu0
    %v3079 = vadd.f32 %v2470, %v3078
    %v3080 = vpop.f32.mrf.mxu0
    %3081 = vmatprep.mubr.f32.mxu0 0.0
    %3082 = vmatmul.mubr.f32.gmra.mxu0 %v2945
    %v3083 = vpop.f32.mrf.mxu0
    %v3084 = vadd.f32 %v2476, %v3083
    %v3085 = vpop.f32.mrf.mxu0
    %3086 = vmatprep.mubr.f32.mxu0 0.0
    %3087 = vmatmul.mubr.f32.gmra.mxu0 %v2948
    %v3088 = vpop.f32.mrf.mxu0
    %v3089 = vadd.f32 %v2482, %v3088
    %v3090 = vpop.f32.mrf.mxu0
    %3091 = vmatprep.mubr.f32.mxu0 0.0
    %3092 = vmatmul.mubr.f32.gmra.mxu0 %v2953
    %v3093 = vpop.f32.mrf.mxu0
    %v3094 = vadd.f32 %v2488, %v3093
    %v3095 = vpop.f32.mrf.mxu0
    %3096 = vmatprep.mubr.f32.mxu0 0.0
    %3097 = vmatmul.mubr.f32.gmra.mxu0 %v2956
    %v3098 = vpop.f32.mrf.mxu0
    %v3099 = vadd.f32 %v2494, %v3098
    %v3100 = vpop.f32.mrf.mxu0
    %3101 = vmatprep.mubr.f32.mxu0 0.0
    %3102 = vmatmul.mubr.f32.gmra.mxu0 %v2961
    %v3103 = vpop.f32.mrf.mxu0
    %v3104 = vadd.f32 %v2500, %v3103
    %v3105 = vpop.f32.mrf.mxu0
    %3106 = vmatprep.mubr.f32.mxu0 0.0
    %3107 = vmatmul.mubr.f32.gmra.mxu0 %v2964
    %v3108 = vpop.f32.mrf.mxu0
    %v3109 = vadd.f32 %v2506, %v3108
    %v3110 = vpop.f32.mrf.mxu0
    %3111 = vdwg.mxu0
    %vm3112 = vcmp.ge.f32.partialorder %v3034, 0.0
    %vm3113 = vcmp.ge.f32.partialorder %v3039, 0.0
    %vm3114 = vcmp.ge.f32.partialorder %v3044, 0.0
    %vm3115 = vcmp.ge.f32.partialorder %v3049, 0.0
    %vm3116 = vcmp.ge.f32.partialorder %v3054, 0.0
    %vm3117 = vcmp.ge.f32.partialorder %v3059, 0.0
    %vm3118 = vcmp.ge.f32.partialorder %v3064, 0.0
    %vm3119 = vcmp.ge.f32.partialorder %v3069, 0.0
    %vm3120 = vcmp.ge.f32.partialorder %v3074, 0.0
    %vm3121 = vcmp.ge.f32.partialorder %v3079, 0.0
    %vm3122 = vcmp.ge.f32.partialorder %v3084, 0.0
    %vm3123 = vcmp.ge.f32.partialorder %v3089, 0.0
    %vm3124 = vcmp.ge.f32.partialorder %v3094, 0.0
    %vm3125 = vcmp.ge.f32.partialorder %v3099, 0.0
    %vm3126 = vcmp.ge.f32.partialorder %v3104, 0.0
    %vm3127 = vcmp.ge.f32.partialorder %v3109, 0.0
    %v3128 = vmul.f32 %v3034, 0.01
    %v3129 = vmul.f32 %v3039, 0.01
    %v3130 = vmul.f32 %v3044, 0.01
    %v3131 = vmul.f32 %v3049, 0.01
    %v3132 = vmul.f32 %v3054, 0.01
    %v3133 = vmul.f32 %v3059, 0.01
    %v3134 = vmul.f32 %v3064, 0.01
    %v3135 = vmul.f32 %v3069, 0.01
    %v3136 = vmul.f32 %v3074, 0.01
    %v3137 = vmul.f32 %v3079, 0.01
    %v3138 = vmul.f32 %v3084, 0.01
    %v3139 = vmul.f32 %v3089, 0.01
    %v3140 = vmul.f32 %v3094, 0.01
    %v3141 = vmul.f32 %v3099, 0.01
    %v3142 = vmul.f32 %v3104, 0.01
    %v3143 = vmul.f32 %v3109, 0.01
    %v3144 = vsel %vm3112, %v3034, %v3128
    %v3145 = vsel %vm3113, %v3039, %v3129
    %v3146 = vsel %vm3114, %v3044, %v3130
    %v3147 = vsel %vm3115, %v3049, %v3131
    %v3148 = vsel %vm3116, %v3054, %v3132
    %v3149 = vsel %vm3117, %v3059, %v3133
    %v3150 = vsel %vm3118, %v3064, %v3134
    %v3151 = vsel %vm3119, %v3069, %v3135
    %v3152 = vsel %vm3120, %v3074, %v3136
    %v3153 = vsel %vm3121, %v3079, %v3137
    %v3154 = vsel %vm3122, %v3084, %v3138
    %v3155 = vsel %vm3123, %v3089, %v3139
    %v3156 = vsel %vm3124, %v3094, %v3140
    %v3157 = vsel %vm3125, %v3099, %v3141
    %v3158 = vsel %vm3126, %v3104, %v3142
    %v3159 = vsel %vm3127, %v3109, %v3143
    %3160 = vmatprep.subr.mxu0 %v358
    %3161 = vmatpush1.msra.mxu0 %v357
    %3162 = vmatprep.subr.mxu0 %v355
    %3163 = vmatpush1.msra.mxu0 %v354
    %3164 = vmatprep.subr.mxu0 %v352
    %3165 = vmatpush1.msra.mxu0 %v351
    %3166 = vmatprep.subr.mxu0 %v349
    %3167 = vmatpush1.msra.mxu0 %v348
    %3168 = vmatprep.subr.mxu0 %v346
    %3169 = vmatpush1.msra.mxu0 %v345
    %3170 = vmatprep.subr.mxu0 %v343
    %3171 = vmatpush1.msra.mxu0 %v342
    %3172 = vmatprep.subr.mxu0 %v340
    %3173 = vmatpush1.msra.mxu0 %v339
    %3174 = vmatprep.subr.mxu0 %v337
    %3175 = vmatpush1.msra.mxu0 %v336
    %3176 = vmatprep.subr.mxu0 %v334
    %3177 = vmatpush1.msra.mxu0 %v333
    %3178 = vmatprep.subr.mxu0 %v331
    %3179 = vmatpush1.msra.mxu0 %v330
    %3180 = vmatprep.subr.mxu0 %v328
    %3181 = vmatpush1.msra.mxu0 %v327
    %3182 = vmatprep.subr.mxu0 %v325
    %3183 = vmatpush1.msra.mxu0 %v324
    %3184 = vmatprep.subr.mxu0 %v322
    %3185 = vmatpush1.msra.mxu0 %v321
    %3186 = vmatprep.subr.mxu0 %v319
    %3187 = vmatpush1.msra.mxu0 %v318
    %3188 = vmatprep.subr.mxu0 %v316
    %3189 = vmatpush1.msra.mxu0 %v315
    %3190 = vmatprep.subr.mxu0 %v313
    %3191 = vmatpush1.msra.mxu0 %v312
    %3192 = vmatprep.subr.mxu0 0.0
    %3193 = vmatpush2.msra.mxu0 0.0
    %3194 = vmatprep.subr.mxu0 0.0
    %3195 = vmatpush2.msra.mxu0 0.0
    %3196 = vmatprep.subr.mxu0 0.0
    %3197 = vmatpush2.msra.mxu0 0.0
    %3198 = vmatprep.subr.mxu0 0.0
    %3199 = vmatpush2.msra.mxu0 0.0
    %3200 = vmatprep.subr.mxu0 0.0
    %3201 = vmatpush2.msra.mxu0 0.0
    %3202 = vmatprep.subr.mxu0 0.0
    %3203 = vmatpush2.msra.mxu0 0.0
    %3204 = vmatprep.subr.mxu0 0.0
    %3205 = vmatpush2.msra.mxu0 0.0
    %3206 = vmatprep.subr.mxu0 0.0
    %3207 = vmatpush2.msra.mxu0 0.0
    %3208 = vmatprep.subr.mxu0 0.0
    %3209 = vmatpush2.msra.mxu0 0.0
    %3210 = vmatprep.subr.mxu0 0.0
    %3211 = vmatpush2.msra.mxu0 0.0
    %3212 = vmatprep.subr.mxu0 0.0
    %3213 = vmatpush2.msra.mxu0 0.0
    %3214 = vmatprep.subr.mxu0 0.0
    %3215 = vmatpush2.msra.mxu0 0.0
    %3216 = vmatprep.subr.mxu0 0.0
    %3217 = vmatpush2.msra.mxu0 0.0
    %3218 = vmatprep.subr.mxu0 0.0
    %3219 = vmatpush2.msra.mxu0 0.0
    %3220 = vmatprep.subr.mxu0 0.0
    %3221 = vmatpush2.msra.mxu0 0.0
    %3222 = vmatprep.subr.mxu0 0.0
    %3223 = vmatpush2.msra.mxu0 0.0
    %3224 = vmatprep.mubr.f32.mxu0 0.0
    %3225 = vmatmul.mubr.f32.gmra.mxu0 %v3144
    %v3226 = vpop.f32.mrf.mxu0
    %v3227 = vadd.f32 %v392, %v3226
    %v3228 = vpop.f32.mrf.mxu0
    %v3229 = vadd.f32 %v396, %v3228
    %3230 = vmatprep.mubr.f32.mxu0 0.0
    %3231 = vmatmul.mubr.f32.gmra.mxu0 %v3145
    %v3232 = vpop.f32.mrf.mxu0
    %v3233 = vadd.f32 %v392, %v3232
    %v3234 = vpop.f32.mrf.mxu0
    %v3235 = vadd.f32 %v396, %v3234
    %3236 = vmatprep.mubr.f32.mxu0 0.0
    %3237 = vmatmul.mubr.f32.gmra.mxu0 %v3146
    %v3238 = vpop.f32.mrf.mxu0
    %v3239 = vadd.f32 %v392, %v3238
    %v3240 = vpop.f32.mrf.mxu0
    %v3241 = vadd.f32 %v396, %v3240
    %3242 = vmatprep.mubr.f32.mxu0 0.0
    %3243 = vmatmul.mubr.f32.gmra.mxu0 %v3147
    %v3244 = vpop.f32.mrf.mxu0
    %v3245 = vadd.f32 %v392, %v3244
    %v3246 = vpop.f32.mrf.mxu0
    %v3247 = vadd.f32 %v396, %v3246
    %3248 = vmatprep.mubr.f32.mxu0 0.0
    %3249 = vmatmul.mubr.f32.gmra.mxu0 %v3148
    %v3250 = vpop.f32.mrf.mxu0
    %v3251 = vadd.f32 %v392, %v3250
    %v3252 = vpop.f32.mrf.mxu0
    %v3253 = vadd.f32 %v396, %v3252
    %3254 = vmatprep.mubr.f32.mxu0 0.0
    %3255 = vmatmul.mubr.f32.gmra.mxu0 %v3149
    %v3256 = vpop.f32.mrf.mxu0
    %v3257 = vadd.f32 %v392, %v3256
    %v3258 = vpop.f32.mrf.mxu0
    %v3259 = vadd.f32 %v396, %v3258
    %3260 = vmatprep.mubr.f32.mxu0 0.0
    %3261 = vmatmul.mubr.f32.gmra.mxu0 %v3150
    %v3262 = vpop.f32.mrf.mxu0
    %v3263 = vadd.f32 %v392, %v3262
    %v3264 = vpop.f32.mrf.mxu0
    %v3265 = vadd.f32 %v396, %v3264
    %3266 = vmatprep.mubr.f32.mxu0 0.0
    %3267 = vmatmul.mubr.f32.gmra.mxu0 %v3151
    %v3268 = vpop.f32.mrf.mxu0
    %v3269 = vadd.f32 %v392, %v3268
    %v3270 = vpop.f32.mrf.mxu0
    %v3271 = vadd.f32 %v396, %v3270
    %3272 = vmatprep.mubr.f32.mxu0 0.0
    %3273 = vmatmul.mubr.f32.gmra.mxu0 %v3152
    %v3274 = vpop.f32.mrf.mxu0
    %v3275 = vadd.f32 %v392, %v3274
    %v3276 = vpop.f32.mrf.mxu0
    %v3277 = vadd.f32 %v396, %v3276
    %3278 = vmatprep.mubr.f32.mxu0 0.0
    %3279 = vmatmul.mubr.f32.gmra.mxu0 %v3153
    %v3280 = vpop.f32.mrf.mxu0
    %v3281 = vadd.f32 %v392, %v3280
    %v3282 = vpop.f32.mrf.mxu0
    %v3283 = vadd.f32 %v396, %v3282
    %3284 = vmatprep.mubr.f32.mxu0 0.0
    %3285 = vmatmul.mubr.f32.gmra.mxu0 %v3154
    %v3286 = vpop.f32.mrf.mxu0
    %v3287 = vadd.f32 %v392, %v3286
    %v3288 = vpop.f32.mrf.mxu0
    %v3289 = vadd.f32 %v396, %v3288
    %3290 = vmatprep.mubr.f32.mxu0 0.0
    %3291 = vmatmul.mubr.f32.gmra.mxu0 %v3155
    %v3292 = vpop.f32.mrf.mxu0
    %v3293 = vadd.f32 %v392, %v3292
    %v3294 = vpop.f32.mrf.mxu0
    %v3295 = vadd.f32 %v396, %v3294
    %3296 = vmatprep.mubr.f32.mxu0 0.0
    %3297 = vmatmul.mubr.f32.gmra.mxu0 %v3156
    %v3298 = vpop.f32.mrf.mxu0
    %v3299 = vadd.f32 %v392, %v3298
    %v3300 = vpop.f32.mrf.mxu0
    %v3301 = vadd.f32 %v396, %v3300
    %3302 = vmatprep.mubr.f32.mxu0 0.0
    %3303 = vmatmul.mubr.f32.gmra.mxu0 %v3157
    %v3304 = vpop.f32.mrf.mxu0
    %v3305 = vadd.f32 %v392, %v3304
    %v3306 = vpop.f32.mrf.mxu0
    %v3307 = vadd.f32 %v396, %v3306
    %3308 = vmatprep.mubr.f32.mxu0 0.0
    %3309 = vmatmul.mubr.f32.gmra.mxu0 %v3158
    %v3310 = vpop.f32.mrf.mxu0
    %v3311 = vadd.f32 %v392, %v3310
    %v3312 = vpop.f32.mrf.mxu0
    %v3313 = vadd.f32 %v396, %v3312
    %3314 = vmatprep.mubr.f32.mxu0 0.0
    %3315 = vmatmul.mubr.f32.gmra.mxu0 %v3159
    %v3316 = vpop.f32.mrf.mxu0
    %v3317 = vadd.f32 %v392, %v3316
    %v3318 = vpop.f32.mrf.mxu0
    %v3319 = vadd.f32 %v396, %v3318
    %3320 = vdwg.mxu0
    %3321 = vmatprep.subr.mxu0 0.0
    %3322 = vmatpush1.msra.mxu0 %v359
    %3323 = vmatprep.subr.mxu0 0.0
    %3324 = vmatpush1.msra.mxu0 %v356
    %3325 = vmatprep.subr.mxu0 0.0
    %3326 = vmatpush1.msra.mxu0 %v353
    %3327 = vmatprep.subr.mxu0 0.0
    %3328 = vmatpush1.msra.mxu0 %v350
    %3329 = vmatprep.subr.mxu0 0.0
    %3330 = vmatpush1.msra.mxu0 %v347
    %3331 = vmatprep.subr.mxu0 0.0
    %3332 = vmatpush1.msra.mxu0 %v344
    %3333 = vmatprep.subr.mxu0 0.0
    %3334 = vmatpush1.msra.mxu0 %v341
    %3335 = vmatprep.subr.mxu0 0.0
    %3336 = vmatpush1.msra.mxu0 %v338
    %3337 = vmatprep.subr.mxu0 0.0
    %3338 = vmatpush1.msra.mxu0 %v335
    %3339 = vmatprep.subr.mxu0 0.0
    %3340 = vmatpush1.msra.mxu0 %v332
    %3341 = vmatprep.subr.mxu0 0.0
    %3342 = vmatpush1.msra.mxu0 %v329
    %3343 = vmatprep.subr.mxu0 0.0
    %3344 = vmatpush1.msra.mxu0 %v326
    %3345 = vmatprep.subr.mxu0 0.0
    %3346 = vmatpush1.msra.mxu0 %v323
    %3347 = vmatprep.subr.mxu0 0.0
    %3348 = vmatpush1.msra.mxu0 %v320
    %3349 = vmatprep.subr.mxu0 0.0
    %3350 = vmatpush1.msra.mxu0 %v317
    %3351 = vmatprep.subr.mxu0 0.0
    %3352 = vmatpush1.msra.mxu0 %v314
    %3353 = vmatprep.subr.mxu0 0.0
    %3354 = vmatpush2.msra.mxu0 0.0
    %3355 = vmatprep.subr.mxu0 0.0
    %3356 = vmatpush2.msra.mxu0 0.0
    %3357 = vmatprep.subr.mxu0 0.0
    %3358 = vmatpush2.msra.mxu0 0.0
    %3359 = vmatprep.subr.mxu0 0.0
    %3360 = vmatpush2.msra.mxu0 0.0
    %3361 = vmatprep.subr.mxu0 0.0
    %3362 = vmatpush2.msra.mxu0 0.0
    %3363 = vmatprep.subr.mxu0 0.0
    %3364 = vmatpush2.msra.mxu0 0.0
    %3365 = vmatprep.subr.mxu0 0.0
    %3366 = vmatpush2.msra.mxu0 0.0
    %3367 = vmatprep.subr.mxu0 0.0
    %3368 = vmatpush2.msra.mxu0 0.0
    %3369 = vmatprep.subr.mxu0 0.0
    %3370 = vmatpush2.msra.mxu0 0.0
    %3371 = vmatprep.subr.mxu0 0.0
    %3372 = vmatpush2.msra.mxu0 0.0
    %3373 = vmatprep.subr.mxu0 0.0
    %3374 = vmatpush2.msra.mxu0 0.0
    %3375 = vmatprep.subr.mxu0 0.0
    %3376 = vmatpush2.msra.mxu0 0.0
    %3377 = vmatprep.subr.mxu0 0.0
    %3378 = vmatpush2.msra.mxu0 0.0
    %3379 = vmatprep.subr.mxu0 0.0
    %3380 = vmatpush2.msra.mxu0 0.0
    %3381 = vmatprep.subr.mxu0 0.0
    %3382 = vmatpush2.msra.mxu0 0.0
    %3383 = vmatprep.subr.mxu0 0.0
    %3384 = vmatpush2.msra.mxu0 0.0
    %3385 = vmatprep.mubr.f32.mxu0 0.0
    %3386 = vmatmul.mubr.f32.gmra.mxu0 %v3144
    %v3387 = vpop.f32.mrf.mxu0
    %v3388 = vadd.f32 %v400, %v3387
    %v3389 = vpop.f32.mrf.mxu0
    %3390 = vmatprep.mubr.f32.mxu0 0.0
    %3391 = vmatmul.mubr.f32.gmra.mxu0 %v3145
    %v3392 = vpop.f32.mrf.mxu0
    %v3393 = vadd.f32 %v400, %v3392
    %v3394 = vpop.f32.mrf.mxu0
    %3395 = vmatprep.mubr.f32.mxu0 0.0
    %3396 = vmatmul.mubr.f32.gmra.mxu0 %v3146
    %v3397 = vpop.f32.mrf.mxu0
    %v3398 = vadd.f32 %v400, %v3397
    %v3399 = vpop.f32.mrf.mxu0
    %3400 = vmatprep.mubr.f32.mxu0 0.0
    %3401 = vmatmul.mubr.f32.gmra.mxu0 %v3147
    %v3402 = vpop.f32.mrf.mxu0
    %v3403 = vadd.f32 %v400, %v3402
    %v3404 = vpop.f32.mrf.mxu0
    %3405 = vmatprep.mubr.f32.mxu0 0.0
    %3406 = vmatmul.mubr.f32.gmra.mxu0 %v3148
    %v3407 = vpop.f32.mrf.mxu0
    %v3408 = vadd.f32 %v400, %v3407
    %v3409 = vpop.f32.mrf.mxu0
    %3410 = vmatprep.mubr.f32.mxu0 0.0
    %3411 = vmatmul.mubr.f32.gmra.mxu0 %v3149
    %v3412 = vpop.f32.mrf.mxu0
    %v3413 = vadd.f32 %v400, %v3412
    %v3414 = vpop.f32.mrf.mxu0
    %3415 = vmatprep.mubr.f32.mxu0 0.0
    %3416 = vmatmul.mubr.f32.gmra.mxu0 %v3150
    %v3417 = vpop.f32.mrf.mxu0
    %v3418 = vadd.f32 %v400, %v3417
    %v3419 = vpop.f32.mrf.mxu0
    %3420 = vmatprep.mubr.f32.mxu0 0.0
    %3421 = vmatmul.mubr.f32.gmra.mxu0 %v3151
    %v3422 = vpop.f32.mrf.mxu0
    %v3423 = vadd.f32 %v400, %v3422
    %v3424 = vpop.f32.mrf.mxu0
    %3425 = vmatprep.mubr.f32.mxu0 0.0
    %3426 = vmatmul.mubr.f32.gmra.mxu0 %v3152
    %v3427 = vpop.f32.mrf.mxu0
    %v3428 = vadd.f32 %v400, %v3427
    %v3429 = vpop.f32.mrf.mxu0
    %3430 = vmatprep.mubr.f32.mxu0 0.0
    %3431 = vmatmul.mubr.f32.gmra.mxu0 %v3153
    %v3432 = vpop.f32.mrf.mxu0
    %v3433 = vadd.f32 %v400, %v3432
    %v3434 = vpop.f32.mrf.mxu0
    %3435 = vmatprep.mubr.f32.mxu0 0.0
    %3436 = vmatmul.mubr.f32.gmra.mxu0 %v3154
    %v3437 = vpop.f32.mrf.mxu0
    %v3438 = vadd.f32 %v400, %v3437
    %v3439 = vpop.f32.mrf.mxu0
    %3440 = vmatprep.mubr.f32.mxu0 0.0
    %3441 = vmatmul.mubr.f32.gmra.mxu0 %v3155
    %v3442 = vpop.f32.mrf.mxu0
    %v3443 = vadd.f32 %v400, %v3442
    %v3444 = vpop.f32.mrf.mxu0
    %3445 = vmatprep.mubr.f32.mxu0 0.0
    %3446 = vmatmul.mubr.f32.gmra.mxu0 %v3156
    %v3447 = vpop.f32.mrf.mxu0
    %v3448 = vadd.f32 %v400, %v3447
    %v3449 = vpop.f32.mrf.mxu0
    %3450 = vmatprep.mubr.f32.mxu0 0.0
    %3451 = vmatmul.mubr.f32.gmra.mxu0 %v3157
    %v3452 = vpop.f32.mrf.mxu0
    %v3453 = vadd.f32 %v400, %v3452
    %v3454 = vpop.f32.mrf.mxu0
    %3455 = vmatprep.mubr.f32.mxu0 0.0
    %3456 = vmatmul.mubr.f32.gmra.mxu0 %v3158
    %v3457 = vpop.f32.mrf.mxu0
    %v3458 = vadd.f32 %v400, %v3457
    %v3459 = vpop.f32.mrf.mxu0
    %3460 = vmatprep.mubr.f32.mxu0 0.0
    %3461 = vmatmul.mubr.f32.gmra.mxu0 %v3159
    %v3462 = vpop.f32.mrf.mxu0
    %v3463 = vadd.f32 %v400, %v3462
    %v3464 = vpop.f32.mrf.mxu0
    %3465 = vdwg.mxu0
    %v3466 = vadd.f32 %v3227, %v2575
    %v3467 = vadd.f32 %v3233, %v2581
    %v3468 = vadd.f32 %v3239, %v2587
    %v3469 = vadd.f32 %v3245, %v2593
    %v3470 = vadd.f32 %v3251, %v2599
    %v3471 = vadd.f32 %v3257, %v2605
    %v3472 = vadd.f32 %v3263, %v2611
    %v3473 = vadd.f32 %v3269, %v2617
    %v3474 = vadd.f32 %v3275, %v2623
    %v3475 = vadd.f32 %v3281, %v2629
    %v3476 = vadd.f32 %v3287, %v2635
    %v3477 = vadd.f32 %v3293, %v2641
    %v3478 = vadd.f32 %v3299, %v2647
    %v3479 = vadd.f32 %v3305, %v2653
    %v3480 = vadd.f32 %v3311, %v2659
    %v3481 = vadd.f32 %v3317, %v2665
    %v3482 = vxor.u32 %v3466, 2147483648
    %v3483 = vxor.u32 %v3467, 2147483648
    %v3484 = vxor.u32 %v3468, 2147483648
    %v3485 = vxor.u32 %v3469, 2147483648
    %v3486 = vxor.u32 %v3470, 2147483648
    %v3487 = vxor.u32 %v3471, 2147483648
    %v3488 = vxor.u32 %v3472, 2147483648
    %v3489 = vxor.u32 %v3473, 2147483648
    %v3490 = vxor.u32 %v3474, 2147483648
    %v3491 = vxor.u32 %v3475, 2147483648
    %v3492 = vxor.u32 %v3476, 2147483648
    %v3493 = vxor.u32 %v3477, 2147483648
    %v3494 = vxor.u32 %v3478, 2147483648
    %v3495 = vxor.u32 %v3479, 2147483648
    %v3496 = vxor.u32 %v3480, 2147483648
    %v3497 = vxor.u32 %v3481, 2147483648
    %v3498 = vmul.f32 %v3482, 1.442695
    %v3499 = vpow.pop %v3498
    %v3500 = vmul.f32 %v3483, 1.442695
    %v3501 = vpow.pop %v3500
    %v3502 = vmul.f32 %v3484, 1.442695
    %v3503 = vpow.pop %v3502
    %v3504 = vmul.f32 %v3485, 1.442695
    %v3505 = vpow.pop %v3504
    %v3506 = vmul.f32 %v3486, 1.442695
    %v3507 = vpow.pop %v3506
    %v3508 = vmul.f32 %v3487, 1.442695
    %v3509 = vpow.pop %v3508
    %v3510 = vmul.f32 %v3488, 1.442695
    %v3511 = vpow.pop %v3510
    %v3512 = vmul.f32 %v3489, 1.442695
    %v3513 = vpow.pop %v3512
    %v3514 = vmul.f32 %v3490, 1.442695
    %v3515 = vpow.pop %v3514
    %v3516 = vmul.f32 %v3491, 1.442695
    %v3517 = vpow.pop %v3516
    %v3518 = vmul.f32 %v3492, 1.442695
    %v3519 = vpow.pop %v3518
    %v3520 = vmul.f32 %v3493, 1.442695
    %v3521 = vpow.pop %v3520
    %v3522 = vmul.f32 %v3494, 1.442695
    %v3523 = vpow.pop %v3522
    %v3524 = vmul.f32 %v3495, 1.442695
    %v3525 = vpow.pop %v3524
    %v3526 = vmul.f32 %v3496, 1.442695
    %v3527 = vpow.pop %v3526
    %v3528 = vmul.f32 %v3497, 1.442695
    %v3529 = vpow.pop %v3528
    %v3530 = vadd.f32 %v3499, 1.0
    %v3531 = vadd.f32 %v3501, 1.0
    %v3532 = vadd.f32 %v3503, 1.0
    %v3533 = vadd.f32 %v3505, 1.0
    %v3534 = vadd.f32 %v3507, 1.0
    %v3535 = vadd.f32 %v3509, 1.0
    %v3536 = vadd.f32 %v3511, 1.0
    %v3537 = vadd.f32 %v3513, 1.0
    %v3538 = vadd.f32 %v3515, 1.0
    %v3539 = vadd.f32 %v3517, 1.0
    %v3540 = vadd.f32 %v3519, 1.0
    %v3541 = vadd.f32 %v3521, 1.0
    %v3542 = vadd.f32 %v3523, 1.0
    %v3543 = vadd.f32 %v3525, 1.0
    %v3544 = vadd.f32 %v3527, 1.0
    %v3545 = vadd.f32 %v3529, 1.0
    %v3546 = vrcp.pop %v3530
    %v3547 = vmul.f32 1.0, %v3546
    %v3548 = vrcp.pop %v3531
    %v3549 = vmul.f32 1.0, %v3548
    %v3550 = vrcp.pop %v3532
    %v3551 = vmul.f32 1.0, %v3550
    %v3552 = vrcp.pop %v3533
    %v3553 = vmul.f32 1.0, %v3552
    %v3554 = vrcp.pop %v3534
    %v3555 = vmul.f32 1.0, %v3554
    %v3556 = vrcp.pop %v3535
    %v3557 = vmul.f32 1.0, %v3556
    %v3558 = vrcp.pop %v3536
    %v3559 = vmul.f32 1.0, %v3558
    %v3560 = vrcp.pop %v3537
    %v3561 = vmul.f32 1.0, %v3560
    %v3562 = vrcp.pop %v3538
    %v3563 = vmul.f32 1.0, %v3562
    %v3564 = vrcp.pop %v3539
    %v3565 = vmul.f32 1.0, %v3564
    %v3566 = vrcp.pop %v3540
    %v3567 = vmul.f32 1.0, %v3566
    %v3568 = vrcp.pop %v3541
    %v3569 = vmul.f32 1.0, %v3568
    %v3570 = vrcp.pop %v3542
    %v3571 = vmul.f32 1.0, %v3570
    %v3572 = vrcp.pop %v3543
    %v3573 = vmul.f32 1.0, %v3572
    %v3574 = vrcp.pop %v3544
    %v3575 = vmul.f32 1.0, %v3574
    %v3576 = vrcp.pop %v3545
    %v3577 = vmul.f32 1.0, %v3576
    %v3578 = vadd.f32 %v3229, %v2577
    %v3579 = vadd.f32 %v3235, %v2583
    %v3580 = vadd.f32 %v3241, %v2589
    %v3581 = vadd.f32 %v3247, %v2595
    %v3582 = vadd.f32 %v3253, %v2601
    %v3583 = vadd.f32 %v3259, %v2607
    %v3584 = vadd.f32 %v3265, %v2613
    %v3585 = vadd.f32 %v3271, %v2619
    %v3586 = vadd.f32 %v3277, %v2625
    %v3587 = vadd.f32 %v3283, %v2631
    %v3588 = vadd.f32 %v3289, %v2637
    %v3589 = vadd.f32 %v3295, %v2643
    %v3590 = vadd.f32 %v3301, %v2649
    %v3591 = vadd.f32 %v3307, %v2655
    %v3592 = vadd.f32 %v3313, %v2661
    %v3593 = vadd.f32 %v3319, %v2667
    %v3594 = vxor.u32 %v3578, 2147483648
    %v3595 = vxor.u32 %v3579, 2147483648
    %v3596 = vxor.u32 %v3580, 2147483648
    %v3597 = vxor.u32 %v3581, 2147483648
    %v3598 = vxor.u32 %v3582, 2147483648
    %v3599 = vxor.u32 %v3583, 2147483648
    %v3600 = vxor.u32 %v3584, 2147483648
    %v3601 = vxor.u32 %v3585, 2147483648
    %v3602 = vxor.u32 %v3586, 2147483648
    %v3603 = vxor.u32 %v3587, 2147483648
    %v3604 = vxor.u32 %v3588, 2147483648
    %v3605 = vxor.u32 %v3589, 2147483648
    %v3606 = vxor.u32 %v3590, 2147483648
    %v3607 = vxor.u32 %v3591, 2147483648
    %v3608 = vxor.u32 %v3592, 2147483648
    %v3609 = vxor.u32 %v3593, 2147483648
    %v3610 = vmul.f32 %v3594, 1.442695
    %v3611 = vpow.pop %v3610
    %v3612 = vmul.f32 %v3595, 1.442695
    %v3613 = vpow.pop %v3612
    %v3614 = vmul.f32 %v3596, 1.442695
    %v3615 = vpow.pop %v3614
    %v3616 = vmul.f32 %v3597, 1.442695
    %v3617 = vpow.pop %v3616
    %v3618 = vmul.f32 %v3598, 1.442695
    %v3619 = vpow.pop %v3618
    %v3620 = vmul.f32 %v3599, 1.442695
    %v3621 = vpow.pop %v3620
    %v3622 = vmul.f32 %v3600, 1.442695
    %v3623 = vpow.pop %v3622
    %v3624 = vmul.f32 %v3601, 1.442695
    %v3625 = vpow.pop %v3624
    %v3626 = vmul.f32 %v3602, 1.442695
    %v3627 = vpow.pop %v3626
    %v3628 = vmul.f32 %v3603, 1.442695
    %v3629 = vpow.pop %v3628
    %v3630 = vmul.f32 %v3604, 1.442695
    %v3631 = vpow.pop %v3630
    %v3632 = vmul.f32 %v3605, 1.442695
    %v3633 = vpow.pop %v3632
    %v3634 = vmul.f32 %v3606, 1.442695
    %v3635 = vpow.pop %v3634
    %v3636 = vmul.f32 %v3607, 1.442695
    %v3637 = vpow.pop %v3636
    %v3638 = vmul.f32 %v3608, 1.442695
    %v3639 = vpow.pop %v3638
    %v3640 = vmul.f32 %v3609, 1.442695
    %v3641 = vpow.pop %v3640
    %v3642 = vadd.f32 %v3611, 1.0
    %v3643 = vadd.f32 %v3613, 1.0
    %v3644 = vadd.f32 %v3615, 1.0
    %v3645 = vadd.f32 %v3617, 1.0
    %v3646 = vadd.f32 %v3619, 1.0
    %v3647 = vadd.f32 %v3621, 1.0
    %v3648 = vadd.f32 %v3623, 1.0
    %v3649 = vadd.f32 %v3625, 1.0
    %v3650 = vadd.f32 %v3627, 1.0
    %v3651 = vadd.f32 %v3629, 1.0
    %v3652 = vadd.f32 %v3631, 1.0
    %v3653 = vadd.f32 %v3633, 1.0
    %v3654 = vadd.f32 %v3635, 1.0
    %v3655 = vadd.f32 %v3637, 1.0
    %v3656 = vadd.f32 %v3639, 1.0
    %v3657 = vadd.f32 %v3641, 1.0
    %v3658 = vrcp.pop %v3642
    %v3659 = vmul.f32 1.0, %v3658
    %v3660 = vrcp.pop %v3643
    %v3661 = vmul.f32 1.0, %v3660
    %v3662 = vrcp.pop %v3644
    %v3663 = vmul.f32 1.0, %v3662
    %v3664 = vrcp.pop %v3645
    %v3665 = vmul.f32 1.0, %v3664
    %v3666 = vrcp.pop %v3646
    %v3667 = vmul.f32 1.0, %v3666
    %v3668 = vrcp.pop %v3647
    %v3669 = vmul.f32 1.0, %v3668
    %v3670 = vrcp.pop %v3648
    %v3671 = vmul.f32 1.0, %v3670
    %v3672 = vrcp.pop %v3649
    %v3673 = vmul.f32 1.0, %v3672
    %v3674 = vrcp.pop %v3650
    %v3675 = vmul.f32 1.0, %v3674
    %v3676 = vrcp.pop %v3651
    %v3677 = vmul.f32 1.0, %v3676
    %v3678 = vrcp.pop %v3652
    %v3679 = vmul.f32 1.0, %v3678
    %v3680 = vrcp.pop %v3653
    %v3681 = vmul.f32 1.0, %v3680
    %v3682 = vrcp.pop %v3654
    %v3683 = vmul.f32 1.0, %v3682
    %v3684 = vrcp.pop %v3655
    %v3685 = vmul.f32 1.0, %v3684
    %v3686 = vrcp.pop %v3656
    %v3687 = vmul.f32 1.0, %v3686
    %v3688 = vrcp.pop %v3657
    %v3689 = vmul.f32 1.0, %v3688
    %v3690 = vmul.f32 %v3547, %v2736
    %v3691 = vmul.f32 %v3549, %v2741
    %v3692 = vmul.f32 %v3551, %v2746
    %v3693 = vmul.f32 %v3553, %v2751
    %v3694 = vmul.f32 %v3555, %v2756
    %v3695 = vmul.f32 %v3557, %v2761
    %v3696 = vmul.f32 %v3559, %v2766
    %v3697 = vmul.f32 %v3561, %v2771
    %v3698 = vmul.f32 %v3563, %v2776
    %v3699 = vmul.f32 %v3565, %v2781
    %v3700 = vmul.f32 %v3567, %v2786
    %v3701 = vmul.f32 %v3569, %v2791
    %v3702 = vmul.f32 %v3571, %v2796
    %v3703 = vmul.f32 %v3573, %v2801
    %v3704 = vmul.f32 %v3575, %v2806
    %v3705 = vmul.f32 %v3577, %v2811
    %v3706 = vadd.f32 %v3388, %v3690
    %v3707 = vadd.f32 %v3393, %v3691
    %v3708 = vadd.f32 %v3398, %v3692
    %v3709 = vadd.f32 %v3403, %v3693
    %v3710 = vadd.f32 %v3408, %v3694
    %v3711 = vadd.f32 %v3413, %v3695
    %v3712 = vadd.f32 %v3418, %v3696
    %v3713 = vadd.f32 %v3423, %v3697
    %v3714 = vadd.f32 %v3428, %v3698
    %v3715 = vadd.f32 %v3433, %v3699
    %v3716 = vadd.f32 %v3438, %v3700
    %v3717 = vadd.f32 %v3443, %v3701
    %v3718 = vadd.f32 %v3448, %v3702
    %v3719 = vadd.f32 %v3453, %v3703
    %v3720 = vadd.f32 %v3458, %v3704
    %v3721 = vadd.f32 %v3463, %v3705
    %v3722 = vtanh.pop %v3706
    %v3723 = vtanh.pop %v3707
    %v3724 = vtanh.pop %v3708
    %v3725 = vtanh.pop %v3709
    %v3726 = vtanh.pop %v3710
    %v3727 = vtanh.pop %v3711
    %v3728 = vtanh.pop %v3712
    %v3729 = vtanh.pop %v3713
    %v3730 = vtanh.pop %v3714
    %v3731 = vtanh.pop %v3715
    %v3732 = vtanh.pop %v3716
    %v3733 = vtanh.pop %v3717
    %v3734 = vtanh.pop %v3718
    %v3735 = vtanh.pop %v3719
    %v3736 = vtanh.pop %v3720
    %v3737 = vtanh.pop %v3721
    %v3738 = vsub.f32 1.0, %v3659
    %v3739 = vsub.f32 1.0, %v3661
    %v3740 = vsub.f32 1.0, %v3663
    %v3741 = vsub.f32 1.0, %v3665
    %v3742 = vsub.f32 1.0, %v3667
    %v3743 = vsub.f32 1.0, %v3669
    %v3744 = vsub.f32 1.0, %v3671
    %v3745 = vsub.f32 1.0, %v3673
    %v3746 = vsub.f32 1.0, %v3675
    %v3747 = vsub.f32 1.0, %v3677
    %v3748 = vsub.f32 1.0, %v3679
    %v3749 = vsub.f32 1.0, %v3681
    %v3750 = vsub.f32 1.0, %v3683
    %v3751 = vsub.f32 1.0, %v3685
    %v3752 = vsub.f32 1.0, %v3687
    %v3753 = vsub.f32 1.0, %v3689
    %v3754 = vmul.f32 %v3738, %v3722
    %v3755 = vmul.f32 %v3739, %v3723
    %v3756 = vmul.f32 %v3740, %v3724
    %v3757 = vmul.f32 %v3741, %v3725
    %v3758 = vmul.f32 %v3742, %v3726
    %v3759 = vmul.f32 %v3743, %v3727
    %v3760 = vmul.f32 %v3744, %v3728
    %v3761 = vmul.f32 %v3745, %v3729
    %v3762 = vmul.f32 %v3746, %v3730
    %v3763 = vmul.f32 %v3747, %v3731
    %v3764 = vmul.f32 %v3748, %v3732
    %v3765 = vmul.f32 %v3749, %v3733
    %v3766 = vmul.f32 %v3750, %v3734
    %v3767 = vmul.f32 %v3751, %v3735
    %v3768 = vmul.f32 %v3752, %v3736
    %v3769 = vmul.f32 %v3753, %v3737
    %v3770 = vmul.f32 %v3659, %v2331
    %v3771 = vmul.f32 %v3661, %v2332
    %v3772 = vmul.f32 %v3663, %v2333
    %v3773 = vmul.f32 %v3665, %v2334
    %v3774 = vmul.f32 %v3667, %v2335
    %v3775 = vmul.f32 %v3669, %v2336
    %v3776 = vmul.f32 %v3671, %v2337
    %v3777 = vmul.f32 %v3673, %v2338
    %v3778 = vmul.f32 %v3675, %v2339
    %v3779 = vmul.f32 %v3677, %v2340
    %v3780 = vmul.f32 %v3679, %v2341
    %v3781 = vmul.f32 %v3681, %v2342
    %v3782 = vmul.f32 %v3683, %v2343
    %v3783 = vmul.f32 %v3685, %v2344
    %v3784 = vmul.f32 %v3687, %v2345
    %v3785 = vmul.f32 %v3689, %v2346
    %v3786 = vadd.f32 %v3754, %v3770
    %v3787 = vadd.f32 %v3755, %v3771
    %v3788 = vadd.f32 %v3756, %v3772
    %v3789 = vadd.f32 %v3757, %v3773
    %v3790 = vadd.f32 %v3758, %v3774
    %v3791 = vadd.f32 %v3759, %v3775
    %v3792 = vadd.f32 %v3760, %v3776
    %v3793 = vadd.f32 %v3761, %v3777
    %v3794 = vadd.f32 %v3762, %v3778
    %v3795 = vadd.f32 %v3763, %v3779
    %v3796 = vadd.f32 %v3764, %v3780
    %v3797 = vadd.f32 %v3765, %v3781
    %v3798 = vadd.f32 %v3766, %v3782
    %v3799 = vadd.f32 %v3767, %v3783
    %v3800 = vadd.f32 %v3768, %v3784
    %v3801 = vadd.f32 %v3769, %v3785
    %v3802 = vmul.f32 %v3786, %v184
    %v3803 = vmul.f32 %v3787, %v185
    %v3804 = vmul.f32 %v3788, %v186
    %v3805 = vmul.f32 %v3789, %v187
    %v3806 = vmul.f32 %v3790, %v188
    %v3807 = vmul.f32 %v3791, %v189
    %v3808 = vmul.f32 %v3792, %v190
    %v3809 = vmul.f32 %v3793, %v191
    %v3810 = vmul.f32 %v3794, %v192
    %v3811 = vmul.f32 %v3795, %v193
    %v3812 = vmul.f32 %v3796, %v194
    %v3813 = vmul.f32 %v3797, %v195
    %v3814 = vmul.f32 %v3798, %v196
    %v3815 = vmul.f32 %v3799, %v197
    %v3816 = vmul.f32 %v3800, %v198
    %v3817 = vmul.f32 %v3801, %v199
    %v3818 = vadd.f32 %v3802, %v3803
    %v3819 = vadd.f32 %v3818, %v3804
    %v3820 = vadd.f32 %v3819, %v3805
    %v3821 = vadd.f32 %v3820, %v3806
    %v3822 = vadd.f32 %v3821, %v3807
    %v3823 = vadd.f32 %v3822, %v3808
    %v3824 = vadd.f32 %v3823, %v3809
    %v3825 = vadd.f32 %v3824, %v3810
    %v3826 = vadd.f32 %v3825, %v3811
    %v3827 = vadd.f32 %v3826, %v3812
    %v3828 = vadd.f32 %v3827, %v3813
    %v3829 = vadd.f32 %v3828, %v3814
    %v3830 = vadd.f32 %v3829, %v3815
    %v3831 = vadd.f32 %v3830, %v3816
    %v3832 = vadd.f32 %v3831, %v3817
    %3833 = vadd.xlane.f32.xlu0 %v3832
    %v3834 = vpop.xlane.xlu0 %3833
    %v3835 = vrot.slane %v3834, 4
    %v3836 = vadd.f32 %v3834, %v3835
    %v3837 = vrot.slane %v3836, 2
    %v3838 = vadd.f32 %v3836, %v3837
    %v3839 = vrot.slane %v3838, 1
    %v3840 = vadd.f32 %v3838, %v3839
    %s3841 = vtos %v3840
    %v3842 = vstv %s3841
    %v3843 = vmul.f32 %v3802, %v3802
    %v3844 = vmul.f32 %v3803, %v3803
    %v3845 = vmul.f32 %v3804, %v3804
    %v3846 = vmul.f32 %v3805, %v3805
    %v3847 = vmul.f32 %v3806, %v3806
    %v3848 = vmul.f32 %v3807, %v3807
    %v3849 = vmul.f32 %v3808, %v3808
    %v3850 = vmul.f32 %v3809, %v3809
    %v3851 = vmul.f32 %v3810, %v3810
    %v3852 = vmul.f32 %v3811, %v3811
    %v3853 = vmul.f32 %v3812, %v3812
    %v3854 = vmul.f32 %v3813, %v3813
    %v3855 = vmul.f32 %v3814, %v3814
    %v3856 = vmul.f32 %v3815, %v3815
    %v3857 = vmul.f32 %v3816, %v3816
    %v3858 = vmul.f32 %v3817, %v3817
    %v3859 = vadd.f32 %v3843, %v3844
    %v3860 = vadd.f32 %v3859, %v3845
    %v3861 = vadd.f32 %v3860, %v3846
    %v3862 = vadd.f32 %v3861, %v3847
    %v3863 = vadd.f32 %v3862, %v3848
    %v3864 = vadd.f32 %v3863, %v3849
    %v3865 = vadd.f32 %v3864, %v3850
    %v3866 = vadd.f32 %v3865, %v3851
    %v3867 = vadd.f32 %v3866, %v3852
    %v3868 = vadd.f32 %v3867, %v3853
    %v3869 = vadd.f32 %v3868, %v3854
    %v3870 = vadd.f32 %v3869, %v3855
    %v3871 = vadd.f32 %v3870, %v3856
    %v3872 = vadd.f32 %v3871, %v3857
    %v3873 = vadd.f32 %v3872, %v3858
    %3874 = vadd.xlane.f32.xlu0 %v3873
    %v3875 = vpop.xlane.xlu0 %3874
    %v3876 = vrot.slane %v3875, 4
    %v3877 = vadd.f32 %v3875, %v3876
    %v3878 = vrot.slane %v3877, 2
    %v3879 = vadd.f32 %v3877, %v3878
    %v3880 = vrot.slane %v3879, 1
    %v3881 = vadd.f32 %v3879, %v3880
    %s3882 = vtos %v3881
    %v3883 = vstv %s3882
    %v3884 = vmul.f32 %v3842, 0.001953125
    %v3885 = vmul.f32 %v3883, 0.001953125
    %v3886 = vmul.f32 %v3884, %v3884
    %v3887 = vsub.f32 %v3885, %v3886
    %v3888 = vmax.f32 %v3887, 0.0
    %v3889 = vrsqrt.pop %v3888
    %v3890 = vmul.f32 %v3888, %v3889
    %vm3891 = vcmp.eq.f32.partialorder %v3888, inf
    %v3892 = vsel %vm3891, %v3888, %v3890
    %vm3893 = vcmp.eq.f32.partialorder %v3888, 0.0
    %v3894 = vand.u32 %v3888, 2147483648
    %v3895 = vsel %vm3893, %v3894, %v3892
    %v3896 = vadd.f32 %v3895, 1e-05
    %v3897 = vrcp.pop %v3896
    %v3898 = vsub.f32 %v3786, %v3884
    %v3899 = vsub.f32 %v3787, %v3884
    %v3900 = vsub.f32 %v3788, %v3884
    %v3901 = vsub.f32 %v3789, %v3884
    %v3902 = vsub.f32 %v3790, %v3884
    %v3903 = vsub.f32 %v3791, %v3884
    %v3904 = vsub.f32 %v3792, %v3884
    %v3905 = vsub.f32 %v3793, %v3884
    %v3906 = vsub.f32 %v3794, %v3884
    %v3907 = vsub.f32 %v3795, %v3884
    %v3908 = vsub.f32 %v3796, %v3884
    %v3909 = vsub.f32 %v3797, %v3884
    %v3910 = vsub.f32 %v3798, %v3884
    %v3911 = vsub.f32 %v3799, %v3884
    %v3912 = vsub.f32 %v3800, %v3884
    %v3913 = vsub.f32 %v3801, %v3884
    %v3914 = vmul.f32 %v3898, %v3897
    %v3915 = vmul.f32 %v3899, %v3897
    %v3916 = vmul.f32 %v3900, %v3897
    %v3917 = vmul.f32 %v3901, %v3897
    %v3918 = vmul.f32 %v3902, %v3897
    %v3919 = vmul.f32 %v3903, %v3897
    %v3920 = vmul.f32 %v3904, %v3897
    %v3921 = vmul.f32 %v3905, %v3897
    %v3922 = vmul.f32 %v3906, %v3897
    %v3923 = vmul.f32 %v3907, %v3897
    %v3924 = vmul.f32 %v3908, %v3897
    %v3925 = vmul.f32 %v3909, %v3897
    %v3926 = vmul.f32 %v3910, %v3897
    %v3927 = vmul.f32 %v3911, %v3897
    %v3928 = vmul.f32 %v3912, %v3897
    %v3929 = vmul.f32 %v3913, %v3897
    %3930 = vst [vmem:[#allocation13] sm:$0xff] %v3914
    %3931 = vst [vmem:[#allocation13 + $0x8] sm:$0xff] %v3915
    %3932 = vst [vmem:[#allocation13 + $0x10] sm:$0xff] %v3916
    %3933 = vst [vmem:[#allocation13 + $0x18] sm:$0xff] %v3917
    %3934 = vst [vmem:[#allocation13 + $0x20] sm:$0xff] %v3918
    %3935 = vst [vmem:[#allocation13 + $0x28] sm:$0xff] %v3919
    %3936 = vst [vmem:[#allocation13 + $0x30] sm:$0xff] %v3920
    %3937 = vst [vmem:[#allocation13 + $0x38] sm:$0xff] %v3921
    %3938 = vst [vmem:[#allocation13 + $0x40] sm:$0xff] %v3922
    %3939 = vst [vmem:[#allocation13 + $0x48] sm:$0xff] %v3923
    %3940 = vst [vmem:[#allocation13 + $0x50] sm:$0xff] %v3924
    %3941 = vst [vmem:[#allocation13 + $0x58] sm:$0xff] %v3925
    %3942 = vst [vmem:[#allocation13 + $0x60] sm:$0xff] %v3926
    %3943 = vst [vmem:[#allocation13 + $0x68] sm:$0xff] %v3927
    %3944 = vst [vmem:[#allocation13 + $0x70] sm:$0xff] %v3928
    %3945 = vst [vmem:[#allocation13 + $0x78] sm:$0xff] %v3929
    // Predicated region
    $region62: #{tpu_custom_call.1} parent=1 // pred_check
      _
    $region63: #{tpu_custom_call.1} parent=1 // pred_check_branch
      %3947 = sbr.rel (0) target = $region65
    $region64: #{tpu_custom_call.1} parent=1 // pred_region
      %s3949 = ssub.s32 2048, 2048
      %3950 = vsyncadd [#allocation4], %s3949
      %s3951 = sshll.u32 [#allocation13], 4
      %s3952 = int_to_ptr.vmem [resolvable:$true] %s3951
      %3957 = dma.vmem_to_hbm [thread:$0]  %s3952, 2048, %s9, [#allocation4], 128, 128, 8
    $region65: #{tpu_custom_call.1} parent=1 // pred_fallthru
      _
    // Predicated region
    $region66: #{tpu_custom_call.1} parent=1 // pred_check
      _
    $region67: #{tpu_custom_call.1} parent=1 // pred_check_branch
      %3959 = sbr.rel (0) target = $region69
    $region68: #{tpu_custom_call.1} parent=1 // pred_region
      %3960 = dma.done [#allocation4], 2048
    $region69: #{tpu_custom_call.1} parent=1 // pred_fallthru
      _
    %3961 = vsyncpa [#allocation3], 1
    %3962 = vsyncpa [#allocation6], 1
    %3963 = vsyncpa [#allocation9], 1
    %3964 = vsyncpa [#allocation12], 1
    %3965 = vsyncpa [#allocation4], 1

</llo_original>
